<compile_context>
chip_gen: v7x
topology: tpu7x:2x2x1
jax: 0.10.0
libtpu: 0.0.40
codegen_flags: <defaults>
</compile_context>

<pallas_src>
import functools

import numpy as np

import jax
import jax.numpy as jnp
from jax import lax
from jax.experimental import pallas as pl
from jax.experimental.pallas import tpu as pltpu


_MXU_DTYPE = jnp.bfloat16   # MXU operand dtype (accumulation stays f32)
_F32 = jnp.float32
_LANE = 128                 # lane width of the parameter slabs
_WROW_ALIGN = 16            # bf16 sublane packing
_FROW_ALIGN = 8             # f32 sublane tile


# ----------------------------------------------------------------------------
# pltpu.roll shift convention (one-time, trace-time; never falls back to a slow path)
# ----------------------------------------------------------------------------
@functools.cache
def _roll_mode() -> str:
    """Resolve pltpu.roll's shift convention once.

    'np'      : pltpu.roll(x, s)[i] == x[(i - s) % M]   (np.roll / jnp.roll convention)
    'flipped' : pltpu.roll(x, s)[i] == x[(i + s) % M]

    If the probe cannot run for environmental reasons we warn loudly and assume the
    documented np.roll convention; the XLU roll path is always used for the real kernel.
    """
    try:
        def probe(x_ref, o_ref):
            o_ref[...] = pltpu.roll(x_ref[...], 1, 1)

        x = jnp.tile(jnp.arange(128, dtype=jnp.float32)[None, :], (8, 1))
        y = pl.pallas_call(probe, out_shape=jax.ShapeDtypeStruct((8, 128), jnp.float32))(x)
        if bool(jnp.array_equal(y, jnp.roll(x, 1, axis=1))):
            return "np"
        if bool(jnp.array_equal(y, jnp.roll(x, -1, axis=1))):
            return "flipped"
        raise RuntimeError("pltpu.roll returned an unexpected lane permutation")
    except RuntimeError:
        raise
    except Exception as e:   # no TPU at build time, interpret mode, ...
        print(f"WARNING: pltpu.roll convention probe failed ({e!r}); "
              "assuming np.roll convention")
        return "np"


def _lane_tap(x, s, mode):
    """Return tap with tap[c, m] = x[c, (m + s) mod M] via an XLU lane rotate."""
    m_total = x.shape[-1]
    s = s % m_total
    if s == 0:
        return x
    amt = s if mode == "flipped" else (m_total - s)
    return pltpu.roll(x, amt, 1)


# ----------------------------------------------------------------------------
# Host-side precompute: depthwise validity masks and GAP pooling matrix
# ----------------------------------------------------------------------------
def _dw_mask(k, H, W, M):
    """(k*k, M) f32 validity mask; tap t=(ky,kx) valid where the shifted position stays
    inside the same (H, W) image.  Wrap-around from the lane rotate only lands on masked
    positions, so zero padding never needs to be materialized."""
    p = k // 2
    m = np.arange(M)
    h = (m // W) % H
    w = m % W
    rows = []
    for ky in range(k):
        for kx in range(k):
            dy, dx = ky - p, kx - p
            rows.append(((h + dy >= 0) & (h + dy < H) &
                         (w + dx >= 0) & (w + dx < W)).astype(np.float32))
    return np.stack(rows, 0)


def _gap_pool(M, N, HW):
    """(M, N) mean-pooling matrix with the 1/HW scale folded in."""
    m = np.arange(M)
    return (m[:, None] // HW == np.arange(N)[None, :]).astype(np.float32) / HW


# ----------------------------------------------------------------------------
# Parameter-slab packing
# ----------------------------------------------------------------------------
class _SlabBuilder:
    """Packs many small (rows, cols) params into one lane-dense (R, lane) slab.

    Each piece starts at a row offset aligned to `align` sublanes so in-kernel static ref
    slices hit clean (sublane, lane) tiles; lanes beyond a piece's width are zero-padded.
    Returns a static (row_offset, rows, cols) spec per piece.
    """

    def __init__(self, lane, dtype, align):
        self.lane, self.dtype, self.align = lane, dtype, align
        self.pieces, self.rows = [], 0

    def add(self, a):
        a = jnp.asarray(a, self.dtype)
        if a.ndim == 1:
            a = a[:, None]
        r, c = a.shape
        assert c <= self.lane, (a.shape, self.lane)
        rp = -(-r // self.align) * self.align
        off = self.rows
        self.pieces.append(jnp.pad(a, ((0, rp - r), (0, self.lane - c))))
        self.rows += rp
        return (off, r, c)

    def build(self):
        if not self.pieces:
            return jnp.zeros((self.align, self.lane), self.dtype)
        return jnp.concatenate(self.pieces, axis=0)


# ----------------------------------------------------------------------------
# In-kernel building blocks (activations are (C, M) values, M = N*H*W on the lane axis)
# ----------------------------------------------------------------------------
def _pw(x, w, b=None, relu=False, res=None):
    """1x1 conv as W(Cout,Cin) @ X(Cin,M) on the MXU (bf16 operands, f32 accumulation),
    with fused bias / residual / ReLU epilogue in f32."""
    y = jnp.dot(w, x.astype(w.dtype), preferred_element_type=jnp.float32)
    if b is not None:
        y = y + b
    if res is not None:
        y = y + res
    if relu:
        y = jnp.maximum(y, 0.0)
    return y


def _dw_conv(x, wd, bias, mask, k, W, relu, roll_mode):
    """Depthwise k x k conv (stride 1, pad k//2) with folded-BN bias (+ optional ReLU).

    x: (C, M) f32, wd: (C, k*k) f32 (BN scale folded), bias: (C, 1) f32,
    mask: (k*k, M) f32 precomputed validity mask.  Each tap is a lane roll (XLU) plus
    two VALU multiplies and one add - no iota / compare / select in the inner loop.
    """
    C, M = x.shape
    p = k // 2
    acc = jnp.zeros((C, M), _F32)
    for ky in range(k):
        for kx in range(k):
            t = ky * k + kx
            s = (ky - p) * W + (kx - p)
            tap = _lane_tap(x, s, roll_mode)
            acc = acc + tap * (mask[t:t + 1, :] * wd[:, t:t + 1])
    y = acc + bias
    return jnp.maximum(y, 0.0) if relu else y


def _make_network_kernel(plan, tail, W, roll_mode):
    """One fused kernel: stem conv -> blocks -> global-average-pool -> classifier."""

    def kernel(patches_ref, wref, fref, out_ref):
        def wmat(spec):                          # bf16 matmul weight
            r, rows, cols = spec
            return wref[r:r + rows, 0:cols]

        def fmat(spec):                          # f32 matrix (dw weights / masks / pool)
            r, rows, cols = spec
            return fref[r:r + rows, 0:cols]

        def fcol(spec):                          # f32 (C, 1) bias column
            r, rows, _ = spec
            return fref[r:r + rows, 0:1]

        # ---- stem ConvBNReLU: single lane-dense matmul over boundary-built patches ----
        stem = plan[0]
        x = _pw(patches_ref[...], wmat(stem['w']), fcol(stem['b']), relu=True)   # (C0, M)

        for blk in plan[1:]:
            t = blk['type']
            mask = fmat(blk['mask'])
            if t == 'DWConv':
                x = _dw_conv(x, fmat(blk['wd']), fcol(blk['bd']), mask, blk['k'], W,
                             True, roll_mode)
                x = _pw(x, wmat(blk['wp']), fcol(blk['bp']), relu=True)
            elif t == 'InvertedResidual':
                identity = x if blk['use_res'] else None
                h = _pw(x, wmat(blk['w1']), fcol(blk['b1']), relu=True)
                h = _dw_conv(h, fmat(blk['wd']), fcol(blk['bd']), mask, blk['k'], W,
                             True, roll_mode)
                # project + BN (+ identity) then ReLU -- the PyTorch forward applies
                # self.relu AFTER the residual add, so we keep that order.
                x = _pw(h, wmat(blk['w2']), fcol(blk['b2']), relu=True, res=identity)
            elif t == 'ConvNeXt':
                shortcut = (_pw(x, wmat(blk['ws']), fcol(blk['bs']))
                            if blk['has_shortcut'] else x)
                h = _dw_conv(x, fmat(blk['wd']), fcol(blk['bd']), mask, 7, W,
                             False, roll_mode)                     # dw7x7 + BN(eps=1e-6)
                h = _pw(h, wmat(blk['w1']), relu=True)             # 1x1 expand + ReLU
                x = _pw(h, wmat(blk['w2']), fcol(blk['b2']), res=shortcut)
            else:
                raise NotImplementedError(t)
            # per-layer AdaptiveAvgPool2d((h, w)) at the current size is the identity.

        # ---- fused GAP (precomputed pool matrix) + classifier (Dropout = identity) ----
        feat = jnp.dot(x, fmat(tail['pool']), preferred_element_type=jnp.float32)  # (C, N)
        out_ref[...] = _pw(feat, wmat(tail['wl']), fcol(tail['bl']))               # (Q, N)

    return kernel


# ----------------------------------------------------------------------------
# Parameter construction (BN folded into weights + per-channel bias)
# ----------------------------------------------------------------------------
class KeyGen:
    def __init__(self, key):
        self.key = key

    def __call__(self):
        self.key, sub = jax.random.split(self.key)
        return sub


def _rnd(kg, shape, std=0.1):
    return std * jax.random.normal(kg(), shape, jnp.float32)


def _init_bn(kg, c):
    return dict(gamma=1.0 + 0.1 * jax.random.normal(kg(), (c,), jnp.float32),
                beta=0.1 * jax.random.normal(kg(), (c,), jnp.float32),
                mean=0.1 * jax.random.normal(kg(), (c,), jnp.float32),
                var=1.0 + 0.1 * jnp.abs(jax.random.normal(kg(), (c,), jnp.float32)))


def _fold_bn(bn, eps):
    scale = bn['gamma'] / jnp.sqrt(bn['var'] + eps)
    shift = bn['beta'] - bn['mean'] * scale
    return scale, shift


def build_network(key, network_encoding, input_channels_first=3, num_classes=2):
    """Random eval-mode parameters (BN pre-folded, weights pre-transposed) + static meta."""
    kg = KeyGen(key)
    in_ch = input_channels_first
    max_number_downsample = 4
    num_strides = 0

    blocks = []      # folded, kernel-layout parameters per block (packed into slabs later)
    ref_blocks = []  # raw-layout parameters for the pure-JAX reference check

    for bi, (block_type, out_ch, k, stride, ef) in enumerate(network_encoding):
        if stride == 2:
            num_strides += 1
            if num_strides >= max_number_downsample:
                stride = 1

        if block_type == 'ConvBNReLU':
            # TODO(synk): ConvBNReLU is only fused as the stem block; a mid-network
            #             KxK / strided conv would need in-kernel strided patch taps.
            assert bi == 0, "ConvBNReLU supported as the first (stem) block only"
            w = _rnd(kg, (k, k, in_ch, out_ch))
            bn = _init_bn(kg, out_ch)
            scale, shift = _fold_bn(bn, 1e-5)
            kdim = k * k * in_ch
            kpad = -(-kdim // _FROW_ALIGN) * _FROW_ALIGN          # 27 -> 32
            w_t = (w.reshape(kdim, out_ch) * scale[None, :]).T    # (Cout, kdim)
            w_t = jnp.pad(w_t, ((0, 0), (0, kpad - kdim)))
            blocks.append(dict(type='ConvBNReLU', k=k, stride=stride, kdim_pad=kpad,
                               w=w_t, b=shift))
            ref_blocks.append(dict(type='ConvBNReLU', w=w, bn=bn, k=k, stride=stride))

        elif block_type == 'DWConv':
            # TODO(synk): strided depthwise-separable block not implemented (stride==1 here).
            assert stride == 1
            wd = _rnd(kg, (k, k, in_ch));   bnd = _init_bn(kg, in_ch)
            wp = _rnd(kg, (in_ch, out_ch)); bnp = _init_bn(kg, out_ch)
            sd, shd = _fold_bn(bnd, 1e-5)
            sp, shp = _fold_bn(bnp, 1e-5)
            blocks.append(dict(type='DWConv', k=k,
                               wd=(wd.reshape(k * k, in_ch) * sd[None, :]).T, bd=shd,
                               wp=(wp * sp[None, :]).T, bp=shp))
            ref_blocks.append(dict(type='DWConv', k=k, wd=wd, bnd=bnd, wp=wp, bnp=bnp))

        elif block_type == 'InvertedResidual':
            # TODO(synk): stride!=1 (strided depthwise + 1x1 downsample) not implemented.
            assert stride == 1
            hid = int(in_ch * ef)
            w1 = _rnd(kg, (in_ch, hid));   bn1 = _init_bn(kg, hid)
            wd = _rnd(kg, (k, k, hid));    bnd = _init_bn(kg, hid)
            w2 = _rnd(kg, (hid, out_ch));  bn2 = _init_bn(kg, out_ch)
            s1, sh1 = _fold_bn(bn1, 1e-5)
            sd, shd = _fold_bn(bnd, 1e-5)
            s2, sh2 = _fold_bn(bn2, 1e-5)
            blocks.append(dict(type='InvertedResidual', k=k, use_res=(in_ch == out_ch),
                               w1=(w1 * s1[None, :]).T, b1=sh1,
                               wd=(wd.reshape(k * k, hid) * sd[None, :]).T, bd=shd,
                               w2=(w2 * s2[None, :]).T, b2=sh2))
            ref_blocks.append(dict(type='InvertedResidual', k=k,
                                   use_res=(in_ch == out_ch),
                                   w1=w1, bn1=bn1, wd=wd, bnd=bnd, w2=w2, bn2=bn2))

        elif block_type == 'ConvNeXt':
            hid = ef * in_ch
            wd = _rnd(kg, (7, 7, in_ch))
            bnd = _init_bn(kg, in_ch)                      # eps = 1e-6 in the module
            w1 = _rnd(kg, (in_ch, hid))                    # pwConv (no BN), ReLU
            w2 = _rnd(kg, (hid, out_ch))                   # pwConv2, with bias
            b2 = _rnd(kg, (out_ch,), std=0.05)
            sd, shd = _fold_bn(bnd, 1e-6)
            blk = dict(type='ConvNeXt', has_shortcut=(in_ch != out_ch),
                       wd=(wd.reshape(49, in_ch) * sd[None, :]).T, bd=shd,
                       w1=w1.T, w2=w2.T, b2=b2)
            ref_blk = dict(type='ConvNeXt', wd=wd, bnd=bnd, w1=w1, w2=w2, b2=b2,
                           has_shortcut=(in_ch != out_ch))
            if in_ch != out_ch:
                ws = _rnd(kg, (in_ch, out_ch))
                bns = _init_bn(kg, out_ch)
                ss, shs = _fold_bn(bns, 1e-5)
                blk.update(ws=(ws * ss[None, :]).T, bs=shs)
                ref_blk.update(ws=ws, bns=bns)
            blocks.append(blk)
            ref_blocks.append(ref_blk)
        else:
            raise ValueError(block_type)

        in_ch = out_ch

    lin_w = _rnd(kg, (in_ch, num_classes), std=1.0 / (in_ch ** 0.5))
    lin_b = _rnd(kg, (num_classes,), std=0.1)

    return dict(blocks=blocks, ref_blocks=ref_blocks,
                lin_w=lin_w, lin_b=lin_b, lin_w_t=lin_w.T,
                num_classes=num_classes, roll_mode=_roll_mode())


# ----------------------------------------------------------------------------
# Forward pass (boundary layout prep + slab packing + ONE fused Pallas kernel)
# ----------------------------------------------------------------------------
def _stem_patches(x_nhwc, k, stride, kdim_pad):
    """im2col for the stem conv only, done once at the input boundary.

    Returns (kdim_pad, M) with rows (ky, kx, ci) zero-padded to a multiple of 8 and
    columns m = (n*Ho + ho)*Wo + wo, i.e. already in the kernel's lane-dense layout.
    """
    n, h, w, cin = x_nhwc.shape
    p = k // 2
    xp = jnp.pad(x_nhwc, ((0, 0), (p, p), (p, p), (0, 0)))
    ho = (h + 2 * p - k) // stride + 1
    wo = (w + 2 * p - k) // stride + 1
    cols = []
    for ky in range(k):
        for kx in range(k):
            sl = xp[:, ky:ky + (ho - 1) * stride + 1:stride,
                    kx:kx + (wo - 1) * stride + 1:stride, :]      # (N, Ho, Wo, Cin)
            cols.append(jnp.transpose(sl, (3, 0, 1, 2)).reshape(cin, n * ho * wo))
    patches = jnp.concatenate(cols, axis=0)                       # (k*k*Cin, M)
    patches = jnp.pad(patches, ((0, kdim_pad - k * k * cin), (0, 0)))
    return patches, ho, wo


def network_forward(x_nchw, net):
    blocks = net['blocks']
    assert blocks and blocks[0]['type'] == 'ConvBNReLU'
    stem = blocks[0]

    x_nhwc = jnp.transpose(x_nchw, (0, 2, 3, 1)).astype(jnp.float32)
    patches, H, W = _stem_patches(x_nhwc, stem['k'], stem['stride'], stem['kdim_pad'])
    n = x_nchw.shape[0]
    M = n * H * W
    num_classes = net['num_classes']

    # ---- pack all parameters + dw masks + GAP pool matrix into two lane-dense slabs ----
    # (constant-folded under jit: params are closed-over constants, masks/pool are static)
    wb = _SlabBuilder(_LANE, _MXU_DTYPE, _WROW_ALIGN)            # MXU matmul weights (bf16)
    fb = _SlabBuilder(max(_LANE, M), _F32, _FROW_ALIGN)          # biases / dw / masks / pool

    mask_specs = {}

    def mask_for(k):
        if k not in mask_specs:
            mask_specs[k] = fb.add(_dw_mask(k, H, W, M))
        return mask_specs[k]

    plan = []
    for blk in blocks:
        t = blk['type']
        if t == 'ConvBNReLU':
            plan.append(dict(type=t, w=wb.add(blk['w']), b=fb.add(blk['b'])))
        elif t == 'DWConv':
            plan.append(dict(type=t, k=blk['k'], mask=mask_for(blk['k']),
                             wd=fb.add(blk['wd']), bd=fb.add(blk['bd']),
                             wp=wb.add(blk['wp']), bp=fb.add(blk['bp'])))
        elif t == 'InvertedResidual':
            plan.append(dict(type=t, k=blk['k'], use_res=blk['use_res'],
                             mask=mask_for(blk['k']),
                             w1=wb.add(blk['w1']), b1=fb.add(blk['b1']),
                             wd=fb.add(blk['wd']), bd=fb.add(blk['bd']),
                             w2=wb.add(blk['w2']), b2=fb.add(blk['b2'])))
        elif t == 'ConvNeXt':
            d = dict(type=t, has_shortcut=blk['has_shortcut'], mask=mask_for(7),
                     wd=fb.add(blk['wd']), bd=fb.add(blk['bd']),
                     w1=wb.add(blk['w1']),
                     w2=wb.add(blk['w2']), b2=fb.add(blk['b2']))
            if blk['has_shortcut']:
                d.update(ws=wb.add(blk['ws']), bs=fb.add(blk['bs']))
            plan.append(d)
        else:
            raise ValueError(t)

    tail = dict(pool=fb.add(_gap_pool(M, n, H * W)),
                wl=wb.add(net['lin_w_t']), bl=fb.add(net['lin_b']))

    wslab = wb.build()      # (Rw, 128) bf16
    fslab = fb.build()      # (Rf, >=128) f32

    kernel = _make_network_kernel(plan, tail, W, net['roll_mode'])

    # Gridless single call: M = N*H*W = 128 lanes, C <= 32, ~0.3 MB of operands -> fits
    # comfortably in VMEM on v5e/v6e/v7x.
    # TODO(synk): for larger batch / resolution add a grid axis over M (batch x spatial
    #             tiles) with dimension_semantics=("parallel",) so v7x's two TensorCores
    #             both work; size per-step buffers for v7x's 64 MiB VMEM (<= ~16 MiB per
    #             double-buffered tile set) and keep the weight slabs resident via a
    #             constant index_map.
    logits_t = pl.pallas_call(
        kernel,
        out_shape=jax.ShapeDtypeStruct((num_classes, n), jnp.float32),
        in_specs=[pl.BlockSpec(memory_space=pltpu.MemorySpace.VMEM)] * 3,
        out_specs=pl.BlockSpec(memory_space=pltpu.MemorySpace.VMEM),
    )(patches, wslab, fslab)
    return logits_t.T                  # (N, num_classes)


# ----------------------------------------------------------------------------
# Pure-JAX reference (eval-mode semantics, fp32 HIGHEST), used to validate the kernel
# ----------------------------------------------------------------------------
_PREC = lax.Precision.HIGHEST


def _ref_conv(x, w, stride, pad, groups=1):
    return lax.conv_general_dilated(
        x, w, window_strides=(stride, stride), padding=[(pad, pad), (pad, pad)],
        dimension_numbers=('NHWC', 'HWIO', 'NHWC'), feature_group_count=groups,
        precision=_PREC)


def _ref_bn(x, bn, eps):
    return (x - bn['mean']) / jnp.sqrt(bn['var'] + eps) * bn['gamma'] + bn['beta']


def _ref_mm(x, w):
    return jnp.matmul(x, w, precision=_PREC)


def reference_forward(x_nchw, net):
    x = jnp.transpose(x_nchw, (0, 2, 3, 1)).astype(jnp.float32)
    for blk in net['ref_blocks']:
        t = blk['type']
        if t == 'ConvBNReLU':
            x = jax.nn.relu(_ref_bn(_ref_conv(x, blk['w'], blk['stride'], blk['k'] // 2),
                                    blk['bn'], 1e-5))
        elif t == 'DWConv':
            c = x.shape[-1]
            k = blk['k']
            x = jax.nn.relu(_ref_bn(
                _ref_conv(x, blk['wd'].reshape(k, k, 1, c), 1, k // 2, groups=c),
                blk['bnd'], 1e-5))
            x = jax.nn.relu(_ref_bn(_ref_mm(x, blk['wp']), blk['bnp'], 1e-5))
        elif t == 'InvertedResidual':
            identity = x
            k = blk['k']
            h = jax.nn.relu(_ref_bn(_ref_mm(x, blk['w1']), blk['bn1'], 1e-5))
            ch = h.shape[-1]
            h = jax.nn.relu(_ref_bn(
                _ref_conv(h, blk['wd'].reshape(k, k, 1, ch), 1, k // 2, groups=ch),
                blk['bnd'], 1e-5))
            h = _ref_bn(_ref_mm(h, blk['w2']), blk['bn2'], 1e-5)
            if blk['use_res']:
                h = h + identity
            x = jax.nn.relu(h)
        elif t == 'ConvNeXt':
            inp = x
            c = x.shape[-1]
            h = _ref_bn(_ref_conv(x, blk['wd'].reshape(7, 7, 1, c), 1, 3, groups=c),
                        blk['bnd'], 1e-6)
            h = jax.nn.relu(_ref_mm(h, blk['w1']))
            h = _ref_mm(h, blk['w2']) + blk['b2']
            sc = (_ref_bn(_ref_mm(inp, blk['ws']), blk['bns'], 1e-5)
                  if blk['has_shortcut'] else inp)
            x = h + sc
        # per-layer AdaptiveAvgPool2d((h, w)) at the current size is the identity.
    feat = jnp.mean(x, axis=(1, 2))
    return _ref_mm(feat, net['lin_w']) + net['lin_b']


if __name__ == "__main__":
    # (block_type, output_ch, kernel_size, stride, expansion_factor)
    network_encoding = [
        ('ConvBNReLU',       8, 3, 2, 0),   # 3 -> 8,  16x16 -> 8x8 (stem)
        ('DWConv',          16, 3, 1, 0),   # 8 -> 16
        ('InvertedResidual', 16, 3, 1, 2),  # 16 -> 16 (residual, ReLU after add)
        ('ConvNeXt',          8, 7, 1, 2),  # 16 -> 8 (conv + BN shortcut)
    ]

    base_key = jax.random.PRNGKey(0)
    net = build_network(jax.random.fold_in(base_key, 1), network_encoding,
                        input_channels_first=3, num_classes=2)
    x = jax.random.normal(base_key, (2, 3, 16, 16), jnp.float32)   # NCHW, as in PyTorch

    fwd = jax.jit(lambda inp: network_forward(inp, net))
    out = jax.block_until_ready(fwd(x))
    assert out.shape == (2, 2) and out.dtype == jnp.float32

    # Numerical check against the plain-XLA fp32 (Precision.HIGHEST) reference.  Tolerance
    # allows for the bf16 MXU operands in the kernel (accumulation stays f32).
    ref = jax.block_until_ready(reference_forward(x, net))
    assert jnp.allclose(out, ref, rtol=4e-2, atol=4e-2), (out, ref)
    print("KERNEL_OK")
</pallas_src>

<mosaic_0001>
module attributes {stable_mosaic.version = 11 : i64} {
  func.func @probe(%arg0: memref<8x128xf32, #tpu.memory_space<vmem>>, %arg1: memref<8x128xf32, #tpu.memory_space<vmem>>) attributes {dimension_semantics = [], scalar_prefetch = 0 : i64, scratch_operands = 0 : i64, tpu.core_type = #tpu.core_type<tc>} {
    %c0 = arith.constant 0 : index
    %c0_0 = arith.constant 0 : index
    %0 = vector.load %arg0[%c0, %c0_0] : memref<8x128xf32, #tpu.memory_space<vmem>>, vector<8x128xf32>
    %c1_i32 = arith.constant 1 : i32
    %1 = tpu.dynamic_rotate %0 by %c1_i32 dim 1 : vector<8x128xf32>, i32 -> vector<8x128xf32>
    %c0_1 = arith.constant 0 : index
    %c0_2 = arith.constant 0 : index
    %2 = vector.load %arg1[%c0_1, %c0_2] : memref<8x128xf32, #tpu.memory_space<vmem>>, vector<8x128xf32>
    tpu.vector_store %arg1[%c0_1, %c0_2], %1 {strides = array<i32>} : memref<8x128xf32, #tpu.memory_space<vmem>>, vector<8x128xf32>,
    return
  }
}

module attributes {stable_mosaic.version = 11 : i64} {
  func.func @kernel(%arg0: memref<32x128xf32, #tpu.memory_space<vmem>>, %arg1: memref<160x128xbf16, #tpu.memory_space<vmem>>, %arg2: memref<408x128xf32, #tpu.memory_space<vmem>>, %arg3: memref<2x2xf32, #tpu.memory_space<vmem>>) attributes {dimension_semantics = [], scalar_prefetch = 0 : i64, scratch_operands = 0 : i64, tpu.core_type = #tpu.core_type<tc>} {
    %c0 = arith.constant 0 : index
    %c0_0 = arith.constant 0 : index
    %0 = vector.load %arg0[%c0, %c0_0] : memref<32x128xf32, #tpu.memory_space<vmem>>, vector<32x128xf32>
    %c0_1 = arith.constant 0 : index
    %c0_2 = arith.constant 0 : index
    %1 = vector.load %arg1[%c0_1, %c0_2] : memref<160x128xbf16, #tpu.memory_space<vmem>>, vector<8x32xbf16>
    %c0_3 = arith.constant 0 : index
    %c0_4 = arith.constant 0 : index
    %2 = vector.load %arg2[%c0_3, %c0_4] : memref<408x128xf32, #tpu.memory_space<vmem>>, vector<8x1xf32>
    %3 = arith.truncf %0 : vector<32x128xf32> to vector<32x128xbf16>
    %cst = arith.constant dense<0.000000e+00> : vector<8x128xf32>
    %4 = tpu.matmul %1, %3, %cst {dimension_numbers = #tpu.dot_dimension_numbers<[1], [0], [0], [1], [0, 0, 1, 1], [], []>} : vector<8x32xbf16>, vector<32x128xbf16>, vector<8x128xf32> -> vector<8x128xf32>
    %5 = vector.broadcast %2 : vector<8x1xf32> to vector<8x128xf32>
    %6 = arith.addf %4, %5 : vector<8x128xf32>
    %cst_5 = arith.constant 0.000000e+00 : f32
    %7 = vector.broadcast %cst_5 : f32 to vector<8x128xf32>
    %8 = arith.maximumf %6, %7 : vector<8x128xf32>
    %c8 = arith.constant 8 : index
    %c0_6 = arith.constant 0 : index
    %9 = vector.load %arg2[%c8, %c0_6] : memref<408x128xf32, #tpu.memory_space<vmem>>, vector<9x128xf32>
    %c24 = arith.constant 24 : index
    %c0_7 = arith.constant 0 : index
    %10 = vector.load %arg2[%c24, %c0_7] : memref<408x128xf32, #tpu.memory_space<vmem>>, vector<8x9xf32>
    %c32 = arith.constant 32 : index
    %c0_8 = arith.constant 0 : index
    %11 = vector.load %arg2[%c32, %c0_8] : memref<408x128xf32, #tpu.memory_space<vmem>>, vector<8x1xf32>
    %cst_9 = arith.constant 0.000000e+00 : f32
    %12 = vector.broadcast %cst_9 : f32 to vector<8x128xf32>
    %c9_i32 = arith.constant 9 : i32
    %13 = tpu.dynamic_rotate %8 by %c9_i32 dim 1 : vector<8x128xf32>, i32 -> vector<8x128xf32>
    %14 = vector.extract_strided_slice %9 {offsets = [0, 0], sizes = [1, 128], strides = [1, 1]} : vector<9x128xf32> to vector<1x128xf32>
    %15 = vector.extract_strided_slice %10 {offsets = [0, 0], sizes = [8, 1], strides = [1, 1]} : vector<8x9xf32> to vector<8x1xf32>
    %16 = vector.broadcast %14 : vector<1x128xf32> to vector<8x128xf32>
    %17 = vector.broadcast %15 : vector<8x1xf32> to vector<8x128xf32>
    %18 = arith.mulf %16, %17 : vector<8x128xf32>
    %19 = arith.mulf %13, %18 : vector<8x128xf32>
    %20 = arith.addf %12, %19 : vector<8x128xf32>
    %c8_i32 = arith.constant 8 : i32
    %21 = tpu.dynamic_rotate %8 by %c8_i32 dim 1 : vector<8x128xf32>, i32 -> vector<8x128xf32>
    %22 = vector.extract_strided_slice %9 {offsets = [1, 0], sizes = [1, 128], strides = [1, 1]} : vector<9x128xf32> to vector<1x128xf32>
    %23 = vector.extract_strided_slice %10 {offsets = [0, 1], sizes = [8, 1], strides = [1, 1]} : vector<8x9xf32> to vector<8x1xf32>
    %24 = vector.broadcast %22 : vector<1x128xf32> to vector<8x128xf32>
    %25 = vector.broadcast %23 : vector<8x1xf32> to vector<8x128xf32>
    %26 = arith.mulf %24, %25 : vector<8x128xf32>
    %27 = arith.mulf %21, %26 : vector<8x128xf32>
    %28 = arith.addf %20, %27 : vector<8x128xf32>
    %c7_i32 = arith.constant 7 : i32
    %29 = tpu.dynamic_rotate %8 by %c7_i32 dim 1 : vector<8x128xf32>, i32 -> vector<8x128xf32>
    %30 = vector.extract_strided_slice %9 {offsets = [2, 0], sizes = [1, 128], strides = [1, 1]} : vector<9x128xf32> to vector<1x128xf32>
    %31 = vector.extract_strided_slice %10 {offsets = [0, 2], sizes = [8, 1], strides = [1, 1]} : vector<8x9xf32> to vector<8x1xf32>
    %32 = vector.broadcast %30 : vector<1x128xf32> to vector<8x128xf32>
    %33 = vector.broadcast %31 : vector<8x1xf32> to vector<8x128xf32>
    %34 = arith.mulf %32, %33 : vector<8x128xf32>
    %35 = arith.mulf %29, %34 : vector<8x128xf32>
    %36 = arith.addf %28, %35 : vector<8x128xf32>
    %c1_i32 = arith.constant 1 : i32
    %37 = tpu.dynamic_rotate %8 by %c1_i32 dim 1 : vector<8x128xf32>, i32 -> vector<8x128xf32>
    %38 = vector.extract_strided_slice %9 {offsets = [3, 0], sizes = [1, 128], strides = [1, 1]} : vector<9x128xf32> to vector<1x128xf32>
    %39 = vector.extract_strided_slice %10 {offsets = [0, 3], sizes = [8, 1], strides = [1, 1]} : vector<8x9xf32> to vector<8x1xf32>
    %40 = vector.broadcast %38 : vector<1x128xf32> to vector<8x128xf32>
    %41 = vector.broadcast %39 : vector<8x1xf32> to vector<8x128xf32>
    %42 = arith.mulf %40, %41 : vector<8x128xf32>
    %43 = arith.mulf %37, %42 : vector<8x128xf32>
    %44 = arith.addf %36, %43 : vector<8x128xf32>
    %45 = vector.extract_strided_slice %9 {offsets = [4, 0], sizes = [1, 128], strides = [1, 1]} : vector<9x128xf32> to vector<1x128xf32>
    %46 = vector.extract_strided_slice %10 {offsets = [0, 4], sizes = [8, 1], strides = [1, 1]} : vector<8x9xf32> to vector<8x1xf32>
    %47 = vector.broadcast %45 : vector<1x128xf32> to vector<8x128xf32>
    %48 = vector.broadcast %46 : vector<8x1xf32> to vector<8x128xf32>
    %49 = arith.mulf %47, %48 : vector<8x128xf32>
    %50 = arith.mulf %8, %49 : vector<8x128xf32>
    %51 = arith.addf %44, %50 : vector<8x128xf32>
    %c127_i32 = arith.constant 127 : i32
    %52 = tpu.dynamic_rotate %8 by %c127_i32 dim 1 : vector<8x128xf32>, i32 -> vector<8x128xf32>
    %53 = vector.extract_strided_slice %9 {offsets = [5, 0], sizes = [1, 128], strides = [1, 1]} : vector<9x128xf32> to vector<1x128xf32>
    %54 = vector.extract_strided_slice %10 {offsets = [0, 5], sizes = [8, 1], strides = [1, 1]} : vector<8x9xf32> to vector<8x1xf32>
    %55 = vector.broadcast %53 : vector<1x128xf32> to vector<8x128xf32>
    %56 = vector.broadcast %54 : vector<8x1xf32> to vector<8x128xf32>
    %57 = arith.mulf %55, %56 : vector<8x128xf32>
    %58 = arith.mulf %52, %57 : vector<8x128xf32>
    %59 = arith.addf %51, %58 : vector<8x128xf32>
    %c121_i32 = arith.constant 121 : i32
    %60 = tpu.dynamic_rotate %8 by %c121_i32 dim 1 : vector<8x128xf32>, i32 -> vector<8x128xf32>
    %61 = vector.extract_strided_slice %9 {offsets = [6, 0], sizes = [1, 128], strides = [1, 1]} : vector<9x128xf32> to vector<1x128xf32>
    %62 = vector.extract_strided_slice %10 {offsets = [0, 6], sizes = [8, 1], strides = [1, 1]} : vector<8x9xf32> to vector<8x1xf32>
    %63 = vector.broadcast %61 : vector<1x128xf32> to vector<8x128xf32>
    %64 = vector.broadcast %62 : vector<8x1xf32> to vector<8x128xf32>
    %65 = arith.mulf %63, %64 : vector<8x128xf32>
    %66 = arith.mulf %60, %65 : vector<8x128xf32>
    %67 = arith.addf %59, %66 : vector<8x128xf32>
    %c120_i32 = arith.constant 120 : i32
    %68 = tpu.dynamic_rotate %8 by %c120_i32 dim 1 : vector<8x128xf32>, i32 -> vector<8x128xf32>
    %69 = vector.extract_strided_slice %9 {offsets = [7, 0], sizes = [1, 128], strides = [1, 1]} : vector<9x128xf32> to vector<1x128xf32>
    %70 = vector.extract_strided_slice %10 {offsets = [0, 7], sizes = [8, 1], strides = [1, 1]} : vector<8x9xf32> to vector<8x1xf32>
    %71 = vector.broadcast %69 : vector<1x128xf32> to vector<8x128xf32>
    %72 = vector.broadcast %70 : vector<8x1xf32> to vector<8x128xf32>
    %73 = arith.mulf %71, %72 : vector<8x128xf32>
    %74 = arith.mulf %68, %73 : vector<8x128xf32>
    %75 = arith.addf %67, %74 : vector<8x128xf32>
    %c119_i32 = arith.constant 119 : i32
    %76 = tpu.dynamic_rotate %8 by %c119_i32 dim 1 : vector<8x128xf32>, i32 -> vector<8x128xf32>
    %77 = vector.extract_strided_slice %9 {offsets = [8, 0], sizes = [1, 128], strides = [1, 1]} : vector<9x128xf32> to vector<1x128xf32>
    %78 = vector.extract_strided_slice %10 {offsets = [0, 8], sizes = [8, 1], strides = [1, 1]} : vector<8x9xf32> to vector<8x1xf32>
    %79 = vector.broadcast %77 : vector<1x128xf32> to vector<8x128xf32>
    %80 = vector.broadcast %78 : vector<8x1xf32> to vector<8x128xf32>
    %81 = arith.mulf %79, %80 : vector<8x128xf32>
    %82 = arith.mulf %76, %81 : vector<8x128xf32>
    %83 = arith.addf %75, %82 : vector<8x128xf32>
    %84 = vector.broadcast %11 : vector<8x1xf32> to vector<8x128xf32>
    %85 = arith.addf %83, %84 : vector<8x128xf32>
    %cst_10 = arith.constant 0.000000e+00 : f32
    %86 = vector.broadcast %cst_10 : f32 to vector<8x128xf32>
    %87 = arith.maximumf %85, %86 : vector<8x128xf32>
    %c16 = arith.constant 16 : index
    %c0_11 = arith.constant 0 : index
    %88 = vector.load %arg1[%c16, %c0_11] : memref<160x128xbf16, #tpu.memory_space<vmem>>, vector<16x8xbf16>
    %c40 = arith.constant 40 : index
    %c0_12 = arith.constant 0 : index
    %89 = vector.load %arg2[%c40, %c0_12] : memref<408x128xf32, #tpu.memory_space<vmem>>, vector<16x1xf32>
    %90 = arith.truncf %87 : vector<8x128xf32> to vector<8x128xbf16>
    %cst_13 = arith.constant dense<0.000000e+00> : vector<16x128xf32>
    %91 = tpu.matmul %88, %90, %cst_13 {dimension_numbers = #tpu.dot_dimension_numbers<[1], [0], [0], [1], [0, 0, 1, 1], [], []>} : vector<16x8xbf16>, vector<8x128xbf16>, vector<16x128xf32> -> vector<16x128xf32>
    %92 = vector.broadcast %89 : vector<16x1xf32> to vector<16x128xf32>
    %93 = arith.addf %91, %92 : vector<16x128xf32>
    %cst_14 = arith.constant 0.000000e+00 : f32
    %94 = vector.broadcast %cst_14 : f32 to vector<16x128xf32>
    %95 = arith.maximumf %93, %94 : vector<16x128xf32>
    %c8_15 = arith.constant 8 : index
    %c0_16 = arith.constant 0 : index
    %96 = vector.load %arg2[%c8_15, %c0_16] : memref<408x128xf32, #tpu.memory_space<vmem>>, vector<9x128xf32>
    %c32_17 = arith.constant 32 : index
    %c0_18 = arith.constant 0 : index
    %97 = vector.load %arg1[%c32_17, %c0_18] : memref<160x128xbf16, #tpu.memory_space<vmem>>, vector<32x16xbf16>
    %c56 = arith.constant 56 : index
    %c0_19 = arith.constant 0 : index
    %98 = vector.load %arg2[%c56, %c0_19] : memref<408x128xf32, #tpu.memory_space<vmem>>, vector<32x1xf32>
    %99 = arith.truncf %95 : vector<16x128xf32> to vector<16x128xbf16>
    %cst_20 = arith.constant dense<0.000000e+00> : vector<32x128xf32>
    %100 = tpu.matmul %97, %99, %cst_20 {dimension_numbers = #tpu.dot_dimension_numbers<[1], [0], [0], [1], [0, 0, 1, 1], [], []>} : vector<32x16xbf16>, vector<16x128xbf16>, vector<32x128xf32> -> vector<32x128xf32>
    %101 = vector.broadcast %98 : vector<32x1xf32> to vector<32x128xf32>
    %102 = arith.addf %100, %101 : vector<32x128xf32>
    %cst_21 = arith.constant 0.000000e+00 : f32
    %103 = vector.broadcast %cst_21 : f32 to vector<32x128xf32>
    %104 = arith.maximumf %102, %103 : vector<32x128xf32>
    %c88 = arith.constant 88 : index
    %c0_22 = arith.constant 0 : index
    %105 = vector.load %arg2[%c88, %c0_22] : memref<408x128xf32, #tpu.memory_space<vmem>>, vector<32x9xf32>
    %c120 = arith.constant 120 : index
    %c0_23 = arith.constant 0 : index
    %106 = vector.load %arg2[%c120, %c0_23] : memref<408x128xf32, #tpu.memory_space<vmem>>, vector<32x1xf32>
    %cst_24 = arith.constant 0.000000e+00 : f32
    %107 = vector.broadcast %cst_24 : f32 to vector<32x128xf32>
    %c9_i32_25 = arith.constant 9 : i32
    %108 = tpu.dynamic_rotate %104 by %c9_i32_25 dim 1 : vector<32x128xf32>, i32 -> vector<32x128xf32>
    %109 = vector.extract_strided_slice %96 {offsets = [0, 0], sizes = [1, 128], strides = [1, 1]} : vector<9x128xf32> to vector<1x128xf32>
    %110 = vector.extract_strided_slice %105 {offsets = [0, 0], sizes = [32, 1], strides = [1, 1]} : vector<32x9xf32> to vector<32x1xf32>
    %111 = vector.broadcast %109 : vector<1x128xf32> to vector<32x128xf32>
    %112 = vector.broadcast %110 : vector<32x1xf32> to vector<32x128xf32>
    %113 = arith.mulf %111, %112 : vector<32x128xf32>
    %114 = arith.mulf %108, %113 : vector<32x128xf32>
    %115 = arith.addf %107, %114 : vector<32x128xf32>
    %c8_i32_26 = arith.constant 8 : i32
    %116 = tpu.dynamic_rotate %104 by %c8_i32_26 dim 1 : vector<32x128xf32>, i32 -> vector<32x128xf32>
    %117 = vector.extract_strided_slice %96 {offsets = [1, 0], sizes = [1, 128], strides = [1, 1]} : vector<9x128xf32> to vector<1x128xf32>
    %118 = vector.extract_strided_slice %105 {offsets = [0, 1], sizes = [32, 1], strides = [1, 1]} : vector<32x9xf32> to vector<32x1xf32>
    %119 = vector.broadcast %117 : vector<1x128xf32> to vector<32x128xf32>
    %120 = vector.broadcast %118 : vector<32x1xf32> to vector<32x128xf32>
    %121 = arith.mulf %119, %120 : vector<32x128xf32>
    %122 = arith.mulf %116, %121 : vector<32x128xf32>
    %123 = arith.addf %115, %122 : vector<32x128xf32>
    %c7_i32_27 = arith.constant 7 : i32
    %124 = tpu.dynamic_rotate %104 by %c7_i32_27 dim 1 : vector<32x128xf32>, i32 -> vector<32x128xf32>
    %125 = vector.extract_strided_slice %96 {offsets = [2, 0], sizes = [1, 128], strides = [1, 1]} : vector<9x128xf32> to vector<1x128xf32>
    %126 = vector.extract_strided_slice %105 {offsets = [0, 2], sizes = [32, 1], strides = [1, 1]} : vector<32x9xf32> to vector<32x1xf32>
    %127 = vector.broadcast %125 : vector<1x128xf32> to vector<32x128xf32>
    %128 = vector.broadcast %126 : vector<32x1xf32> to vector<32x128xf32>
    %129 = arith.mulf %127, %128 : vector<32x128xf32>
    %130 = arith.mulf %124, %129 : vector<32x128xf32>
    %131 = arith.addf %123, %130 : vector<32x128xf32>
    %c1_i32_28 = arith.constant 1 : i32
    %132 = tpu.dynamic_rotate %104 by %c1_i32_28 dim 1 : vector<32x128xf32>, i32 -> vector<32x128xf32>
    %133 = vector.extract_strided_slice %96 {offsets = [3, 0], sizes = [1, 128], strides = [1, 1]} : vector<9x128xf32> to vector<1x128xf32>
    %134 = vector.extract_strided_slice %105 {offsets = [0, 3], sizes = [32, 1], strides = [1, 1]} : vector<32x9xf32> to vector<32x1xf32>
    %135 = vector.broadcast %133 : vector<1x128xf32> to vector<32x128xf32>
    %136 = vector.broadcast %134 : vector<32x1xf32> to vector<32x128xf32>
    %137 = arith.mulf %135, %136 : vector<32x128xf32>
    %138 = arith.mulf %132, %137 : vector<32x128xf32>
    %139 = arith.addf %131, %138 : vector<32x128xf32>
    %140 = vector.extract_strided_slice %96 {offsets = [4, 0], sizes = [1, 128], strides = [1, 1]} : vector<9x128xf32> to vector<1x128xf32>
    %141 = vector.extract_strided_slice %105 {offsets = [0, 4], sizes = [32, 1], strides = [1, 1]} : vector<32x9xf32> to vector<32x1xf32>
    %142 = vector.broadcast %140 : vector<1x128xf32> to vector<32x128xf32>
    %143 = vector.broadcast %141 : vector<32x1xf32> to vector<32x128xf32>
    %144 = arith.mulf %142, %143 : vector<32x128xf32>
    %145 = arith.mulf %104, %144 : vector<32x128xf32>
    %146 = arith.addf %139, %145 : vector<32x128xf32>
    %c127_i32_29 = arith.constant 127 : i32
    %147 = tpu.dynamic_rotate %104 by %c127_i32_29 dim 1 : vector<32x128xf32>, i32 -> vector<32x128xf32>
    %148 = vector.extract_strided_slice %96 {offsets = [5, 0], sizes = [1, 128], strides = [1, 1]} : vector<9x128xf32> to vector<1x128xf32>
    %149 = vector.extract_strided_slice %105 {offsets = [0, 5], sizes = [32, 1], strides = [1, 1]} : vector<32x9xf32> to vector<32x1xf32>
    %150 = vector.broadcast %148 : vector<1x128xf32> to vector<32x128xf32>
    %151 = vector.broadcast %149 : vector<32x1xf32> to vector<32x128xf32>
    %152 = arith.mulf %150, %151 : vector<32x128xf32>
    %153 = arith.mulf %147, %152 : vector<32x128xf32>
    %154 = arith.addf %146, %153 : vector<32x128xf32>
    %c121_i32_30 = arith.constant 121 : i32
    %155 = tpu.dynamic_rotate %104 by %c121_i32_30 dim 1 : vector<32x128xf32>, i32 -> vector<32x128xf32>
    %156 = vector.extract_strided_slice %96 {offsets = [6, 0], sizes = [1, 128], strides = [1, 1]} : vector<9x128xf32> to vector<1x128xf32>
    %157 = vector.extract_strided_slice %105 {offsets = [0, 6], sizes = [32, 1], strides = [1, 1]} : vector<32x9xf32> to vector<32x1xf32>
    %158 = vector.broadcast %156 : vector<1x128xf32> to vector<32x128xf32>
    %159 = vector.broadcast %157 : vector<32x1xf32> to vector<32x128xf32>
    %160 = arith.mulf %158, %159 : vector<32x128xf32>
    %161 = arith.mulf %155, %160 : vector<32x128xf32>
    %162 = arith.addf %154, %161 : vector<32x128xf32>
    %c120_i32_31 = arith.constant 120 : i32
    %163 = tpu.dynamic_rotate %104 by %c120_i32_31 dim 1 : vector<32x128xf32>, i32 -> vector<32x128xf32>
    %164 = vector.extract_strided_slice %96 {offsets = [7, 0], sizes = [1, 128], strides = [1, 1]} : vector<9x128xf32> to vector<1x128xf32>
    %165 = vector.extract_strided_slice %105 {offsets = [0, 7], sizes = [32, 1], strides = [1, 1]} : vector<32x9xf32> to vector<32x1xf32>
    %166 = vector.broadcast %164 : vector<1x128xf32> to vector<32x128xf32>
    %167 = vector.broadcast %165 : vector<32x1xf32> to vector<32x128xf32>
    %168 = arith.mulf %166, %167 : vector<32x128xf32>
    %169 = arith.mulf %163, %168 : vector<32x128xf32>
    %170 = arith.addf %162, %169 : vector<32x128xf32>
    %c119_i32_32 = arith.constant 119 : i32
    %171 = tpu.dynamic_rotate %104 by %c119_i32_32 dim 1 : vector<32x128xf32>, i32 -> vector<32x128xf32>
    %172 = vector.extract_strided_slice %96 {offsets = [8, 0], sizes = [1, 128], strides = [1, 1]} : vector<9x128xf32> to vector<1x128xf32>
    %173 = vector.extract_strided_slice %105 {offsets = [0, 8], sizes = [32, 1], strides = [1, 1]} : vector<32x9xf32> to vector<32x1xf32>
    %174 = vector.broadcast %172 : vector<1x128xf32> to vector<32x128xf32>
    %175 = vector.broadcast %173 : vector<32x1xf32> to vector<32x128xf32>
    %176 = arith.mulf %174, %175 : vector<32x128xf32>
    %177 = arith.mulf %171, %176 : vector<32x128xf32>
    %178 = arith.addf %170, %177 : vector<32x128xf32>
    %179 = vector.broadcast %106 : vector<32x1xf32> to vector<32x128xf32>
    %180 = arith.addf %178, %179 : vector<32x128xf32>
    %cst_33 = arith.constant 0.000000e+00 : f32
    %181 = vector.broadcast %cst_33 : f32 to vector<32x128xf32>
    %182 = arith.maximumf %180, %181 : vector<32x128xf32>
    %c64 = arith.constant 64 : index
    %c0_34 = arith.constant 0 : index
    %183 = vector.load %arg1[%c64, %c0_34] : memref<160x128xbf16, #tpu.memory_space<vmem>>, vector<16x32xbf16>
    %c152 = arith.constant 152 : index
    %c0_35 = arith.constant 0 : index
    %184 = vector.load %arg2[%c152, %c0_35] : memref<408x128xf32, #tpu.memory_space<vmem>>, vector<16x1xf32>
    %185 = arith.truncf %182 : vector<32x128xf32> to vector<32x128xbf16>
    %cst_36 = arith.constant dense<0.000000e+00> : vector<16x128xf32>
    %186 = tpu.matmul %183, %185, %cst_36 {dimension_numbers = #tpu.dot_dimension_numbers<[1], [0], [0], [1], [0, 0, 1, 1], [], []>} : vector<16x32xbf16>, vector<32x128xbf16>, vector<16x128xf32> -> vector<16x128xf32>
    %187 = vector.broadcast %184 : vector<16x1xf32> to vector<16x128xf32>
    %188 = arith.addf %186, %187 : vector<16x128xf32>
    %189 = arith.addf %188, %95 : vector<16x128xf32>
    %cst_37 = arith.constant 0.000000e+00 : f32
    %190 = vector.broadcast %cst_37 : f32 to vector<16x128xf32>
    %191 = arith.maximumf %189, %190 : vector<16x128xf32>
    %c168 = arith.constant 168 : index
    %c0_38 = arith.constant 0 : index
    %192 = vector.load %arg2[%c168, %c0_38] : memref<408x128xf32, #tpu.memory_space<vmem>>, vector<49x128xf32>
    %c128 = arith.constant 128 : index
    %c0_39 = arith.constant 0 : index
    %193 = vector.load %arg1[%c128, %c0_39] : memref<160x128xbf16, #tpu.memory_space<vmem>>, vector<8x16xbf16>
    %c264 = arith.constant 264 : index
    %c0_40 = arith.constant 0 : index
    %194 = vector.load %arg2[%c264, %c0_40] : memref<408x128xf32, #tpu.memory_space<vmem>>, vector<8x1xf32>
    %195 = arith.truncf %191 : vector<16x128xf32> to vector<16x128xbf16>
    %cst_41 = arith.constant dense<0.000000e+00> : vector<8x128xf32>
    %196 = tpu.matmul %193, %195, %cst_41 {dimension_numbers = #tpu.dot_dimension_numbers<[1], [0], [0], [1], [0, 0, 1, 1], [], []>} : vector<8x16xbf16>, vector<16x128xbf16>, vector<8x128xf32> -> vector<8x128xf32>
    %197 = vector.broadcast %194 : vector<8x1xf32> to vector<8x128xf32>
    %198 = arith.addf %196, %197 : vector<8x128xf32>
    %c224 = arith.constant 224 : index
    %c0_42 = arith.constant 0 : index
    %199 = vector.load %arg2[%c224, %c0_42] : memref<408x128xf32, #tpu.memory_space<vmem>>, vector<16x49xf32>
    %c240 = arith.constant 240 : index
    %c0_43 = arith.constant 0 : index
    %200 = vector.load %arg2[%c240, %c0_43] : memref<408x128xf32, #tpu.memory_space<vmem>>, vector<16x1xf32>
    %cst_44 = arith.constant 0.000000e+00 : f32
    %201 = vector.broadcast %cst_44 : f32 to vector<16x128xf32>
    %c27_i32 = arith.constant 27 : i32
    %202 = tpu.dynamic_rotate %191 by %c27_i32 dim 1 : vector<16x128xf32>, i32 -> vector<16x128xf32>
    %203 = vector.extract_strided_slice %192 {offsets = [0, 0], sizes = [1, 128], strides = [1, 1]} : vector<49x128xf32> to vector<1x128xf32>
    %204 = vector.extract_strided_slice %199 {offsets = [0, 0], sizes = [16, 1], strides = [1, 1]} : vector<16x49xf32> to vector<16x1xf32>
    %205 = vector.broadcast %203 : vector<1x128xf32> to vector<16x128xf32>
    %206 = vector.broadcast %204 : vector<16x1xf32> to vector<16x128xf32>
    %207 = arith.mulf %205, %206 : vector<16x128xf32>
    %208 = arith.mulf %202, %207 : vector<16x128xf32>
    %209 = arith.addf %201, %208 : vector<16x128xf32>
    %c26_i32 = arith.constant 26 : i32
    %210 = tpu.dynamic_rotate %191 by %c26_i32 dim 1 : vector<16x128xf32>, i32 -> vector<16x128xf32>
    %211 = vector.extract_strided_slice %192 {offsets = [1, 0], sizes = [1, 128], strides = [1, 1]} : vector<49x128xf32> to vector<1x128xf32>
    %212 = vector.extract_strided_slice %199 {offsets = [0, 1], sizes = [16, 1], strides = [1, 1]} : vector<16x49xf32> to vector<16x1xf32>
    %213 = vector.broadcast %211 : vector<1x128xf32> to vector<16x128xf32>
    %214 = vector.broadcast %212 : vector<16x1xf32> to vector<16x128xf32>
    %215 = arith.mulf %213, %214 : vector<16x128xf32>
    %216 = arith.mulf %210, %215 : vector<16x128xf32>
    %217 = arith.addf %209, %216 : vector<16x128xf32>
    %c25_i32 = arith.constant 25 : i32
    %218 = tpu.dynamic_rotate %191 by %c25_i32 dim 1 : vector<16x128xf32>, i32 -> vector<16x128xf32>
    %219 = vector.extract_strided_slice %192 {offsets = [2, 0], sizes = [1, 128], strides = [1, 1]} : vector<49x128xf32> to vector<1x128xf32>
    %220 = vector.extract_strided_slice %199 {offsets = [0, 2], sizes = [16, 1], strides = [1, 1]} : vector<16x49xf32> to vector<16x1xf32>
    %221 = vector.broadcast %219 : vector<1x128xf32> to vector<16x128xf32>
    %222 = vector.broadcast %220 : vector<16x1xf32> to vector<16x128xf32>
    %223 = arith.mulf %221, %222 : vector<16x128xf32>
    %224 = arith.mulf %218, %223 : vector<16x128xf32>
    %225 = arith.addf %217, %224 : vector<16x128xf32>
    %c24_i32 = arith.constant 24 : i32
    %226 = tpu.dynamic_rotate %191 by %c24_i32 dim 1 : vector<16x128xf32>, i32 -> vector<16x128xf32>
    %227 = vector.extract_strided_slice %192 {offsets = [3, 0], sizes = [1, 128], strides = [1, 1]} : vector<49x128xf32> to vector<1x128xf32>
    %228 = vector.extract_strided_slice %199 {offsets = [0, 3], sizes = [16, 1], strides = [1, 1]} : vector<16x49xf32> to vector<16x1xf32>
    %229 = vector.broadcast %227 : vector<1x128xf32> to vector<16x128xf32>
    %230 = vector.broadcast %228 : vector<16x1xf32> to vector<16x128xf32>
    %231 = arith.mulf %229, %230 : vector<16x128xf32>
    %232 = arith.mulf %226, %231 : vector<16x128xf32>
    %233 = arith.addf %225, %232 : vector<16x128xf32>
    %c23_i32 = arith.constant 23 : i32
    %234 = tpu.dynamic_rotate %191 by %c23_i32 dim 1 : vector<16x128xf32>, i32 -> vector<16x128xf32>
    %235 = vector.extract_strided_slice %192 {offsets = [4, 0], sizes = [1, 128], strides = [1, 1]} : vector<49x128xf32> to vector<1x128xf32>
    %236 = vector.extract_strided_slice %199 {offsets = [0, 4], sizes = [16, 1], strides = [1, 1]} : vector<16x49xf32> to vector<16x1xf32>
    %237 = vector.broadcast %235 : vector<1x128xf32> to vector<16x128xf32>
    %238 = vector.broadcast %236 : vector<16x1xf32> to vector<16x128xf32>
    %239 = arith.mulf %237, %238 : vector<16x128xf32>
    %240 = arith.mulf %234, %239 : vector<16x128xf32>
    %241 = arith.addf %233, %240 : vector<16x128xf32>
    %c22_i32 = arith.constant 22 : i32
    %242 = tpu.dynamic_rotate %191 by %c22_i32 dim 1 : vector<16x128xf32>, i32 -> vector<16x128xf32>
    %243 = vector.extract_strided_slice %192 {offsets = [5, 0], sizes = [1, 128], strides = [1, 1]} : vector<49x128xf32> to vector<1x128xf32>
    %244 = vector.extract_strided_slice %199 {offsets = [0, 5], sizes = [16, 1], strides = [1, 1]} : vector<16x49xf32> to vector<16x1xf32>
    %245 = vector.broadcast %243 : vector<1x128xf32> to vector<16x128xf32>
    %246 = vector.broadcast %244 : vector<16x1xf32> to vector<16x128xf32>
    %247 = arith.mulf %245, %246 : vector<16x128xf32>
    %248 = arith.mulf %242, %247 : vector<16x128xf32>
    %249 = arith.addf %241, %248 : vector<16x128xf32>
    %c21_i32 = arith.constant 21 : i32
    %250 = tpu.dynamic_rotate %191 by %c21_i32 dim 1 : vector<16x128xf32>, i32 -> vector<16x128xf32>
    %251 = vector.extract_strided_slice %192 {offsets = [6, 0], sizes = [1, 128], strides = [1, 1]} : vector<49x128xf32> to vector<1x128xf32>
    %252 = vector.extract_strided_slice %199 {offsets = [0, 6], sizes = [16, 1], strides = [1, 1]} : vector<16x49xf32> to vector<16x1xf32>
    %253 = vector.broadcast %251 : vector<1x128xf32> to vector<16x128xf32>
    %254 = vector.broadcast %252 : vector<16x1xf32> to vector<16x128xf32>
    %255 = arith.mulf %253, %254 : vector<16x128xf32>
    %256 = arith.mulf %250, %255 : vector<16x128xf32>
    %257 = arith.addf %249, %256 : vector<16x128xf32>
    %c19_i32 = arith.constant 19 : i32
    %258 = tpu.dynamic_rotate %191 by %c19_i32 dim 1 : vector<16x128xf32>, i32 -> vector<16x128xf32>
    %259 = vector.extract_strided_slice %192 {offsets = [7, 0], sizes = [1, 128], strides = [1, 1]} : vector<49x128xf32> to vector<1x128xf32>
    %260 = vector.extract_strided_slice %199 {offsets = [0, 7], sizes = [16, 1], strides = [1, 1]} : vector<16x49xf32> to vector<16x1xf32>
    %261 = vector.broadcast %259 : vector<1x128xf32> to vector<16x128xf32>
    %262 = vector.broadcast %260 : vector<16x1xf32> to vector<16x128xf32>
    %263 = arith.mulf %261, %262 : vector<16x128xf32>
    %264 = arith.mulf %258, %263 : vector<16x128xf32>
    %265 = arith.addf %257, %264 : vector<16x128xf32>
    %c18_i32 = arith.constant 18 : i32
    %266 = tpu.dynamic_rotate %191 by %c18_i32 dim 1 : vector<16x128xf32>, i32 -> vector<16x128xf32>
    %267 = vector.extract_strided_slice %192 {offsets = [8, 0], sizes = [1, 128], strides = [1, 1]} : vector<49x128xf32> to vector<1x128xf32>
    %268 = vector.extract_strided_slice %199 {offsets = [0, 8], sizes = [16, 1], strides = [1, 1]} : vector<16x49xf32> to vector<16x1xf32>
    %269 = vector.broadcast %267 : vector<1x128xf32> to vector<16x128xf32>
    %270 = vector.broadcast %268 : vector<16x1xf32> to vector<16x128xf32>
    %271 = arith.mulf %269, %270 : vector<16x128xf32>
    %272 = arith.mulf %266, %271 : vector<16x128xf32>
    %273 = arith.addf %265, %272 : vector<16x128xf32>
    %c17_i32 = arith.constant 17 : i32
    %274 = tpu.dynamic_rotate %191 by %c17_i32 dim 1 : vector<16x128xf32>, i32 -> vector<16x128xf32>
    %275 = vector.extract_strided_slice %192 {offsets = [9, 0], sizes = [1, 128], strides = [1, 1]} : vector<49x128xf32> to vector<1x128xf32>
    %276 = vector.extract_strided_slice %199 {offsets = [0, 9], sizes = [16, 1], strides = [1, 1]} : vector<16x49xf32> to vector<16x1xf32>
    %277 = vector.broadcast %275 : vector<1x128xf32> to vector<16x128xf32>
    %278 = vector.broadcast %276 : vector<16x1xf32> to vector<16x128xf32>
    %279 = arith.mulf %277, %278 : vector<16x128xf32>
    %280 = arith.mulf %274, %279 : vector<16x128xf32>
    %281 = arith.addf %273, %280 : vector<16x128xf32>
    %c16_i32 = arith.constant 16 : i32
    %282 = tpu.dynamic_rotate %191 by %c16_i32 dim 1 : vector<16x128xf32>, i32 -> vector<16x128xf32>
    %283 = vector.extract_strided_slice %192 {offsets = [10, 0], sizes = [1, 128], strides = [1, 1]} : vector<49x128xf32> to vector<1x128xf32>
    %284 = vector.extract_strided_slice %199 {offsets = [0, 10], sizes = [16, 1], strides = [1, 1]} : vector<16x49xf32> to vector<16x1xf32>
    %285 = vector.broadcast %283 : vector<1x128xf32> to vector<16x128xf32>
    %286 = vector.broadcast %284 : vector<16x1xf32> to vector<16x128xf32>
    %287 = arith.mulf %285, %286 : vector<16x128xf32>
    %288 = arith.mulf %282, %287 : vector<16x128xf32>
    %289 = arith.addf %281, %288 : vector<16x128xf32>
    %c15_i32 = arith.constant 15 : i32
    %290 = tpu.dynamic_rotate %191 by %c15_i32 dim 1 : vector<16x128xf32>, i32 -> vector<16x128xf32>
    %291 = vector.extract_strided_slice %192 {offsets = [11, 0], sizes = [1, 128], strides = [1, 1]} : vector<49x128xf32> to vector<1x128xf32>
    %292 = vector.extract_strided_slice %199 {offsets = [0, 11], sizes = [16, 1], strides = [1, 1]} : vector<16x49xf32> to vector<16x1xf32>
    %293 = vector.broadcast %291 : vector<1x128xf32> to vector<16x128xf32>
    %294 = vector.broadcast %292 : vector<16x1xf32> to vector<16x128xf32>
    %295 = arith.mulf %293, %294 : vector<16x128xf32>
    %296 = arith.mulf %290, %295 : vector<16x128xf32>
    %297 = arith.addf %289, %296 : vector<16x128xf32>
    %c14_i32 = arith.constant 14 : i32
    %298 = tpu.dynamic_rotate %191 by %c14_i32 dim 1 : vector<16x128xf32>, i32 -> vector<16x128xf32>
    %299 = vector.extract_strided_slice %192 {offsets = [12, 0], sizes = [1, 128], strides = [1, 1]} : vector<49x128xf32> to vector<1x128xf32>
    %300 = vector.extract_strided_slice %199 {offsets = [0, 12], sizes = [16, 1], strides = [1, 1]} : vector<16x49xf32> to vector<16x1xf32>
    %301 = vector.broadcast %299 : vector<1x128xf32> to vector<16x128xf32>
    %302 = vector.broadcast %300 : vector<16x1xf32> to vector<16x128xf32>
    %303 = arith.mulf %301, %302 : vector<16x128xf32>
    %304 = arith.mulf %298, %303 : vector<16x128xf32>
    %305 = arith.addf %297, %304 : vector<16x128xf32>
    %c13_i32 = arith.constant 13 : i32
    %306 = tpu.dynamic_rotate %191 by %c13_i32 dim 1 : vector<16x128xf32>, i32 -> vector<16x128xf32>
    %307 = vector.extract_strided_slice %192 {offsets = [13, 0], sizes = [1, 128], strides = [1, 1]} : vector<49x128xf32> to vector<1x128xf32>
    %308 = vector.extract_strided_slice %199 {offsets = [0, 13], sizes = [16, 1], strides = [1, 1]} : vector<16x49xf32> to vector<16x1xf32>
    %309 = vector.broadcast %307 : vector<1x128xf32> to vector<16x128xf32>
    %310 = vector.broadcast %308 : vector<16x1xf32> to vector<16x128xf32>
    %311 = arith.mulf %309, %310 : vector<16x128xf32>
    %312 = arith.mulf %306, %311 : vector<16x128xf32>
    %313 = arith.addf %305, %312 : vector<16x128xf32>
    %c11_i32 = arith.constant 11 : i32
    %314 = tpu.dynamic_rotate %191 by %c11_i32 dim 1 : vector<16x128xf32>, i32 -> vector<16x128xf32>
    %315 = vector.extract_strided_slice %192 {offsets = [14, 0], sizes = [1, 128], strides = [1, 1]} : vector<49x128xf32> to vector<1x128xf32>
    %316 = vector.extract_strided_slice %199 {offsets = [0, 14], sizes = [16, 1], strides = [1, 1]} : vector<16x49xf32> to vector<16x1xf32>
    %317 = vector.broadcast %315 : vector<1x128xf32> to vector<16x128xf32>
    %318 = vector.broadcast %316 : vector<16x1xf32> to vector<16x128xf32>
    %319 = arith.mulf %317, %318 : vector<16x128xf32>
    %320 = arith.mulf %314, %319 : vector<16x128xf32>
    %321 = arith.addf %313, %320 : vector<16x128xf32>
    %c10_i32 = arith.constant 10 : i32
    %322 = tpu.dynamic_rotate %191 by %c10_i32 dim 1 : vector<16x128xf32>, i32 -> vector<16x128xf32>
    %323 = vector.extract_strided_slice %192 {offsets = [15, 0], sizes = [1, 128], strides = [1, 1]} : vector<49x128xf32> to vector<1x128xf32>
    %324 = vector.extract_strided_slice %199 {offsets = [0, 15], sizes = [16, 1], strides = [1, 1]} : vector<16x49xf32> to vector<16x1xf32>
    %325 = vector.broadcast %323 : vector<1x128xf32> to vector<16x128xf32>
    %326 = vector.broadcast %324 : vector<16x1xf32> to vector<16x128xf32>
    %327 = arith.mulf %325, %326 : vector<16x128xf32>
    %328 = arith.mulf %322, %327 : vector<16x128xf32>
    %329 = arith.addf %321, %328 : vector<16x128xf32>
    %c9_i32_45 = arith.constant 9 : i32
    %330 = tpu.dynamic_rotate %191 by %c9_i32_45 dim 1 : vector<16x128xf32>, i32 -> vector<16x128xf32>
    %331 = vector.extract_strided_slice %192 {offsets = [16, 0], sizes = [1, 128], strides = [1, 1]} : vector<49x128xf32> to vector<1x128xf32>
    %332 = vector.extract_strided_slice %199 {offsets = [0, 16], sizes = [16, 1], strides = [1, 1]} : vector<16x49xf32> to vector<16x1xf32>
    %333 = vector.broadcast %331 : vector<1x128xf32> to vector<16x128xf32>
    %334 = vector.broadcast %332 : vector<16x1xf32> to vector<16x128xf32>
    %335 = arith.mulf %333, %334 : vector<16x128xf32>
    %336 = arith.mulf %330, %335 : vector<16x128xf32>
    %337 = arith.addf %329, %336 : vector<16x128xf32>
    %c8_i32_46 = arith.constant 8 : i32
    %338 = tpu.dynamic_rotate %191 by %c8_i32_46 dim 1 : vector<16x128xf32>, i32 -> vector<16x128xf32>
    %339 = vector.extract_strided_slice %192 {offsets = [17, 0], sizes = [1, 128], strides = [1, 1]} : vector<49x128xf32> to vector<1x128xf32>
    %340 = vector.extract_strided_slice %199 {offsets = [0, 17], sizes = [16, 1], strides = [1, 1]} : vector<16x49xf32> to vector<16x1xf32>
    %341 = vector.broadcast %339 : vector<1x128xf32> to vector<16x128xf32>
    %342 = vector.broadcast %340 : vector<16x1xf32> to vector<16x128xf32>
    %343 = arith.mulf %341, %342 : vector<16x128xf32>
    %344 = arith.mulf %338, %343 : vector<16x128xf32>
    %345 = arith.addf %337, %344 : vector<16x128xf32>
    %c7_i32_47 = arith.constant 7 : i32
    %346 = tpu.dynamic_rotate %191 by %c7_i32_47 dim 1 : vector<16x128xf32>, i32 -> vector<16x128xf32>
    %347 = vector.extract_strided_slice %192 {offsets = [18, 0], sizes = [1, 128], strides = [1, 1]} : vector<49x128xf32> to vector<1x128xf32>
    %348 = vector.extract_strided_slice %199 {offsets = [0, 18], sizes = [16, 1], strides = [1, 1]} : vector<16x49xf32> to vector<16x1xf32>
    %349 = vector.broadcast %347 : vector<1x128xf32> to vector<16x128xf32>
    %350 = vector.broadcast %348 : vector<16x1xf32> to vector<16x128xf32>
    %351 = arith.mulf %349, %350 : vector<16x128xf32>
    %352 = arith.mulf %346, %351 : vector<16x128xf32>
    %353 = arith.addf %345, %352 : vector<16x128xf32>
    %c6_i32 = arith.constant 6 : i32
    %354 = tpu.dynamic_rotate %191 by %c6_i32 dim 1 : vector<16x128xf32>, i32 -> vector<16x128xf32>
    %355 = vector.extract_strided_slice %192 {offsets = [19, 0], sizes = [1, 128], strides = [1, 1]} : vector<49x128xf32> to vector<1x128xf32>
    %356 = vector.extract_strided_slice %199 {offsets = [0, 19], sizes = [16, 1], strides = [1, 1]} : vector<16x49xf32> to vector<16x1xf32>
    %357 = vector.broadcast %355 : vector<1x128xf32> to vector<16x128xf32>
    %358 = vector.broadcast %356 : vector<16x1xf32> to vector<16x128xf32>
    %359 = arith.mulf %357, %358 : vector<16x128xf32>
    %360 = arith.mulf %354, %359 : vector<16x128xf32>
    %361 = arith.addf %353, %360 : vector<16x128xf32>
    %c5_i32 = arith.constant 5 : i32
    %362 = tpu.dynamic_rotate %191 by %c5_i32 dim 1 : vector<16x128xf32>, i32 -> vector<16x128xf32>
    %363 = vector.extract_strided_slice %192 {offsets = [20, 0], sizes = [1, 128], strides = [1, 1]} : vector<49x128xf32> to vector<1x128xf32>
    %364 = vector.extract_strided_slice %199 {offsets = [0, 20], sizes = [16, 1], strides = [1, 1]} : vector<16x49xf32> to vector<16x1xf32>
    %365 = vector.broadcast %363 : vector<1x128xf32> to vector<16x128xf32>
    %366 = vector.broadcast %364 : vector<16x1xf32> to vector<16x128xf32>
    %367 = arith.mulf %365, %366 : vector<16x128xf32>
    %368 = arith.mulf %362, %367 : vector<16x128xf32>
    %369 = arith.addf %361, %368 : vector<16x128xf32>
    %c3_i32 = arith.constant 3 : i32
    %370 = tpu.dynamic_rotate %191 by %c3_i32 dim 1 : vector<16x128xf32>, i32 -> vector<16x128xf32>
    %371 = vector.extract_strided_slice %192 {offsets = [21, 0], sizes = [1, 128], strides = [1, 1]} : vector<49x128xf32> to vector<1x128xf32>
    %372 = vector.extract_strided_slice %199 {offsets = [0, 21], sizes = [16, 1], strides = [1, 1]} : vector<16x49xf32> to vector<16x1xf32>
    %373 = vector.broadcast %371 : vector<1x128xf32> to vector<16x128xf32>
    %374 = vector.broadcast %372 : vector<16x1xf32> to vector<16x128xf32>
    %375 = arith.mulf %373, %374 : vector<16x128xf32>
    %376 = arith.mulf %370, %375 : vector<16x128xf32>
    %377 = arith.addf %369, %376 : vector<16x128xf32>
    %c2_i32 = arith.constant 2 : i32
    %378 = tpu.dynamic_rotate %191 by %c2_i32 dim 1 : vector<16x128xf32>, i32 -> vector<16x128xf32>
    %379 = vector.extract_strided_slice %192 {offsets = [22, 0], sizes = [1, 128], strides = [1, 1]} : vector<49x128xf32> to vector<1x128xf32>
    %380 = vector.extract_strided_slice %199 {offsets = [0, 22], sizes = [16, 1], strides = [1, 1]} : vector<16x49xf32> to vector<16x1xf32>
    %381 = vector.broadcast %379 : vector<1x128xf32> to vector<16x128xf32>
    %382 = vector.broadcast %380 : vector<16x1xf32> to vector<16x128xf32>
    %383 = arith.mulf %381, %382 : vector<16x128xf32>
    %384 = arith.mulf %378, %383 : vector<16x128xf32>
    %385 = arith.addf %377, %384 : vector<16x128xf32>
    %c1_i32_48 = arith.constant 1 : i32
    %386 = tpu.dynamic_rotate %191 by %c1_i32_48 dim 1 : vector<16x128xf32>, i32 -> vector<16x128xf32>
    %387 = vector.extract_strided_slice %192 {offsets = [23, 0], sizes = [1, 128], strides = [1, 1]} : vector<49x128xf32> to vector<1x128xf32>
    %388 = vector.extract_strided_slice %199 {offsets = [0, 23], sizes = [16, 1], strides = [1, 1]} : vector<16x49xf32> to vector<16x1xf32>
    %389 = vector.broadcast %387 : vector<1x128xf32> to vector<16x128xf32>
    %390 = vector.broadcast %388 : vector<16x1xf32> to vector<16x128xf32>
    %391 = arith.mulf %389, %390 : vector<16x128xf32>
    %392 = arith.mulf %386, %391 : vector<16x128xf32>
    %393 = arith.addf %385, %392 : vector<16x128xf32>
    %394 = vector.extract_strided_slice %192 {offsets = [24, 0], sizes = [1, 128], strides = [1, 1]} : vector<49x128xf32> to vector<1x128xf32>
    %395 = vector.extract_strided_slice %199 {offsets = [0, 24], sizes = [16, 1], strides = [1, 1]} : vector<16x49xf32> to vector<16x1xf32>
    %396 = vector.broadcast %394 : vector<1x128xf32> to vector<16x128xf32>
    %397 = vector.broadcast %395 : vector<16x1xf32> to vector<16x128xf32>
    %398 = arith.mulf %396, %397 : vector<16x128xf32>
    %399 = arith.mulf %191, %398 : vector<16x128xf32>
    %400 = arith.addf %393, %399 : vector<16x128xf32>
    %c127_i32_49 = arith.constant 127 : i32
    %401 = tpu.dynamic_rotate %191 by %c127_i32_49 dim 1 : vector<16x128xf32>, i32 -> vector<16x128xf32>
    %402 = vector.extract_strided_slice %192 {offsets = [25, 0], sizes = [1, 128], strides = [1, 1]} : vector<49x128xf32> to vector<1x128xf32>
    %403 = vector.extract_strided_slice %199 {offsets = [0, 25], sizes = [16, 1], strides = [1, 1]} : vector<16x49xf32> to vector<16x1xf32>
    %404 = vector.broadcast %402 : vector<1x128xf32> to vector<16x128xf32>
    %405 = vector.broadcast %403 : vector<16x1xf32> to vector<16x128xf32>
    %406 = arith.mulf %404, %405 : vector<16x128xf32>
    %407 = arith.mulf %401, %406 : vector<16x128xf32>
    %408 = arith.addf %400, %407 : vector<16x128xf32>
    %c126_i32 = arith.constant 126 : i32
    %409 = tpu.dynamic_rotate %191 by %c126_i32 dim 1 : vector<16x128xf32>, i32 -> vector<16x128xf32>
    %410 = vector.extract_strided_slice %192 {offsets = [26, 0], sizes = [1, 128], strides = [1, 1]} : vector<49x128xf32> to vector<1x128xf32>
    %411 = vector.extract_strided_slice %199 {offsets = [0, 26], sizes = [16, 1], strides = [1, 1]} : vector<16x49xf32> to vector<16x1xf32>
    %412 = vector.broadcast %410 : vector<1x128xf32> to vector<16x128xf32>
    %413 = vector.broadcast %411 : vector<16x1xf32> to vector<16x128xf32>
    %414 = arith.mulf %412, %413 : vector<16x128xf32>
    %415 = arith.mulf %409, %414 : vector<16x128xf32>
    %416 = arith.addf %408, %415 : vector<16x128xf32>
    %c125_i32 = arith.constant 125 : i32
    %417 = tpu.dynamic_rotate %191 by %c125_i32 dim 1 : vector<16x128xf32>, i32 -> vector<16x128xf32>
    %418 = vector.extract_strided_slice %192 {offsets = [27, 0], sizes = [1, 128], strides = [1, 1]} : vector<49x128xf32> to vector<1x128xf32>
    %419 = vector.extract_strided_slice %199 {offsets = [0, 27], sizes = [16, 1], strides = [1, 1]} : vector<16x49xf32> to vector<16x1xf32>
    %420 = vector.broadcast %418 : vector<1x128xf32> to vector<16x128xf32>
    %421 = vector.broadcast %419 : vector<16x1xf32> to vector<16x128xf32>
    %422 = arith.mulf %420, %421 : vector<16x128xf32>
    %423 = arith.mulf %417, %422 : vector<16x128xf32>
    %424 = arith.addf %416, %423 : vector<16x128xf32>
    %c123_i32 = arith.constant 123 : i32
    %425 = tpu.dynamic_rotate %191 by %c123_i32 dim 1 : vector<16x128xf32>, i32 -> vector<16x128xf32>
    %426 = vector.extract_strided_slice %192 {offsets = [28, 0], sizes = [1, 128], strides = [1, 1]} : vector<49x128xf32> to vector<1x128xf32>
    %427 = vector.extract_strided_slice %199 {offsets = [0, 28], sizes = [16, 1], strides = [1, 1]} : vector<16x49xf32> to vector<16x1xf32>
    %428 = vector.broadcast %426 : vector<1x128xf32> to vector<16x128xf32>
    %429 = vector.broadcast %427 : vector<16x1xf32> to vector<16x128xf32>
    %430 = arith.mulf %428, %429 : vector<16x128xf32>
    %431 = arith.mulf %425, %430 : vector<16x128xf32>
    %432 = arith.addf %424, %431 : vector<16x128xf32>
    %c122_i32 = arith.constant 122 : i32
    %433 = tpu.dynamic_rotate %191 by %c122_i32 dim 1 : vector<16x128xf32>, i32 -> vector<16x128xf32>
    %434 = vector.extract_strided_slice %192 {offsets = [29, 0], sizes = [1, 128], strides = [1, 1]} : vector<49x128xf32> to vector<1x128xf32>
    %435 = vector.extract_strided_slice %199 {offsets = [0, 29], sizes = [16, 1], strides = [1, 1]} : vector<16x49xf32> to vector<16x1xf32>
    %436 = vector.broadcast %434 : vector<1x128xf32> to vector<16x128xf32>
    %437 = vector.broadcast %435 : vector<16x1xf32> to vector<16x128xf32>
    %438 = arith.mulf %436, %437 : vector<16x128xf32>
    %439 = arith.mulf %433, %438 : vector<16x128xf32>
    %440 = arith.addf %432, %439 : vector<16x128xf32>
    %c121_i32_50 = arith.constant 121 : i32
    %441 = tpu.dynamic_rotate %191 by %c121_i32_50 dim 1 : vector<16x128xf32>, i32 -> vector<16x128xf32>
    %442 = vector.extract_strided_slice %192 {offsets = [30, 0], sizes = [1, 128], strides = [1, 1]} : vector<49x128xf32> to vector<1x128xf32>
    %443 = vector.extract_strided_slice %199 {offsets = [0, 30], sizes = [16, 1], strides = [1, 1]} : vector<16x49xf32> to vector<16x1xf32>
    %444 = vector.broadcast %442 : vector<1x128xf32> to vector<16x128xf32>
    %445 = vector.broadcast %443 : vector<16x1xf32> to vector<16x128xf32>
    %446 = arith.mulf %444, %445 : vector<16x128xf32>
    %447 = arith.mulf %441, %446 : vector<16x128xf32>
    %448 = arith.addf %440, %447 : vector<16x128xf32>
    %c120_i32_51 = arith.constant 120 : i32
    %449 = tpu.dynamic_rotate %191 by %c120_i32_51 dim 1 : vector<16x128xf32>, i32 -> vector<16x128xf32>
    %450 = vector.extract_strided_slice %192 {offsets = [31, 0], sizes = [1, 128], strides = [1, 1]} : vector<49x128xf32> to vector<1x128xf32>
    %451 = vector.extract_strided_slice %199 {offsets = [0, 31], sizes = [16, 1], strides = [1, 1]} : vector<16x49xf32> to vector<16x1xf32>
    %452 = vector.broadcast %450 : vector<1x128xf32> to vector<16x128xf32>
    %453 = vector.broadcast %451 : vector<16x1xf32> to vector<16x128xf32>
    %454 = arith.mulf %452, %453 : vector<16x128xf32>
    %455 = arith.mulf %449, %454 : vector<16x128xf32>
    %456 = arith.addf %448, %455 : vector<16x128xf32>
    %c119_i32_52 = arith.constant 119 : i32
    %457 = tpu.dynamic_rotate %191 by %c119_i32_52 dim 1 : vector<16x128xf32>, i32 -> vector<16x128xf32>
    %458 = vector.extract_strided_slice %192 {offsets = [32, 0], sizes = [1, 128], strides = [1, 1]} : vector<49x128xf32> to vector<1x128xf32>
    %459 = vector.extract_strided_slice %199 {offsets = [0, 32], sizes = [16, 1], strides = [1, 1]} : vector<16x49xf32> to vector<16x1xf32>
    %460 = vector.broadcast %458 : vector<1x128xf32> to vector<16x128xf32>
    %461 = vector.broadcast %459 : vector<16x1xf32> to vector<16x128xf32>
    %462 = arith.mulf %460, %461 : vector<16x128xf32>
    %463 = arith.mulf %457, %462 : vector<16x128xf32>
    %464 = arith.addf %456, %463 : vector<16x128xf32>
    %c118_i32 = arith.constant 118 : i32
    %465 = tpu.dynamic_rotate %191 by %c118_i32 dim 1 : vector<16x128xf32>, i32 -> vector<16x128xf32>
    %466 = vector.extract_strided_slice %192 {offsets = [33, 0], sizes = [1, 128], strides = [1, 1]} : vector<49x128xf32> to vector<1x128xf32>
    %467 = vector.extract_strided_slice %199 {offsets = [0, 33], sizes = [16, 1], strides = [1, 1]} : vector<16x49xf32> to vector<16x1xf32>
    %468 = vector.broadcast %466 : vector<1x128xf32> to vector<16x128xf32>
    %469 = vector.broadcast %467 : vector<16x1xf32> to vector<16x128xf32>
    %470 = arith.mulf %468, %469 : vector<16x128xf32>
    %471 = arith.mulf %465, %470 : vector<16x128xf32>
    %472 = arith.addf %464, %471 : vector<16x128xf32>
    %c117_i32 = arith.constant 117 : i32
    %473 = tpu.dynamic_rotate %191 by %c117_i32 dim 1 : vector<16x128xf32>, i32 -> vector<16x128xf32>
    %474 = vector.extract_strided_slice %192 {offsets = [34, 0], sizes = [1, 128], strides = [1, 1]} : vector<49x128xf32> to vector<1x128xf32>
    %475 = vector.extract_strided_slice %199 {offsets = [0, 34], sizes = [16, 1], strides = [1, 1]} : vector<16x49xf32> to vector<16x1xf32>
    %476 = vector.broadcast %474 : vector<1x128xf32> to vector<16x128xf32>
    %477 = vector.broadcast %475 : vector<16x1xf32> to vector<16x128xf32>
    %478 = arith.mulf %476, %477 : vector<16x128xf32>
    %479 = arith.mulf %473, %478 : vector<16x128xf32>
    %480 = arith.addf %472, %479 : vector<16x128xf32>
    %c115_i32 = arith.constant 115 : i32
    %481 = tpu.dynamic_rotate %191 by %c115_i32 dim 1 : vector<16x128xf32>, i32 -> vector<16x128xf32>
    %482 = vector.extract_strided_slice %192 {offsets = [35, 0], sizes = [1, 128], strides = [1, 1]} : vector<49x128xf32> to vector<1x128xf32>
    %483 = vector.extract_strided_slice %199 {offsets = [0, 35], sizes = [16, 1], strides = [1, 1]} : vector<16x49xf32> to vector<16x1xf32>
    %484 = vector.broadcast %482 : vector<1x128xf32> to vector<16x128xf32>
    %485 = vector.broadcast %483 : vector<16x1xf32> to vector<16x128xf32>
    %486 = arith.mulf %484, %485 : vector<16x128xf32>
    %487 = arith.mulf %481, %486 : vector<16x128xf32>
    %488 = arith.addf %480, %487 : vector<16x128xf32>
    %c114_i32 = arith.constant 114 : i32
    %489 = tpu.dynamic_rotate %191 by %c114_i32 dim 1 : vector<16x128xf32>, i32 -> vector<16x128xf32>
    %490 = vector.extract_strided_slice %192 {offsets = [36, 0], sizes = [1, 128], strides = [1, 1]} : vector<49x128xf32> to vector<1x128xf32>
    %491 = vector.extract_strided_slice %199 {offsets = [0, 36], sizes = [16, 1], strides = [1, 1]} : vector<16x49xf32> to vector<16x1xf32>
    %492 = vector.broadcast %490 : vector<1x128xf32> to vector<16x128xf32>
    %493 = vector.broadcast %491 : vector<16x1xf32> to vector<16x128xf32>
    %494 = arith.mulf %492, %493 : vector<16x128xf32>
    %495 = arith.mulf %489, %494 : vector<16x128xf32>
    %496 = arith.addf %488, %495 : vector<16x128xf32>
    %c113_i32 = arith.constant 113 : i32
    %497 = tpu.dynamic_rotate %191 by %c113_i32 dim 1 : vector<16x128xf32>, i32 -> vector<16x128xf32>
    %498 = vector.extract_strided_slice %192 {offsets = [37, 0], sizes = [1, 128], strides = [1, 1]} : vector<49x128xf32> to vector<1x128xf32>
    %499 = vector.extract_strided_slice %199 {offsets = [0, 37], sizes = [16, 1], strides = [1, 1]} : vector<16x49xf32> to vector<16x1xf32>
    %500 = vector.broadcast %498 : vector<1x128xf32> to vector<16x128xf32>
    %501 = vector.broadcast %499 : vector<16x1xf32> to vector<16x128xf32>
    %502 = arith.mulf %500, %501 : vector<16x128xf32>
    %503 = arith.mulf %497, %502 : vector<16x128xf32>
    %504 = arith.addf %496, %503 : vector<16x128xf32>
    %c112_i32 = arith.constant 112 : i32
    %505 = tpu.dynamic_rotate %191 by %c112_i32 dim 1 : vector<16x128xf32>, i32 -> vector<16x128xf32>
    %506 = vector.extract_strided_slice %192 {offsets = [38, 0], sizes = [1, 128], strides = [1, 1]} : vector<49x128xf32> to vector<1x128xf32>
    %507 = vector.extract_strided_slice %199 {offsets = [0, 38], sizes = [16, 1], strides = [1, 1]} : vector<16x49xf32> to vector<16x1xf32>
    %508 = vector.broadcast %506 : vector<1x128xf32> to vector<16x128xf32>
    %509 = vector.broadcast %507 : vector<16x1xf32> to vector<16x128xf32>
    %510 = arith.mulf %508, %509 : vector<16x128xf32>
    %511 = arith.mulf %505, %510 : vector<16x128xf32>
    %512 = arith.addf %504, %511 : vector<16x128xf32>
    %c111_i32 = arith.constant 111 : i32
    %513 = tpu.dynamic_rotate %191 by %c111_i32 dim 1 : vector<16x128xf32>, i32 -> vector<16x128xf32>
    %514 = vector.extract_strided_slice %192 {offsets = [39, 0], sizes = [1, 128], strides = [1, 1]} : vector<49x128xf32> to vector<1x128xf32>
    %515 = vector.extract_strided_slice %199 {offsets = [0, 39], sizes = [16, 1], strides = [1, 1]} : vector<16x49xf32> to vector<16x1xf32>
    %516 = vector.broadcast %514 : vector<1x128xf32> to vector<16x128xf32>
    %517 = vector.broadcast %515 : vector<16x1xf32> to vector<16x128xf32>
    %518 = arith.mulf %516, %517 : vector<16x128xf32>
    %519 = arith.mulf %513, %518 : vector<16x128xf32>
    %520 = arith.addf %512, %519 : vector<16x128xf32>
    %c110_i32 = arith.constant 110 : i32
    %521 = tpu.dynamic_rotate %191 by %c110_i32 dim 1 : vector<16x128xf32>, i32 -> vector<16x128xf32>
    %522 = vector.extract_strided_slice %192 {offsets = [40, 0], sizes = [1, 128], strides = [1, 1]} : vector<49x128xf32> to vector<1x128xf32>
    %523 = vector.extract_strided_slice %199 {offsets = [0, 40], sizes = [16, 1], strides = [1, 1]} : vector<16x49xf32> to vector<16x1xf32>
    %524 = vector.broadcast %522 : vector<1x128xf32> to vector<16x128xf32>
    %525 = vector.broadcast %523 : vector<16x1xf32> to vector<16x128xf32>
    %526 = arith.mulf %524, %525 : vector<16x128xf32>
    %527 = arith.mulf %521, %526 : vector<16x128xf32>
    %528 = arith.addf %520, %527 : vector<16x128xf32>
    %c109_i32 = arith.constant 109 : i32
    %529 = tpu.dynamic_rotate %191 by %c109_i32 dim 1 : vector<16x128xf32>, i32 -> vector<16x128xf32>
    %530 = vector.extract_strided_slice %192 {offsets = [41, 0], sizes = [1, 128], strides = [1, 1]} : vector<49x128xf32> to vector<1x128xf32>
    %531 = vector.extract_strided_slice %199 {offsets = [0, 41], sizes = [16, 1], strides = [1, 1]} : vector<16x49xf32> to vector<16x1xf32>
    %532 = vector.broadcast %530 : vector<1x128xf32> to vector<16x128xf32>
    %533 = vector.broadcast %531 : vector<16x1xf32> to vector<16x128xf32>
    %534 = arith.mulf %532, %533 : vector<16x128xf32>
    %535 = arith.mulf %529, %534 : vector<16x128xf32>
    %536 = arith.addf %528, %535 : vector<16x128xf32>
    %c107_i32 = arith.constant 107 : i32
    %537 = tpu.dynamic_rotate %191 by %c107_i32 dim 1 : vector<16x128xf32>, i32 -> vector<16x128xf32>
    %538 = vector.extract_strided_slice %192 {offsets = [42, 0], sizes = [1, 128], strides = [1, 1]} : vector<49x128xf32> to vector<1x128xf32>
    %539 = vector.extract_strided_slice %199 {offsets = [0, 42], sizes = [16, 1], strides = [1, 1]} : vector<16x49xf32> to vector<16x1xf32>
    %540 = vector.broadcast %538 : vector<1x128xf32> to vector<16x128xf32>
    %541 = vector.broadcast %539 : vector<16x1xf32> to vector<16x128xf32>
    %542 = arith.mulf %540, %541 : vector<16x128xf32>
    %543 = arith.mulf %537, %542 : vector<16x128xf32>
    %544 = arith.addf %536, %543 : vector<16x128xf32>
    %c106_i32 = arith.constant 106 : i32
    %545 = tpu.dynamic_rotate %191 by %c106_i32 dim 1 : vector<16x128xf32>, i32 -> vector<16x128xf32>
    %546 = vector.extract_strided_slice %192 {offsets = [43, 0], sizes = [1, 128], strides = [1, 1]} : vector<49x128xf32> to vector<1x128xf32>
    %547 = vector.extract_strided_slice %199 {offsets = [0, 43], sizes = [16, 1], strides = [1, 1]} : vector<16x49xf32> to vector<16x1xf32>
    %548 = vector.broadcast %546 : vector<1x128xf32> to vector<16x128xf32>
    %549 = vector.broadcast %547 : vector<16x1xf32> to vector<16x128xf32>
    %550 = arith.mulf %548, %549 : vector<16x128xf32>
    %551 = arith.mulf %545, %550 : vector<16x128xf32>
    %552 = arith.addf %544, %551 : vector<16x128xf32>
    %c105_i32 = arith.constant 105 : i32
    %553 = tpu.dynamic_rotate %191 by %c105_i32 dim 1 : vector<16x128xf32>, i32 -> vector<16x128xf32>
    %554 = vector.extract_strided_slice %192 {offsets = [44, 0], sizes = [1, 128], strides = [1, 1]} : vector<49x128xf32> to vector<1x128xf32>
    %555 = vector.extract_strided_slice %199 {offsets = [0, 44], sizes = [16, 1], strides = [1, 1]} : vector<16x49xf32> to vector<16x1xf32>
    %556 = vector.broadcast %554 : vector<1x128xf32> to vector<16x128xf32>
    %557 = vector.broadcast %555 : vector<16x1xf32> to vector<16x128xf32>
    %558 = arith.mulf %556, %557 : vector<16x128xf32>
    %559 = arith.mulf %553, %558 : vector<16x128xf32>
    %560 = arith.addf %552, %559 : vector<16x128xf32>
    %c104_i32 = arith.constant 104 : i32
    %561 = tpu.dynamic_rotate %191 by %c104_i32 dim 1 : vector<16x128xf32>, i32 -> vector<16x128xf32>
    %562 = vector.extract_strided_slice %192 {offsets = [45, 0], sizes = [1, 128], strides = [1, 1]} : vector<49x128xf32> to vector<1x128xf32>
    %563 = vector.extract_strided_slice %199 {offsets = [0, 45], sizes = [16, 1], strides = [1, 1]} : vector<16x49xf32> to vector<16x1xf32>
    %564 = vector.broadcast %562 : vector<1x128xf32> to vector<16x128xf32>
    %565 = vector.broadcast %563 : vector<16x1xf32> to vector<16x128xf32>
    %566 = arith.mulf %564, %565 : vector<16x128xf32>
    %567 = arith.mulf %561, %566 : vector<16x128xf32>
    %568 = arith.addf %560, %567 : vector<16x128xf32>
    %c103_i32 = arith.constant 103 : i32
    %569 = tpu.dynamic_rotate %191 by %c103_i32 dim 1 : vector<16x128xf32>, i32 -> vector<16x128xf32>
    %570 = vector.extract_strided_slice %192 {offsets = [46, 0], sizes = [1, 128], strides = [1, 1]} : vector<49x128xf32> to vector<1x128xf32>
    %571 = vector.extract_strided_slice %199 {offsets = [0, 46], sizes = [16, 1], strides = [1, 1]} : vector<16x49xf32> to vector<16x1xf32>
    %572 = vector.broadcast %570 : vector<1x128xf32> to vector<16x128xf32>
    %573 = vector.broadcast %571 : vector<16x1xf32> to vector<16x128xf32>
    %574 = arith.mulf %572, %573 : vector<16x128xf32>
    %575 = arith.mulf %569, %574 : vector<16x128xf32>
    %576 = arith.addf %568, %575 : vector<16x128xf32>
    %c102_i32 = arith.constant 102 : i32
    %577 = tpu.dynamic_rotate %191 by %c102_i32 dim 1 : vector<16x128xf32>, i32 -> vector<16x128xf32>
    %578 = vector.extract_strided_slice %192 {offsets = [47, 0], sizes = [1, 128], strides = [1, 1]} : vector<49x128xf32> to vector<1x128xf32>
    %579 = vector.extract_strided_slice %199 {offsets = [0, 47], sizes = [16, 1], strides = [1, 1]} : vector<16x49xf32> to vector<16x1xf32>
    %580 = vector.broadcast %578 : vector<1x128xf32> to vector<16x128xf32>
    %581 = vector.broadcast %579 : vector<16x1xf32> to vector<16x128xf32>
    %582 = arith.mulf %580, %581 : vector<16x128xf32>
    %583 = arith.mulf %577, %582 : vector<16x128xf32>
    %584 = arith.addf %576, %583 : vector<16x128xf32>
    %c101_i32 = arith.constant 101 : i32
    %585 = tpu.dynamic_rotate %191 by %c101_i32 dim 1 : vector<16x128xf32>, i32 -> vector<16x128xf32>
    %586 = vector.extract_strided_slice %192 {offsets = [48, 0], sizes = [1, 128], strides = [1, 1]} : vector<49x128xf32> to vector<1x128xf32>
    %587 = vector.extract_strided_slice %199 {offsets = [0, 48], sizes = [16, 1], strides = [1, 1]} : vector<16x49xf32> to vector<16x1xf32>
    %588 = vector.broadcast %586 : vector<1x128xf32> to vector<16x128xf32>
    %589 = vector.broadcast %587 : vector<16x1xf32> to vector<16x128xf32>
    %590 = arith.mulf %588, %589 : vector<16x128xf32>
    %591 = arith.mulf %585, %590 : vector<16x128xf32>
    %592 = arith.addf %584, %591 : vector<16x128xf32>
    %593 = vector.broadcast %200 : vector<16x1xf32> to vector<16x128xf32>
    %594 = arith.addf %592, %593 : vector<16x128xf32>
    %c80 = arith.constant 80 : index
    %c0_53 = arith.constant 0 : index
    %595 = vector.load %arg1[%c80, %c0_53] : memref<160x128xbf16, #tpu.memory_space<vmem>>, vector<32x16xbf16>
    %596 = arith.truncf %594 : vector<16x128xf32> to vector<16x128xbf16>
    %cst_54 = arith.constant dense<0.000000e+00> : vector<32x128xf32>
    %597 = tpu.matmul %595, %596, %cst_54 {dimension_numbers = #tpu.dot_dimension_numbers<[1], [0], [0], [1], [0, 0, 1, 1], [], []>} : vector<32x16xbf16>, vector<16x128xbf16>, vector<32x128xf32> -> vector<32x128xf32>
    %cst_55 = arith.constant 0.000000e+00 : f32
    %598 = vector.broadcast %cst_55 : f32 to vector<32x128xf32>
    %599 = arith.maximumf %597, %598 : vector<32x128xf32>
    %c112 = arith.constant 112 : index
    %c0_56 = arith.constant 0 : index
    %600 = vector.load %arg1[%c112, %c0_56] : memref<160x128xbf16, #tpu.memory_space<vmem>>, vector<8x32xbf16>
    %c256 = arith.constant 256 : index
    %c0_57 = arith.constant 0 : index
    %601 = vector.load %arg2[%c256, %c0_57] : memref<408x128xf32, #tpu.memory_space<vmem>>, vector<8x1xf32>
    %602 = arith.truncf %599 : vector<32x128xf32> to vector<32x128xbf16>
    %cst_58 = arith.constant dense<0.000000e+00> : vector<8x128xf32>
    %603 = tpu.matmul %600, %602, %cst_58 {dimension_numbers = #tpu.dot_dimension_numbers<[1], [0], [0], [1], [0, 0, 1, 1], [], []>} : vector<8x32xbf16>, vector<32x128xbf16>, vector<8x128xf32> -> vector<8x128xf32>
    %604 = vector.broadcast %601 : vector<8x1xf32> to vector<8x128xf32>
    %605 = arith.addf %603, %604 : vector<8x128xf32>
    %606 = arith.addf %605, %198 : vector<8x128xf32>
    %c272 = arith.constant 272 : index
    %c0_59 = arith.constant 0 : index
    %607 = vector.load %arg2[%c272, %c0_59] : memref<408x128xf32, #tpu.memory_space<vmem>>, vector<128x2xf32>
    %cst_60 = arith.constant dense<0.000000e+00> : vector<8x2xf32>
    %608 = tpu.matmul %606, %607, %cst_60 {dimension_numbers = #tpu.dot_dimension_numbers<[1], [0], [0], [1], [0, 0, 1, 1], [], []>} : vector<8x128xf32>, vector<128x2xf32>, vector<8x2xf32> -> vector<8x2xf32>
    %c144 = arith.constant 144 : index
    %c0_61 = arith.constant 0 : index
    %609 = vector.load %arg1[%c144, %c0_61] : memref<160x128xbf16, #tpu.memory_space<vmem>>, vector<2x8xbf16>
    %c400 = arith.constant 400 : index
    %c0_62 = arith.constant 0 : index
    %610 = vector.load %arg2[%c400, %c0_62] : memref<408x128xf32, #tpu.memory_space<vmem>>, vector<2x1xf32>
    %611 = arith.truncf %608 : vector<8x2xf32> to vector<8x2xbf16>
    %cst_63 = arith.constant dense<0.000000e+00> : vector<2x2xf32>
    %612 = tpu.matmul %609, %611, %cst_63 {dimension_numbers = #tpu.dot_dimension_numbers<[1], [0], [0], [1], [0, 0, 1, 1], [], []>} : vector<2x8xbf16>, vector<8x2xbf16>, vector<2x2xf32> -> vector<2x2xf32>
    %613 = vector.broadcast %610 : vector<2x1xf32> to vector<2x2xf32>
    %614 = arith.addf %612, %613 : vector<2x2xf32>
    %c0_64 = arith.constant 0 : index
    %c0_65 = arith.constant 0 : index
    %615 = vector.load %arg3[%c0_64, %c0_65] : memref<2x2xf32, #tpu.memory_space<vmem>>, vector<2x2xf32>
    tpu.vector_store %arg3[%c0_64, %c0_65], %614 {strides = array<i32>} : memref<2x2xf32, #tpu.memory_space<vmem>>, vector<2x2xf32>,
    return
  }
}

</mosaic_0001>

<llo_original>
// kernel: tpu_custom_call.1
$region0: #{tpu_custom_call.1}
  #allocation0 [shape = 'u32[]', space=smem, size = 0x4, offset = 0x4, fixed_abs, tag = 'smem constant byte address 0x4 - core index']
  #allocation1 [shape = 'u32[144,128]{1,0:T(1,128)}', space=vmem, size = 0x12000, scoped, tag = 'internal scratch']
  %s0 = inlined_call_operand.hbm [shape: f32[8,128], index: 0, kind: input, shape index: {}]
  %s1 = inlined_call_operand.hbm [shape: f32[8,128], index: 1, kind: output, shape index: {}]
  %s2 = sld [smem:[#allocation0]]
  $region18: #{tpu_custom_call.1} parent=0
    _
  %s4 = ssub.s32 1, %s2
  %s5 = scalar_select 0, %s4, %s2
  $region1: #{tpu_custom_call.1} parent=0
    #allocation2 [shape = 'u8[4096]{0}', space=vmem, size = 0x1000, scoped, tag = 'input window, operand 0, single buffered']
    #allocation3 [shape = 's32[1]{0}', space=sflag, size = 0x4, scoped, tag = 'scoped memory for tpu_custom_call.1']
    #allocation4 [shape = 's32[1]{0}', space=sflag, size = 0x4, scoped, tag = 'scoped memory for tpu_custom_call.1']
    #allocation5 [shape = 'u8[4096]{0}', space=vmem, size = 0x1000, scoped, tag = 'output window, operand 0, single buffered']
    %6 = vsyncpa [#allocation3], 0
    %7 = vsyncpa [#allocation4], 0
    // Predicated region
    $region2: #{tpu_custom_call.1} parent=1 // pred_check
      _
    $region3: #{tpu_custom_call.1} parent=1 // pred_check_branch
      %9 = sbr.rel (0) target = $region5
    $region4: #{tpu_custom_call.1} parent=1 // pred_region
      %s11 = ssub.s32 128, 128
      %12 = vsyncadd [#allocation3], %s11
      %s14 = sshll.u32 [#allocation2], 4
      %s15 = int_to_ptr.vmem [resolvable:$true] %s14
      %17 = dma.hbm_to_vmem [thread:$0]  %s0, 128, %s15, [#allocation3]
    $region5: #{tpu_custom_call.1} parent=1 // pred_fallthru
      _
    // Predicated region
    $region6: #{tpu_custom_call.1} parent=1 // pred_check
      _
    $region7: #{tpu_custom_call.1} parent=1 // pred_check_branch
      %19 = sbr.rel (0) target = $region9
    $region8: #{tpu_custom_call.1} parent=1 // pred_region
      %20 = dma.done [#allocation3], 128
    $region9: #{tpu_custom_call.1} parent=1 // pred_fallthru
      _
    %v21 = vld [vmem:[#allocation2] sm:$0xff]
    %22 = vrot.lane.b32.xlu0 %v21, 1
    %v23 = vpop.permute.xlu0 %22
    %24 = vst [vmem:[#allocation5] sm:$0xff] %v23
    // Predicated region
    $region10: #{tpu_custom_call.1} parent=1 // pred_check
      _
    $region11: #{tpu_custom_call.1} parent=1 // pred_check_branch
      %26 = sbr.rel (0) target = $region13
    $region12: #{tpu_custom_call.1} parent=1 // pred_region
      %s28 = ssub.s32 128, 128
      %29 = vsyncadd [#allocation4], %s28
      %s31 = sshll.u32 [#allocation5], 4
      %s32 = int_to_ptr.vmem [resolvable:$true] %s31
      %34 = dma.vmem_to_hbm [thread:$0]  %s32, 128, %s1, [#allocation4]
    $region13: #{tpu_custom_call.1} parent=1 // pred_fallthru
      _
    // Predicated region
    $region14: #{tpu_custom_call.1} parent=1 // pred_check
      _
    $region15: #{tpu_custom_call.1} parent=1 // pred_check_branch
      %36 = sbr.rel (0) target = $region17
    $region16: #{tpu_custom_call.1} parent=1 // pred_region
      %37 = dma.done [#allocation4], 128
    $region17: #{tpu_custom_call.1} parent=1 // pred_fallthru
      _
    %38 = vsyncpa [#allocation3], 1
    %39 = vsyncpa [#allocation4], 1

// kernel: _lambda_.1
$region0: #{_lambda_.1}
  #allocation0 [shape = 'u32[]', space=smem, size = 0x4, offset = 0x4, fixed_abs, tag = 'smem constant byte address 0x4 - core index']
  #allocation1 [shape = 'u32[144,128]{1,0:T(1,128)}', space=vmem, size = 0x12000, scoped, tag = 'internal scratch']
  %s0 = inlined_call_operand.vmem [shape: f32[32,128], index: 0, kind: input, shape index: {}]
  %s1 = inlined_call_operand.vmem [shape: bf16[160,128], index: 1, kind: input, shape index: {}]
  %s2 = inlined_call_operand.vmem [shape: f32[408,128], index: 2, kind: input, shape index: {}]
  %s3 = inlined_call_operand.vmem [shape: f32[2,2], index: 3, kind: output, shape index: {}]
  %s4 = sld [smem:[#allocation0]]
  $region22: #{_lambda_.1} parent=0
    _
  %s6 = ssub.s32 1, %s4
  %s7 = scalar_select 0, %s6, %s4
  // Predicated region
  $region2: #{_lambda_.1} parent=0 // pred_check
    _
  $region3: #{_lambda_.1} parent=0 // pred_check_branch
    %9 = sbr.rel (0) target = $region5
  $region4: #{_lambda_.1} parent=0 // pred_region
    _
  $region5: #{_lambda_.1} parent=0 // pred_fallthru
    _
  // Predicated region
  $region6: #{_lambda_.1} parent=0 // pred_check
    _
  $region7: #{_lambda_.1} parent=0 // pred_check_branch
    %11 = sbr.rel (0) target = $region9
  $region8: #{_lambda_.1} parent=0 // pred_region
    _
  $region9: #{_lambda_.1} parent=0 // pred_fallthru
    _
  // Predicated region
  $region10: #{_lambda_.1} parent=0 // pred_check
    _
  $region11: #{_lambda_.1} parent=0 // pred_check_branch
    %13 = sbr.rel (0) target = $region13
  $region12: #{_lambda_.1} parent=0 // pred_region
    _
  $region13: #{_lambda_.1} parent=0 // pred_fallthru
    _
  %v15 = vld [vmem:[%s0] sm:$0xff]
  %v16 = vld [vmem:[%s0 + $0x8] sm:$0xff]
  %v17 = vld [vmem:[%s0 + $0x10] sm:$0xff]
  %v18 = vld [vmem:[%s0 + $0x18] sm:$0xff]
  %v19 = vld [vmem:[%s1] sm:$0xf]
  %v20 = vld [vmem:[%s2] sm:$0xff]
  %v21 = vpack.c.bf16 %v16, %v15
  %v22 = vpack.c.bf16 %v18, %v17
  %24 = vset.pattern.permute.xlu0 0
  %25 = vperm.xlu0 %24, %v20
  %v26 = vpop.permute.xlu0 %25
  %vm28 = vcmask 261120
  %v30 = vsel %vm28, %v19, 0
  %32 = vmatprep.subr.bf16.mxu0 0
  %33 = vmatpush1.bf16.msra.mxu0 %v21
  %34 = vmatprep.subr.bf16.mxu0 0
  %35 = vmatpush1.bf16.msra.mxu0 %v22
  %36 = vmatprep.subr.bf16.mxu0 0
  %37 = vmatpush1.bf16.msra.mxu0 0
  %38 = vmatprep.subr.bf16.mxu0 0
  %39 = vmatpush1.bf16.msra.mxu0 0
  %40 = vmatprep.subr.bf16.mxu0 0
  %41 = vmatpush1.bf16.msra.mxu0 0
  %42 = vmatprep.subr.bf16.mxu0 0
  %43 = vmatpush1.bf16.msra.mxu0 0
  %44 = vmatprep.subr.bf16.mxu0 0
  %45 = vmatpush1.bf16.msra.mxu0 0
  %46 = vmatprep.subr.bf16.mxu0 0
  %47 = vmatpush1.bf16.msra.mxu0 0
  %48 = vmatprep.subr.bf16.mxu0 0
  %49 = vmatpush1.bf16.msra.mxu0 0
  %50 = vmatprep.subr.bf16.mxu0 0
  %51 = vmatpush1.bf16.msra.mxu0 0
  %52 = vmatprep.subr.bf16.mxu0 0
  %53 = vmatpush1.bf16.msra.mxu0 0
  %54 = vmatprep.subr.bf16.mxu0 0
  %55 = vmatpush1.bf16.msra.mxu0 0
  %56 = vmatprep.subr.bf16.mxu0 0
  %57 = vmatpush1.bf16.msra.mxu0 0
  %58 = vmatprep.subr.bf16.mxu0 0
  %59 = vmatpush1.bf16.msra.mxu0 0
  %60 = vmatprep.subr.bf16.mxu0 0
  %61 = vmatpush1.bf16.msra.mxu0 0
  %62 = vmatprep.subr.bf16.mxu0 0
  %63 = vmatpush1.bf16.msra.mxu0 0
  %64 = vmatprep.mubr.bf16.mxu0 0
  %65 = vmatmul.mubr.bf16.gmra.mrb[0].mxu0 %v30
  %v66 = vpop.f32.mrb[0].mxu0
  %v67 = vadd.f32 %v26, %v66
  %v68 = vpop.f32.mrb[0].mxu0
  %v69 = vpop.f32.mrb[0].mxu0
  %v70 = vpop.f32.mrb[0].mxu0
  %71 = vdwg.mxu0
  %v72 = vmax.f32 %v67, 0.0
  %v73 = vld [vmem:[%s2 + $0x8] sm:$0xff]
  %v74 = vld [vmem:[%s2 + $0x10] sm:$0x1]
  %v75 = vld [vmem:[%s2 + $0x18] sm:$0xff]
  %v76 = vld [vmem:[%s2 + $0x20] sm:$0xff]
  %77 = vrot.lane.b32.xlu0 %v72, 9
  %v78 = vpop.permute.xlu0 %77
  %v79 = vlaneseq
  %v80 = vshrl.u32 %v79, 7
  %v81 = vsub.s32 0, %v80
  %v82 = vrot.slane %v73, %v81
  %84 = vset.pattern.permute.xlu0 0
  %85 = vperm.xlu0 %84, %v75
  %v86 = vpop.permute.xlu0 %85
  %v88 = vmul.f32 %v82, %v86
  %v89 = vmul.f32 %v78, %v88
  %v90 = vadd.f32 %v89, 0.0
  %91 = vrot.lane.b32.xlu0 %v72, 8
  %v92 = vpop.permute.xlu0 %91
  %v93 = vlaneseq
  %v94 = vshrl.u32 %v93, 7
  %v95 = vsub.s32 1, %v94
  %v96 = vrot.slane %v73, %v95
  %97 = vset.pattern.permute.xlu0 1
  %98 = vperm.xlu0 %97, %v75
  %v99 = vpop.permute.xlu0 %98
  %v101 = vmul.f32 %v96, %v99
  %v102 = vmul.f32 %v92, %v101
  %v103 = vadd.f32 %v90, %v102
  %104 = vrot.lane.b32.xlu0 %v72, 7
  %v105 = vpop.permute.xlu0 %104
  %v106 = vlaneseq
  %v107 = vshrl.u32 %v106, 7
  %v108 = vsub.s32 2, %v107
  %v109 = vrot.slane %v73, %v108
  %110 = vset.pattern.permute.xlu0 2
  %111 = vperm.xlu0 %110, %v75
  %v112 = vpop.permute.xlu0 %111
  %v114 = vmul.f32 %v109, %v112
  %v115 = vmul.f32 %v105, %v114
  %v116 = vadd.f32 %v103, %v115
  %117 = vrot.lane.b32.xlu0 %v72, 1
  %v118 = vpop.permute.xlu0 %117
  %v119 = vlaneseq
  %v120 = vshrl.u32 %v119, 7
  %v121 = vsub.s32 3, %v120
  %v122 = vrot.slane %v73, %v121
  %123 = vset.pattern.permute.xlu0 3
  %124 = vperm.xlu0 %123, %v75
  %v125 = vpop.permute.xlu0 %124
  %v127 = vmul.f32 %v122, %v125
  %v128 = vmul.f32 %v118, %v127
  %v129 = vadd.f32 %v116, %v128
  %v130 = vlaneseq
  %v131 = vshrl.u32 %v130, 7
  %v132 = vsub.s32 4, %v131
  %v133 = vrot.slane %v73, %v132
  %134 = vset.pattern.permute.xlu0 4
  %135 = vperm.xlu0 %134, %v75
  %v136 = vpop.permute.xlu0 %135
  %v138 = vmul.f32 %v133, %v136
  %v139 = vmul.f32 %v72, %v138
  %v140 = vadd.f32 %v129, %v139
  %141 = vrot.lane.b32.xlu0 %v72, 127
  %v142 = vpop.permute.xlu0 %141
  %v143 = vlaneseq
  %v144 = vshrl.u32 %v143, 7
  %v145 = vsub.s32 5, %v144
  %v146 = vrot.slane %v73, %v145
  %147 = vset.pattern.permute.xlu0 5
  %148 = vperm.xlu0 %147, %v75
  %v149 = vpop.permute.xlu0 %148
  %v151 = vmul.f32 %v146, %v149
  %v152 = vmul.f32 %v142, %v151
  %v153 = vadd.f32 %v140, %v152
  %154 = vrot.lane.b32.xlu0 %v72, 121
  %v155 = vpop.permute.xlu0 %154
  %v156 = vlaneseq
  %v157 = vshrl.u32 %v156, 7
  %v158 = vsub.s32 6, %v157
  %v159 = vrot.slane %v73, %v158
  %160 = vset.pattern.permute.xlu0 6
  %161 = vperm.xlu0 %160, %v75
  %v162 = vpop.permute.xlu0 %161
  %v164 = vmul.f32 %v159, %v162
  %v165 = vmul.f32 %v155, %v164
  %v166 = vadd.f32 %v153, %v165
  %167 = vrot.lane.b32.xlu0 %v72, 120
  %v168 = vpop.permute.xlu0 %167
  %v169 = vlaneseq
  %v170 = vshrl.u32 %v169, 7
  %v171 = vsub.s32 7, %v170
  %v172 = vrot.slane %v73, %v171
  %173 = vset.pattern.permute.xlu0 7
  %174 = vperm.xlu0 %173, %v75
  %v175 = vpop.permute.xlu0 %174
  %v177 = vmul.f32 %v172, %v175
  %v178 = vmul.f32 %v168, %v177
  %v179 = vadd.f32 %v166, %v178
  %180 = vrot.lane.b32.xlu0 %v72, 119
  %v181 = vpop.permute.xlu0 %180
  %v182 = vlaneseq
  %v183 = vshrl.u32 %v182, 7
  %v184 = vsub.s32 0, %v183
  %v185 = vrot.slane %v74, %v184
  %186 = vset.pattern.permute.xlu0 8
  %187 = vperm.xlu0 %186, %v75
  %v188 = vpop.permute.xlu0 %187
  %v190 = vmul.f32 %v185, %v188
  %v191 = vmul.f32 %v181, %v190
  %v192 = vadd.f32 %v179, %v191
  %194 = vset.pattern.permute.xlu0 0
  %195 = vperm.xlu0 %194, %v76
  %v196 = vpop.permute.xlu0 %195
  %v198 = vadd.f32 %v192, %v196
  %v199 = vmax.f32 %v198, 0.0
  %v200 = vld [vmem:[%s1 + $0x8] sm:$0xf]
  %v201 = vld [vmem:[%s1 + $0xc] sm:$0xf]
  %v202 = vld [vmem:[%s2 + $0x28] sm:$0xff]
  %v203 = vld [vmem:[%s2 + $0x30] sm:$0xff]
  %v204 = vpack.c.bf16 %v199, %v199
  %206 = vset.pattern.permute.xlu0 0
  %207 = vperm.xlu0 %206, %v202
  %v208 = vpop.permute.xlu0 %207
  %211 = vset.pattern.permute.xlu0 0
  %212 = vperm.xlu0 %211, %v203
  %v213 = vpop.permute.xlu0 %212
  %v217 = vunpack.c.l.b16 %v200
  %v218 = vunpack.c.l.b16 %v201
  %v219 = vpack.c.b16 %v218, %v217
  %vm220 = vcmask 64512
  %v222 = vsel %vm220, %v219, 0
  %vm224 = vcmask 1043456
  %v226 = vsel %vm224, %v204, 0
  %228 = vmatprep.subr.bf16.mxu0 0
  %229 = vmatpush1.bf16.msra.mxu0 %v226
  %230 = vmatprep.subr.bf16.mxu0 0
  %231 = vmatpush1.bf16.msra.mxu0 0
  %232 = vmatprep.subr.bf16.mxu0 0
  %233 = vmatpush1.bf16.msra.mxu0 0
  %234 = vmatprep.subr.bf16.mxu0 0
  %235 = vmatpush1.bf16.msra.mxu0 0
  %236 = vmatprep.subr.bf16.mxu0 0
  %237 = vmatpush1.bf16.msra.mxu0 0
  %238 = vmatprep.subr.bf16.mxu0 0
  %239 = vmatpush1.bf16.msra.mxu0 0
  %240 = vmatprep.subr.bf16.mxu0 0
  %241 = vmatpush1.bf16.msra.mxu0 0
  %242 = vmatprep.subr.bf16.mxu0 0
  %243 = vmatpush1.bf16.msra.mxu0 0
  %244 = vmatprep.subr.bf16.mxu0 0
  %245 = vmatpush1.bf16.msra.mxu0 0
  %246 = vmatprep.subr.bf16.mxu0 0
  %247 = vmatpush1.bf16.msra.mxu0 0
  %248 = vmatprep.subr.bf16.mxu0 0
  %249 = vmatpush1.bf16.msra.mxu0 0
  %250 = vmatprep.subr.bf16.mxu0 0
  %251 = vmatpush1.bf16.msra.mxu0 0
  %252 = vmatprep.subr.bf16.mxu0 0
  %253 = vmatpush1.bf16.msra.mxu0 0
  %254 = vmatprep.subr.bf16.mxu0 0
  %255 = vmatpush1.bf16.msra.mxu0 0
  %256 = vmatprep.subr.bf16.mxu0 0
  %257 = vmatpush1.bf16.msra.mxu0 0
  %258 = vmatprep.subr.bf16.mxu0 0
  %259 = vmatpush1.bf16.msra.mxu0 0
  %260 = vmatprep.mubr.bf16.mxu0 0
  %261 = vmatmul.mubr.bf16.gmra.mrb[0].mxu0 %v222
  %v262 = vpop.f32.mrb[0].mxu0
  %v263 = vadd.f32 %v208, %v262
  %v264 = vpop.f32.mrb[0].mxu0
  %v265 = vpop.f32.mrb[0].mxu0
  %v266 = vadd.f32 %v213, %v265
  %v267 = vpop.f32.mrb[0].mxu0
  %268 = vdwg.mxu0
  %v269 = vmax.f32 %v263, 0.0
  %v270 = vmax.f32 %v266, 0.0
  %v271 = vld [vmem:[%s1 + $0x10] sm:$0xf]
  %v272 = vld [vmem:[%s1 + $0x14] sm:$0xf]
  %v273 = vld [vmem:[%s1 + $0x18] sm:$0xf]
  %v274 = vld [vmem:[%s1 + $0x1c] sm:$0xf]
  %v275 = vld [vmem:[%s2 + $0x38] sm:$0xff]
  %v276 = vld [vmem:[%s2 + $0x40] sm:$0xff]
  %v277 = vld [vmem:[%s2 + $0x48] sm:$0xff]
  %v278 = vld [vmem:[%s2 + $0x50] sm:$0xff]
  %v279 = vpack.c.bf16 %v270, %v269
  %281 = vset.pattern.permute.xlu0 0
  %282 = vperm.xlu0 %281, %v275
  %v283 = vpop.permute.xlu0 %282
  %286 = vset.pattern.permute.xlu0 0
  %287 = vperm.xlu0 %286, %v276
  %v288 = vpop.permute.xlu0 %287
  %291 = vset.pattern.permute.xlu0 0
  %292 = vperm.xlu0 %291, %v277
  %v293 = vpop.permute.xlu0 %292
  %296 = vset.pattern.permute.xlu0 0
  %297 = vperm.xlu0 %296, %v278
  %v298 = vpop.permute.xlu0 %297
  %v304 = vunpack.c.l.b16 %v271
  %v305 = vunpack.c.l.b16 %v272
  %v306 = vunpack.c.l.b16 %v273
  %v307 = vunpack.c.l.b16 %v274
  %v308 = vpack.c.b16 %v305, %v304
  %v309 = vpack.c.b16 %v307, %v306
  %vm310 = vcmask 130048
  %v312 = vsel %vm310, %v308, 0
  %v315 = vsel %vm310, %v309, 0
  %317 = vmatprep.subr.bf16.mxu0 0
  %318 = vmatpush1.bf16.msra.mxu0 %v279
  %319 = vmatprep.subr.bf16.mxu0 0
  %320 = vmatpush1.bf16.msra.mxu0 0
  %321 = vmatprep.subr.bf16.mxu0 0
  %322 = vmatpush1.bf16.msra.mxu0 0
  %323 = vmatprep.subr.bf16.mxu0 0
  %324 = vmatpush1.bf16.msra.mxu0 0
  %325 = vmatprep.subr.bf16.mxu0 0
  %326 = vmatpush1.bf16.msra.mxu0 0
  %327 = vmatprep.subr.bf16.mxu0 0
  %328 = vmatpush1.bf16.msra.mxu0 0
  %329 = vmatprep.subr.bf16.mxu0 0
  %330 = vmatpush1.bf16.msra.mxu0 0
  %331 = vmatprep.subr.bf16.mxu0 0
  %332 = vmatpush1.bf16.msra.mxu0 0
  %333 = vmatprep.subr.bf16.mxu0 0
  %334 = vmatpush1.bf16.msra.mxu0 0
  %335 = vmatprep.subr.bf16.mxu0 0
  %336 = vmatpush1.bf16.msra.mxu0 0
  %337 = vmatprep.subr.bf16.mxu0 0
  %338 = vmatpush1.bf16.msra.mxu0 0
  %339 = vmatprep.subr.bf16.mxu0 0
  %340 = vmatpush1.bf16.msra.mxu0 0
  %341 = vmatprep.subr.bf16.mxu0 0
  %342 = vmatpush1.bf16.msra.mxu0 0
  %343 = vmatprep.subr.bf16.mxu0 0
  %344 = vmatpush1.bf16.msra.mxu0 0
  %345 = vmatprep.subr.bf16.mxu0 0
  %346 = vmatpush1.bf16.msra.mxu0 0
  %347 = vmatprep.subr.bf16.mxu0 0
  %348 = vmatpush1.bf16.msra.mxu0 0
  %349 = vmatprep.mubr.bf16.mxu0 0
  %350 = vmatmul.mubr.bf16.gmra.mrb[0].mxu0 %v312
  %v351 = vpop.f32.mrb[0].mxu0
  %v352 = vadd.f32 %v283, %v351
  %v353 = vpop.f32.mrb[0].mxu0
  %v354 = vpop.f32.mrb[0].mxu0
  %v355 = vadd.f32 %v288, %v354
  %v356 = vpop.f32.mrb[0].mxu0
  %357 = vmatprep.mubr.bf16.mxu0 0
  %358 = vmatmul.mubr.bf16.gmra.mrb[0].mxu0 %v315
  %v359 = vpop.f32.mrb[0].mxu0
  %v360 = vadd.f32 %v293, %v359
  %v361 = vpop.f32.mrb[0].mxu0
  %v362 = vpop.f32.mrb[0].mxu0
  %v363 = vadd.f32 %v298, %v362
  %v364 = vpop.f32.mrb[0].mxu0
  %365 = vdwg.mxu0
  %v366 = vmax.f32 %v352, 0.0
  %v367 = vmax.f32 %v355, 0.0
  %v368 = vmax.f32 %v360, 0.0
  %v369 = vmax.f32 %v363, 0.0
  %v370 = vld [vmem:[%s2 + $0x58] sm:$0xff]
  %v371 = vld [vmem:[%s2 + $0x60] sm:$0xff]
  %v372 = vld [vmem:[%s2 + $0x68] sm:$0xff]
  %v373 = vld [vmem:[%s2 + $0x70] sm:$0xff]
  %v374 = vld [vmem:[%s2 + $0x78] sm:$0xff]
  %v375 = vld [vmem:[%s2 + $0x80] sm:$0xff]
  %v376 = vld [vmem:[%s2 + $0x88] sm:$0xff]
  %v377 = vld [vmem:[%s2 + $0x90] sm:$0xff]
  %378 = vrot.lane.b32.xlu0 %v366, 9
  %v379 = vpop.permute.xlu0 %378
  %380 = vrot.lane.b32.xlu0 %v367, 9
  %v381 = vpop.permute.xlu0 %380
  %382 = vrot.lane.b32.xlu0 %v368, 9
  %v383 = vpop.permute.xlu0 %382
  %384 = vrot.lane.b32.xlu0 %v369, 9
  %v385 = vpop.permute.xlu0 %384
  %387 = vset.pattern.permute.xlu0 0
  %388 = vperm.xlu0 %387, %v370
  %v389 = vpop.permute.xlu0 %388
  %392 = vset.pattern.permute.xlu0 0
  %393 = vperm.xlu0 %392, %v371
  %v394 = vpop.permute.xlu0 %393
  %397 = vset.pattern.permute.xlu0 0
  %398 = vperm.xlu0 %397, %v372
  %v399 = vpop.permute.xlu0 %398
  %402 = vset.pattern.permute.xlu0 0
  %403 = vperm.xlu0 %402, %v373
  %v404 = vpop.permute.xlu0 %403
  %v406 = vmul.f32 %v82, %v389
  %v407 = vmul.f32 %v82, %v394
  %v408 = vmul.f32 %v82, %v399
  %v409 = vmul.f32 %v82, %v404
  %v410 = vmul.f32 %v379, %v406
  %v411 = vmul.f32 %v381, %v407
  %v412 = vmul.f32 %v383, %v408
  %v413 = vmul.f32 %v385, %v409
  %v414 = vadd.f32 %v410, 0.0
  %v415 = vadd.f32 %v411, 0.0
  %v416 = vadd.f32 %v412, 0.0
  %v417 = vadd.f32 %v413, 0.0
  %418 = vrot.lane.b32.xlu0 %v366, 8
  %v419 = vpop.permute.xlu0 %418
  %420 = vrot.lane.b32.xlu0 %v367, 8
  %v421 = vpop.permute.xlu0 %420
  %422 = vrot.lane.b32.xlu0 %v368, 8
  %v423 = vpop.permute.xlu0 %422
  %424 = vrot.lane.b32.xlu0 %v369, 8
  %v425 = vpop.permute.xlu0 %424
  %426 = vset.pattern.permute.xlu0 1
  %427 = vperm.xlu0 %426, %v370
  %v428 = vpop.permute.xlu0 %427
  %430 = vset.pattern.permute.xlu0 1
  %431 = vperm.xlu0 %430, %v371
  %v432 = vpop.permute.xlu0 %431
  %434 = vset.pattern.permute.xlu0 1
  %435 = vperm.xlu0 %434, %v372
  %v436 = vpop.permute.xlu0 %435
  %438 = vset.pattern.permute.xlu0 1
  %439 = vperm.xlu0 %438, %v373
  %v440 = vpop.permute.xlu0 %439
  %v442 = vmul.f32 %v96, %v428
  %v443 = vmul.f32 %v96, %v432
  %v444 = vmul.f32 %v96, %v436
  %v445 = vmul.f32 %v96, %v440
  %v446 = vmul.f32 %v419, %v442
  %v447 = vmul.f32 %v421, %v443
  %v448 = vmul.f32 %v423, %v444
  %v449 = vmul.f32 %v425, %v445
  %v450 = vadd.f32 %v414, %v446
  %v451 = vadd.f32 %v415, %v447
  %v452 = vadd.f32 %v416, %v448
  %v453 = vadd.f32 %v417, %v449
  %454 = vrot.lane.b32.xlu0 %v366, 7
  %v455 = vpop.permute.xlu0 %454
  %456 = vrot.lane.b32.xlu0 %v367, 7
  %v457 = vpop.permute.xlu0 %456
  %458 = vrot.lane.b32.xlu0 %v368, 7
  %v459 = vpop.permute.xlu0 %458
  %460 = vrot.lane.b32.xlu0 %v369, 7
  %v461 = vpop.permute.xlu0 %460
  %462 = vset.pattern.permute.xlu0 2
  %463 = vperm.xlu0 %462, %v370
  %v464 = vpop.permute.xlu0 %463
  %466 = vset.pattern.permute.xlu0 2
  %467 = vperm.xlu0 %466, %v371
  %v468 = vpop.permute.xlu0 %467
  %470 = vset.pattern.permute.xlu0 2
  %471 = vperm.xlu0 %470, %v372
  %v472 = vpop.permute.xlu0 %471
  %474 = vset.pattern.permute.xlu0 2
  %475 = vperm.xlu0 %474, %v373
  %v476 = vpop.permute.xlu0 %475
  %v478 = vmul.f32 %v109, %v464
  %v479 = vmul.f32 %v109, %v468
  %v480 = vmul.f32 %v109, %v472
  %v481 = vmul.f32 %v109, %v476
  %v482 = vmul.f32 %v455, %v478
  %v483 = vmul.f32 %v457, %v479
  %v484 = vmul.f32 %v459, %v480
  %v485 = vmul.f32 %v461, %v481
  %v486 = vadd.f32 %v450, %v482
  %v487 = vadd.f32 %v451, %v483
  %v488 = vadd.f32 %v452, %v484
  %v489 = vadd.f32 %v453, %v485
  %490 = vrot.lane.b32.xlu0 %v366, 1
  %v491 = vpop.permute.xlu0 %490
  %492 = vrot.lane.b32.xlu0 %v367, 1
  %v493 = vpop.permute.xlu0 %492
  %494 = vrot.lane.b32.xlu0 %v368, 1
  %v495 = vpop.permute.xlu0 %494
  %496 = vrot.lane.b32.xlu0 %v369, 1
  %v497 = vpop.permute.xlu0 %496
  %498 = vset.pattern.permute.xlu0 3
  %499 = vperm.xlu0 %498, %v370
  %v500 = vpop.permute.xlu0 %499
  %502 = vset.pattern.permute.xlu0 3
  %503 = vperm.xlu0 %502, %v371
  %v504 = vpop.permute.xlu0 %503
  %506 = vset.pattern.permute.xlu0 3
  %507 = vperm.xlu0 %506, %v372
  %v508 = vpop.permute.xlu0 %507
  %510 = vset.pattern.permute.xlu0 3
  %511 = vperm.xlu0 %510, %v373
  %v512 = vpop.permute.xlu0 %511
  %v514 = vmul.f32 %v122, %v500
  %v515 = vmul.f32 %v122, %v504
  %v516 = vmul.f32 %v122, %v508
  %v517 = vmul.f32 %v122, %v512
  %v518 = vmul.f32 %v491, %v514
  %v519 = vmul.f32 %v493, %v515
  %v520 = vmul.f32 %v495, %v516
  %v521 = vmul.f32 %v497, %v517
  %v522 = vadd.f32 %v486, %v518
  %v523 = vadd.f32 %v487, %v519
  %v524 = vadd.f32 %v488, %v520
  %v525 = vadd.f32 %v489, %v521
  %526 = vset.pattern.permute.xlu0 4
  %527 = vperm.xlu0 %526, %v370
  %v528 = vpop.permute.xlu0 %527
  %530 = vset.pattern.permute.xlu0 4
  %531 = vperm.xlu0 %530, %v371
  %v532 = vpop.permute.xlu0 %531
  %534 = vset.pattern.permute.xlu0 4
  %535 = vperm.xlu0 %534, %v372
  %v536 = vpop.permute.xlu0 %535
  %538 = vset.pattern.permute.xlu0 4
  %539 = vperm.xlu0 %538, %v373
  %v540 = vpop.permute.xlu0 %539
  %v542 = vmul.f32 %v133, %v528
  %v543 = vmul.f32 %v133, %v532
  %v544 = vmul.f32 %v133, %v536
  %v545 = vmul.f32 %v133, %v540
  %v546 = vmul.f32 %v366, %v542
  %v547 = vmul.f32 %v367, %v543
  %v548 = vmul.f32 %v368, %v544
  %v549 = vmul.f32 %v369, %v545
  %v550 = vadd.f32 %v522, %v546
  %v551 = vadd.f32 %v523, %v547
  %v552 = vadd.f32 %v524, %v548
  %v553 = vadd.f32 %v525, %v549
  %554 = vrot.lane.b32.xlu0 %v366, 127
  %v555 = vpop.permute.xlu0 %554
  %556 = vrot.lane.b32.xlu0 %v367, 127
  %v557 = vpop.permute.xlu0 %556
  %558 = vrot.lane.b32.xlu0 %v368, 127
  %v559 = vpop.permute.xlu0 %558
  %560 = vrot.lane.b32.xlu0 %v369, 127
  %v561 = vpop.permute.xlu0 %560
  %562 = vset.pattern.permute.xlu0 5
  %563 = vperm.xlu0 %562, %v370
  %v564 = vpop.permute.xlu0 %563
  %566 = vset.pattern.permute.xlu0 5
  %567 = vperm.xlu0 %566, %v371
  %v568 = vpop.permute.xlu0 %567
  %570 = vset.pattern.permute.xlu0 5
  %571 = vperm.xlu0 %570, %v372
  %v572 = vpop.permute.xlu0 %571
  %574 = vset.pattern.permute.xlu0 5
  %575 = vperm.xlu0 %574, %v373
  %v576 = vpop.permute.xlu0 %575
  %v578 = vmul.f32 %v146, %v564
  %v579 = vmul.f32 %v146, %v568
  %v580 = vmul.f32 %v146, %v572
  %v581 = vmul.f32 %v146, %v576
  %v582 = vmul.f32 %v555, %v578
  %v583 = vmul.f32 %v557, %v579
  %v584 = vmul.f32 %v559, %v580
  %v585 = vmul.f32 %v561, %v581
  %v586 = vadd.f32 %v550, %v582
  %v587 = vadd.f32 %v551, %v583
  %v588 = vadd.f32 %v552, %v584
  %v589 = vadd.f32 %v553, %v585
  %590 = vrot.lane.b32.xlu0 %v366, 121
  %v591 = vpop.permute.xlu0 %590
  %592 = vrot.lane.b32.xlu0 %v367, 121
  %v593 = vpop.permute.xlu0 %592
  %594 = vrot.lane.b32.xlu0 %v368, 121
  %v595 = vpop.permute.xlu0 %594
  %596 = vrot.lane.b32.xlu0 %v369, 121
  %v597 = vpop.permute.xlu0 %596
  %598 = vset.pattern.permute.xlu0 6
  %599 = vperm.xlu0 %598, %v370
  %v600 = vpop.permute.xlu0 %599
  %602 = vset.pattern.permute.xlu0 6
  %603 = vperm.xlu0 %602, %v371
  %v604 = vpop.permute.xlu0 %603
  %606 = vset.pattern.permute.xlu0 6
  %607 = vperm.xlu0 %606, %v372
  %v608 = vpop.permute.xlu0 %607
  %610 = vset.pattern.permute.xlu0 6
  %611 = vperm.xlu0 %610, %v373
  %v612 = vpop.permute.xlu0 %611
  %v614 = vmul.f32 %v159, %v600
  %v615 = vmul.f32 %v159, %v604
  %v616 = vmul.f32 %v159, %v608
  %v617 = vmul.f32 %v159, %v612
  %v618 = vmul.f32 %v591, %v614
  %v619 = vmul.f32 %v593, %v615
  %v620 = vmul.f32 %v595, %v616
  %v621 = vmul.f32 %v597, %v617
  %v622 = vadd.f32 %v586, %v618
  %v623 = vadd.f32 %v587, %v619
  %v624 = vadd.f32 %v588, %v620
  %v625 = vadd.f32 %v589, %v621
  %626 = vrot.lane.b32.xlu0 %v366, 120
  %v627 = vpop.permute.xlu0 %626
  %628 = vrot.lane.b32.xlu0 %v367, 120
  %v629 = vpop.permute.xlu0 %628
  %630 = vrot.lane.b32.xlu0 %v368, 120
  %v631 = vpop.permute.xlu0 %630
  %632 = vrot.lane.b32.xlu0 %v369, 120
  %v633 = vpop.permute.xlu0 %632
  %634 = vset.pattern.permute.xlu0 7
  %635 = vperm.xlu0 %634, %v370
  %v636 = vpop.permute.xlu0 %635
  %638 = vset.pattern.permute.xlu0 7
  %639 = vperm.xlu0 %638, %v371
  %v640 = vpop.permute.xlu0 %639
  %642 = vset.pattern.permute.xlu0 7
  %643 = vperm.xlu0 %642, %v372
  %v644 = vpop.permute.xlu0 %643
  %646 = vset.pattern.permute.xlu0 7
  %647 = vperm.xlu0 %646, %v373
  %v648 = vpop.permute.xlu0 %647
  %v650 = vmul.f32 %v172, %v636
  %v651 = vmul.f32 %v172, %v640
  %v652 = vmul.f32 %v172, %v644
  %v653 = vmul.f32 %v172, %v648
  %v654 = vmul.f32 %v627, %v650
  %v655 = vmul.f32 %v629, %v651
  %v656 = vmul.f32 %v631, %v652
  %v657 = vmul.f32 %v633, %v653
  %v658 = vadd.f32 %v622, %v654
  %v659 = vadd.f32 %v623, %v655
  %v660 = vadd.f32 %v624, %v656
  %v661 = vadd.f32 %v625, %v657
  %662 = vrot.lane.b32.xlu0 %v366, 119
  %v663 = vpop.permute.xlu0 %662
  %664 = vrot.lane.b32.xlu0 %v367, 119
  %v665 = vpop.permute.xlu0 %664
  %666 = vrot.lane.b32.xlu0 %v368, 119
  %v667 = vpop.permute.xlu0 %666
  %668 = vrot.lane.b32.xlu0 %v369, 119
  %v669 = vpop.permute.xlu0 %668
  %670 = vset.pattern.permute.xlu0 8
  %671 = vperm.xlu0 %670, %v370
  %v672 = vpop.permute.xlu0 %671
  %674 = vset.pattern.permute.xlu0 8
  %675 = vperm.xlu0 %674, %v371
  %v676 = vpop.permute.xlu0 %675
  %678 = vset.pattern.permute.xlu0 8
  %679 = vperm.xlu0 %678, %v372
  %v680 = vpop.permute.xlu0 %679
  %682 = vset.pattern.permute.xlu0 8
  %683 = vperm.xlu0 %682, %v373
  %v684 = vpop.permute.xlu0 %683
  %v686 = vmul.f32 %v185, %v672
  %v687 = vmul.f32 %v185, %v676
  %v688 = vmul.f32 %v185, %v680
  %v689 = vmul.f32 %v185, %v684
  %v690 = vmul.f32 %v663, %v686
  %v691 = vmul.f32 %v665, %v687
  %v692 = vmul.f32 %v667, %v688
  %v693 = vmul.f32 %v669, %v689
  %v694 = vadd.f32 %v658, %v690
  %v695 = vadd.f32 %v659, %v691
  %v696 = vadd.f32 %v660, %v692
  %v697 = vadd.f32 %v661, %v693
  %699 = vset.pattern.permute.xlu0 0
  %700 = vperm.xlu0 %699, %v374
  %v701 = vpop.permute.xlu0 %700
  %704 = vset.pattern.permute.xlu0 0
  %705 = vperm.xlu0 %704, %v375
  %v706 = vpop.permute.xlu0 %705
  %709 = vset.pattern.permute.xlu0 0
  %710 = vperm.xlu0 %709, %v376
  %v711 = vpop.permute.xlu0 %710
  %714 = vset.pattern.permute.xlu0 0
  %715 = vperm.xlu0 %714, %v377
  %v716 = vpop.permute.xlu0 %715
  %v718 = vadd.f32 %v694, %v701
  %v719 = vadd.f32 %v695, %v706
  %v720 = vadd.f32 %v696, %v711
  %v721 = vadd.f32 %v697, %v716
  %v722 = vmax.f32 %v718, 0.0
  %v723 = vmax.f32 %v719, 0.0
  %v724 = vmax.f32 %v720, 0.0
  %v725 = vmax.f32 %v721, 0.0
  %v726 = vld [vmem:[%s1 + $0x20] sm:$0xf]
  %v727 = vld [vmem:[%s1 + $0x24] sm:$0xf]
  %v728 = vld [vmem:[%s2 + $0x98] sm:$0xff]
  %v729 = vld [vmem:[%s2 + $0xa0] sm:$0xff]
  %v730 = vpack.c.bf16 %v723, %v722
  %v731 = vpack.c.bf16 %v725, %v724
  %733 = vset.pattern.permute.xlu0 0
  %734 = vperm.xlu0 %733, %v728
  %v735 = vpop.permute.xlu0 %734
  %738 = vset.pattern.permute.xlu0 0
  %739 = vperm.xlu0 %738, %v729
  %v740 = vpop.permute.xlu0 %739
  %v744 = vunpack.c.l.b16 %v726
  %v745 = vunpack.c.l.b16 %v727
  %v746 = vpack.c.b16 %v745, %v744
  %v748 = vsel %vm28, %v746, 0
  %750 = vmatprep.subr.bf16.mxu0 0
  %751 = vmatpush1.bf16.msra.mxu0 %v730
  %752 = vmatprep.subr.bf16.mxu0 0
  %753 = vmatpush1.bf16.msra.mxu0 %v731
  %754 = vmatprep.subr.bf16.mxu0 0
  %755 = vmatpush1.bf16.msra.mxu0 0
  %756 = vmatprep.subr.bf16.mxu0 0
  %757 = vmatpush1.bf16.msra.mxu0 0
  %758 = vmatprep.subr.bf16.mxu0 0
  %759 = vmatpush1.bf16.msra.mxu0 0
  %760 = vmatprep.subr.bf16.mxu0 0
  %761 = vmatpush1.bf16.msra.mxu0 0
  %762 = vmatprep.subr.bf16.mxu0 0
  %763 = vmatpush1.bf16.msra.mxu0 0
  %764 = vmatprep.subr.bf16.mxu0 0
  %765 = vmatpush1.bf16.msra.mxu0 0
  %766 = vmatprep.subr.bf16.mxu0 0
  %767 = vmatpush1.bf16.msra.mxu0 0
  %768 = vmatprep.subr.bf16.mxu0 0
  %769 = vmatpush1.bf16.msra.mxu0 0
  %770 = vmatprep.subr.bf16.mxu0 0
  %771 = vmatpush1.bf16.msra.mxu0 0
  %772 = vmatprep.subr.bf16.mxu0 0
  %773 = vmatpush1.bf16.msra.mxu0 0
  %774 = vmatprep.subr.bf16.mxu0 0
  %775 = vmatpush1.bf16.msra.mxu0 0
  %776 = vmatprep.subr.bf16.mxu0 0
  %777 = vmatpush1.bf16.msra.mxu0 0
  %778 = vmatprep.subr.bf16.mxu0 0
  %779 = vmatpush1.bf16.msra.mxu0 0
  %780 = vmatprep.subr.bf16.mxu0 0
  %781 = vmatpush1.bf16.msra.mxu0 0
  %782 = vmatprep.mubr.bf16.mxu0 0
  %783 = vmatmul.mubr.bf16.gmra.mrb[0].mxu0 %v748
  %v784 = vpop.f32.mrb[0].mxu0
  %v785 = vadd.f32 %v735, %v784
  %v786 = vpop.f32.mrb[0].mxu0
  %v787 = vpop.f32.mrb[0].mxu0
  %v788 = vadd.f32 %v740, %v787
  %v789 = vpop.f32.mrb[0].mxu0
  %790 = vdwg.mxu0
  %v791 = vadd.f32 %v785, %v269
  %v792 = vadd.f32 %v788, %v270
  %v793 = vmax.f32 %v791, 0.0
  %v794 = vmax.f32 %v792, 0.0
  %v795 = vld [vmem:[%s2 + $0xa8] sm:$0xff]
  %v796 = vld [vmem:[%s2 + $0xb0] sm:$0xff]
  %v797 = vld [vmem:[%s2 + $0xb8] sm:$0xff]
  %v798 = vld [vmem:[%s2 + $0xc0] sm:$0xff]
  %v799 = vld [vmem:[%s2 + $0xc8] sm:$0xff]
  %v800 = vld [vmem:[%s2 + $0xd0] sm:$0xff]
  %v801 = vld [vmem:[%s2 + $0xd8] sm:$0x1]
  %v802 = vld [vmem:[%s1 + $0x40] sm:$0xf]
  %v803 = vld [vmem:[%s2 + $0x108] sm:$0xff]
  %v804 = vpack.c.bf16 %v794, %v793
  %806 = vset.pattern.permute.xlu0 0
  %807 = vperm.xlu0 %806, %v803
  %v808 = vpop.permute.xlu0 %807
  %v811 = vsel %vm310, %v802, 0
  %813 = vmatprep.subr.bf16.mxu0 0
  %814 = vmatpush1.bf16.msra.mxu0 %v804
  %815 = vmatprep.subr.bf16.mxu0 0
  %816 = vmatpush1.bf16.msra.mxu0 0
  %817 = vmatprep.subr.bf16.mxu0 0
  %818 = vmatpush1.bf16.msra.mxu0 0
  %819 = vmatprep.subr.bf16.mxu0 0
  %820 = vmatpush1.bf16.msra.mxu0 0
  %821 = vmatprep.subr.bf16.mxu0 0
  %822 = vmatpush1.bf16.msra.mxu0 0
  %823 = vmatprep.subr.bf16.mxu0 0
  %824 = vmatpush1.bf16.msra.mxu0 0
  %825 = vmatprep.subr.bf16.mxu0 0
  %826 = vmatpush1.bf16.msra.mxu0 0
  %827 = vmatprep.subr.bf16.mxu0 0
  %828 = vmatpush1.bf16.msra.mxu0 0
  %829 = vmatprep.subr.bf16.mxu0 0
  %830 = vmatpush1.bf16.msra.mxu0 0
  %831 = vmatprep.subr.bf16.mxu0 0
  %832 = vmatpush1.bf16.msra.mxu0 0
  %833 = vmatprep.subr.bf16.mxu0 0
  %834 = vmatpush1.bf16.msra.mxu0 0
  %835 = vmatprep.subr.bf16.mxu0 0
  %836 = vmatpush1.bf16.msra.mxu0 0
  %837 = vmatprep.subr.bf16.mxu0 0
  %838 = vmatpush1.bf16.msra.mxu0 0
  %839 = vmatprep.subr.bf16.mxu0 0
  %840 = vmatpush1.bf16.msra.mxu0 0
  %841 = vmatprep.subr.bf16.mxu0 0
  %842 = vmatpush1.bf16.msra.mxu0 0
  %843 = vmatprep.subr.bf16.mxu0 0
  %844 = vmatpush1.bf16.msra.mxu0 0
  %845 = vmatprep.mubr.bf16.mxu0 0
  %846 = vmatmul.mubr.bf16.gmra.mrb[0].mxu0 %v811
  %v847 = vpop.f32.mrb[0].mxu0
  %v848 = vadd.f32 %v808, %v847
  %v849 = vpop.f32.mrb[0].mxu0
  %v850 = vpop.f32.mrb[0].mxu0
  %v851 = vpop.f32.mrb[0].mxu0
  %852 = vdwg.mxu0
  %v853 = vld [vmem:[%s2 + $0xe0] sm:$0xff]
  %v854 = vld [vmem:[%s2 + $0xe8] sm:$0xff]
  %v855 = vld [vmem:[%s2 + $0xf0] sm:$0xff]
  %v856 = vld [vmem:[%s2 + $0xf8] sm:$0xff]
  %857 = vrot.lane.b32.xlu0 %v793, 27
  %v858 = vpop.permute.xlu0 %857
  %859 = vrot.lane.b32.xlu0 %v794, 27
  %v860 = vpop.permute.xlu0 %859
  %v861 = vlaneseq
  %v862 = vshrl.u32 %v861, 7
  %v863 = vsub.s32 0, %v862
  %v864 = vrot.slane %v795, %v863
  %866 = vset.pattern.permute.xlu0 0
  %867 = vperm.xlu0 %866, %v853
  %v868 = vpop.permute.xlu0 %867
  %871 = vset.pattern.permute.xlu0 0
  %872 = vperm.xlu0 %871, %v854
  %v873 = vpop.permute.xlu0 %872
  %v875 = vmul.f32 %v864, %v868
  %v876 = vmul.f32 %v864, %v873
  %v877 = vmul.f32 %v858, %v875
  %v878 = vmul.f32 %v860, %v876
  %v879 = vadd.f32 %v877, 0.0
  %v880 = vadd.f32 %v878, 0.0
  %881 = vrot.lane.b32.xlu0 %v793, 26
  %v882 = vpop.permute.xlu0 %881
  %883 = vrot.lane.b32.xlu0 %v794, 26
  %v884 = vpop.permute.xlu0 %883
  %v885 = vlaneseq
  %v886 = vshrl.u32 %v885, 7
  %v887 = vsub.s32 1, %v886
  %v888 = vrot.slane %v795, %v887
  %889 = vset.pattern.permute.xlu0 1
  %890 = vperm.xlu0 %889, %v853
  %v891 = vpop.permute.xlu0 %890
  %893 = vset.pattern.permute.xlu0 1
  %894 = vperm.xlu0 %893, %v854
  %v895 = vpop.permute.xlu0 %894
  %v897 = vmul.f32 %v888, %v891
  %v898 = vmul.f32 %v888, %v895
  %v899 = vmul.f32 %v882, %v897
  %v900 = vmul.f32 %v884, %v898
  %v901 = vadd.f32 %v879, %v899
  %v902 = vadd.f32 %v880, %v900
  %903 = vrot.lane.b32.xlu0 %v793, 25
  %v904 = vpop.permute.xlu0 %903
  %905 = vrot.lane.b32.xlu0 %v794, 25
  %v906 = vpop.permute.xlu0 %905
  %v907 = vlaneseq
  %v908 = vshrl.u32 %v907, 7
  %v909 = vsub.s32 2, %v908
  %v910 = vrot.slane %v795, %v909
  %911 = vset.pattern.permute.xlu0 2
  %912 = vperm.xlu0 %911, %v853
  %v913 = vpop.permute.xlu0 %912
  %915 = vset.pattern.permute.xlu0 2
  %916 = vperm.xlu0 %915, %v854
  %v917 = vpop.permute.xlu0 %916
  %v919 = vmul.f32 %v910, %v913
  %v920 = vmul.f32 %v910, %v917
  %v921 = vmul.f32 %v904, %v919
  %v922 = vmul.f32 %v906, %v920
  %v923 = vadd.f32 %v901, %v921
  %v924 = vadd.f32 %v902, %v922
  %925 = vrot.lane.b32.xlu0 %v793, 24
  %v926 = vpop.permute.xlu0 %925
  %927 = vrot.lane.b32.xlu0 %v794, 24
  %v928 = vpop.permute.xlu0 %927
  %v929 = vlaneseq
  %v930 = vshrl.u32 %v929, 7
  %v931 = vsub.s32 3, %v930
  %v932 = vrot.slane %v795, %v931
  %933 = vset.pattern.permute.xlu0 3
  %934 = vperm.xlu0 %933, %v853
  %v935 = vpop.permute.xlu0 %934
  %937 = vset.pattern.permute.xlu0 3
  %938 = vperm.xlu0 %937, %v854
  %v939 = vpop.permute.xlu0 %938
  %v941 = vmul.f32 %v932, %v935
  %v942 = vmul.f32 %v932, %v939
  %v943 = vmul.f32 %v926, %v941
  %v944 = vmul.f32 %v928, %v942
  %v945 = vadd.f32 %v923, %v943
  %v946 = vadd.f32 %v924, %v944
  %947 = vrot.lane.b32.xlu0 %v793, 23
  %v948 = vpop.permute.xlu0 %947
  %949 = vrot.lane.b32.xlu0 %v794, 23
  %v950 = vpop.permute.xlu0 %949
  %v951 = vlaneseq
  %v952 = vshrl.u32 %v951, 7
  %v953 = vsub.s32 4, %v952
  %v954 = vrot.slane %v795, %v953
  %955 = vset.pattern.permute.xlu0 4
  %956 = vperm.xlu0 %955, %v853
  %v957 = vpop.permute.xlu0 %956
  %959 = vset.pattern.permute.xlu0 4
  %960 = vperm.xlu0 %959, %v854
  %v961 = vpop.permute.xlu0 %960
  %v963 = vmul.f32 %v954, %v957
  %v964 = vmul.f32 %v954, %v961
  %v965 = vmul.f32 %v948, %v963
  %v966 = vmul.f32 %v950, %v964
  %v967 = vadd.f32 %v945, %v965
  %v968 = vadd.f32 %v946, %v966
  %969 = vrot.lane.b32.xlu0 %v793, 22
  %v970 = vpop.permute.xlu0 %969
  %971 = vrot.lane.b32.xlu0 %v794, 22
  %v972 = vpop.permute.xlu0 %971
  %v973 = vlaneseq
  %v974 = vshrl.u32 %v973, 7
  %v975 = vsub.s32 5, %v974
  %v976 = vrot.slane %v795, %v975
  %977 = vset.pattern.permute.xlu0 5
  %978 = vperm.xlu0 %977, %v853
  %v979 = vpop.permute.xlu0 %978
  %981 = vset.pattern.permute.xlu0 5
  %982 = vperm.xlu0 %981, %v854
  %v983 = vpop.permute.xlu0 %982
  %v985 = vmul.f32 %v976, %v979
  %v986 = vmul.f32 %v976, %v983
  %v987 = vmul.f32 %v970, %v985
  %v988 = vmul.f32 %v972, %v986
  %v989 = vadd.f32 %v967, %v987
  %v990 = vadd.f32 %v968, %v988
  %991 = vrot.lane.b32.xlu0 %v793, 21
  %v992 = vpop.permute.xlu0 %991
  %993 = vrot.lane.b32.xlu0 %v794, 21
  %v994 = vpop.permute.xlu0 %993
  %v995 = vlaneseq
  %v996 = vshrl.u32 %v995, 7
  %v997 = vsub.s32 6, %v996
  %v998 = vrot.slane %v795, %v997
  %999 = vset.pattern.permute.xlu0 6
  %1000 = vperm.xlu0 %999, %v853
  %v1001 = vpop.permute.xlu0 %1000
  %1003 = vset.pattern.permute.xlu0 6
  %1004 = vperm.xlu0 %1003, %v854
  %v1005 = vpop.permute.xlu0 %1004
  %v1007 = vmul.f32 %v998, %v1001
  %v1008 = vmul.f32 %v998, %v1005
  %v1009 = vmul.f32 %v992, %v1007
  %v1010 = vmul.f32 %v994, %v1008
  %v1011 = vadd.f32 %v989, %v1009
  %v1012 = vadd.f32 %v990, %v1010
  %1013 = vrot.lane.b32.xlu0 %v793, 19
  %v1014 = vpop.permute.xlu0 %1013
  %1015 = vrot.lane.b32.xlu0 %v794, 19
  %v1016 = vpop.permute.xlu0 %1015
  %v1017 = vlaneseq
  %v1018 = vshrl.u32 %v1017, 7
  %v1019 = vsub.s32 7, %v1018
  %v1020 = vrot.slane %v795, %v1019
  %1021 = vset.pattern.permute.xlu0 7
  %1022 = vperm.xlu0 %1021, %v853
  %v1023 = vpop.permute.xlu0 %1022
  %1025 = vset.pattern.permute.xlu0 7
  %1026 = vperm.xlu0 %1025, %v854
  %v1027 = vpop.permute.xlu0 %1026
  %v1029 = vmul.f32 %v1020, %v1023
  %v1030 = vmul.f32 %v1020, %v1027
  %v1031 = vmul.f32 %v1014, %v1029
  %v1032 = vmul.f32 %v1016, %v1030
  %v1033 = vadd.f32 %v1011, %v1031
  %v1034 = vadd.f32 %v1012, %v1032
  %1035 = vrot.lane.b32.xlu0 %v793, 18
  %v1036 = vpop.permute.xlu0 %1035
  %1037 = vrot.lane.b32.xlu0 %v794, 18
  %v1038 = vpop.permute.xlu0 %1037
  %v1039 = vlaneseq
  %v1040 = vshrl.u32 %v1039, 7
  %v1041 = vsub.s32 0, %v1040
  %v1042 = vrot.slane %v796, %v1041
  %1043 = vset.pattern.permute.xlu0 8
  %1044 = vperm.xlu0 %1043, %v853
  %v1045 = vpop.permute.xlu0 %1044
  %1047 = vset.pattern.permute.xlu0 8
  %1048 = vperm.xlu0 %1047, %v854
  %v1049 = vpop.permute.xlu0 %1048
  %v1051 = vmul.f32 %v1042, %v1045
  %v1052 = vmul.f32 %v1042, %v1049
  %v1053 = vmul.f32 %v1036, %v1051
  %v1054 = vmul.f32 %v1038, %v1052
  %v1055 = vadd.f32 %v1033, %v1053
  %v1056 = vadd.f32 %v1034, %v1054
  %1057 = vrot.lane.b32.xlu0 %v793, 17
  %v1058 = vpop.permute.xlu0 %1057
  %1059 = vrot.lane.b32.xlu0 %v794, 17
  %v1060 = vpop.permute.xlu0 %1059
  %v1061 = vlaneseq
  %v1062 = vshrl.u32 %v1061, 7
  %v1063 = vsub.s32 1, %v1062
  %v1064 = vrot.slane %v796, %v1063
  %1065 = vset.pattern.permute.xlu0 9
  %1066 = vperm.xlu0 %1065, %v853
  %v1067 = vpop.permute.xlu0 %1066
  %1069 = vset.pattern.permute.xlu0 9
  %1070 = vperm.xlu0 %1069, %v854
  %v1071 = vpop.permute.xlu0 %1070
  %v1073 = vmul.f32 %v1064, %v1067
  %v1074 = vmul.f32 %v1064, %v1071
  %v1075 = vmul.f32 %v1058, %v1073
  %v1076 = vmul.f32 %v1060, %v1074
  %v1077 = vadd.f32 %v1055, %v1075
  %v1078 = vadd.f32 %v1056, %v1076
  %1079 = vrot.lane.b32.xlu0 %v793, 16
  %v1080 = vpop.permute.xlu0 %1079
  %1081 = vrot.lane.b32.xlu0 %v794, 16
  %v1082 = vpop.permute.xlu0 %1081
  %v1083 = vlaneseq
  %v1084 = vshrl.u32 %v1083, 7
  %v1085 = vsub.s32 2, %v1084
  %v1086 = vrot.slane %v796, %v1085
  %1087 = vset.pattern.permute.xlu0 10
  %1088 = vperm.xlu0 %1087, %v853
  %v1089 = vpop.permute.xlu0 %1088
  %1091 = vset.pattern.permute.xlu0 10
  %1092 = vperm.xlu0 %1091, %v854
  %v1093 = vpop.permute.xlu0 %1092
  %v1095 = vmul.f32 %v1086, %v1089
  %v1096 = vmul.f32 %v1086, %v1093
  %v1097 = vmul.f32 %v1080, %v1095
  %v1098 = vmul.f32 %v1082, %v1096
  %v1099 = vadd.f32 %v1077, %v1097
  %v1100 = vadd.f32 %v1078, %v1098
  %1101 = vrot.lane.b32.xlu0 %v793, 15
  %v1102 = vpop.permute.xlu0 %1101
  %1103 = vrot.lane.b32.xlu0 %v794, 15
  %v1104 = vpop.permute.xlu0 %1103
  %v1105 = vlaneseq
  %v1106 = vshrl.u32 %v1105, 7
  %v1107 = vsub.s32 3, %v1106
  %v1108 = vrot.slane %v796, %v1107
  %1109 = vset.pattern.permute.xlu0 11
  %1110 = vperm.xlu0 %1109, %v853
  %v1111 = vpop.permute.xlu0 %1110
  %1113 = vset.pattern.permute.xlu0 11
  %1114 = vperm.xlu0 %1113, %v854
  %v1115 = vpop.permute.xlu0 %1114
  %v1117 = vmul.f32 %v1108, %v1111
  %v1118 = vmul.f32 %v1108, %v1115
  %v1119 = vmul.f32 %v1102, %v1117
  %v1120 = vmul.f32 %v1104, %v1118
  %v1121 = vadd.f32 %v1099, %v1119
  %v1122 = vadd.f32 %v1100, %v1120
  %1123 = vrot.lane.b32.xlu0 %v793, 14
  %v1124 = vpop.permute.xlu0 %1123
  %1125 = vrot.lane.b32.xlu0 %v794, 14
  %v1126 = vpop.permute.xlu0 %1125
  %v1127 = vlaneseq
  %v1128 = vshrl.u32 %v1127, 7
  %v1129 = vsub.s32 4, %v1128
  %v1130 = vrot.slane %v796, %v1129
  %1131 = vset.pattern.permute.xlu0 12
  %1132 = vperm.xlu0 %1131, %v853
  %v1133 = vpop.permute.xlu0 %1132
  %1135 = vset.pattern.permute.xlu0 12
  %1136 = vperm.xlu0 %1135, %v854
  %v1137 = vpop.permute.xlu0 %1136
  %v1139 = vmul.f32 %v1130, %v1133
  %v1140 = vmul.f32 %v1130, %v1137
  %v1141 = vmul.f32 %v1124, %v1139
  %v1142 = vmul.f32 %v1126, %v1140
  %v1143 = vadd.f32 %v1121, %v1141
  %v1144 = vadd.f32 %v1122, %v1142
  %1145 = vrot.lane.b32.xlu0 %v793, 13
  %v1146 = vpop.permute.xlu0 %1145
  %1147 = vrot.lane.b32.xlu0 %v794, 13
  %v1148 = vpop.permute.xlu0 %1147
  %v1149 = vlaneseq
  %v1150 = vshrl.u32 %v1149, 7
  %v1151 = vsub.s32 5, %v1150
  %v1152 = vrot.slane %v796, %v1151
  %1153 = vset.pattern.permute.xlu0 13
  %1154 = vperm.xlu0 %1153, %v853
  %v1155 = vpop.permute.xlu0 %1154
  %1157 = vset.pattern.permute.xlu0 13
  %1158 = vperm.xlu0 %1157, %v854
  %v1159 = vpop.permute.xlu0 %1158
  %v1161 = vmul.f32 %v1152, %v1155
  %v1162 = vmul.f32 %v1152, %v1159
  %v1163 = vmul.f32 %v1146, %v1161
  %v1164 = vmul.f32 %v1148, %v1162
  %v1165 = vadd.f32 %v1143, %v1163
  %v1166 = vadd.f32 %v1144, %v1164
  %1167 = vrot.lane.b32.xlu0 %v793, 11
  %v1168 = vpop.permute.xlu0 %1167
  %1169 = vrot.lane.b32.xlu0 %v794, 11
  %v1170 = vpop.permute.xlu0 %1169
  %v1171 = vlaneseq
  %v1172 = vshrl.u32 %v1171, 7
  %v1173 = vsub.s32 6, %v1172
  %v1174 = vrot.slane %v796, %v1173
  %1175 = vset.pattern.permute.xlu0 14
  %1176 = vperm.xlu0 %1175, %v853
  %v1177 = vpop.permute.xlu0 %1176
  %1179 = vset.pattern.permute.xlu0 14
  %1180 = vperm.xlu0 %1179, %v854
  %v1181 = vpop.permute.xlu0 %1180
  %v1183 = vmul.f32 %v1174, %v1177
  %v1184 = vmul.f32 %v1174, %v1181
  %v1185 = vmul.f32 %v1168, %v1183
  %v1186 = vmul.f32 %v1170, %v1184
  %v1187 = vadd.f32 %v1165, %v1185
  %v1188 = vadd.f32 %v1166, %v1186
  %1189 = vrot.lane.b32.xlu0 %v793, 10
  %v1190 = vpop.permute.xlu0 %1189
  %1191 = vrot.lane.b32.xlu0 %v794, 10
  %v1192 = vpop.permute.xlu0 %1191
  %v1193 = vlaneseq
  %v1194 = vshrl.u32 %v1193, 7
  %v1195 = vsub.s32 7, %v1194
  %v1196 = vrot.slane %v796, %v1195
  %1197 = vset.pattern.permute.xlu0 15
  %1198 = vperm.xlu0 %1197, %v853
  %v1199 = vpop.permute.xlu0 %1198
  %1201 = vset.pattern.permute.xlu0 15
  %1202 = vperm.xlu0 %1201, %v854
  %v1203 = vpop.permute.xlu0 %1202
  %v1205 = vmul.f32 %v1196, %v1199
  %v1206 = vmul.f32 %v1196, %v1203
  %v1207 = vmul.f32 %v1190, %v1205
  %v1208 = vmul.f32 %v1192, %v1206
  %v1209 = vadd.f32 %v1187, %v1207
  %v1210 = vadd.f32 %v1188, %v1208
  %1211 = vrot.lane.b32.xlu0 %v793, 9
  %v1212 = vpop.permute.xlu0 %1211
  %1213 = vrot.lane.b32.xlu0 %v794, 9
  %v1214 = vpop.permute.xlu0 %1213
  %v1215 = vlaneseq
  %v1216 = vshrl.u32 %v1215, 7
  %v1217 = vsub.s32 0, %v1216
  %v1218 = vrot.slane %v797, %v1217
  %1219 = vset.pattern.permute.xlu0 16
  %1220 = vperm.xlu0 %1219, %v853
  %v1221 = vpop.permute.xlu0 %1220
  %1223 = vset.pattern.permute.xlu0 16
  %1224 = vperm.xlu0 %1223, %v854
  %v1225 = vpop.permute.xlu0 %1224
  %v1227 = vmul.f32 %v1218, %v1221
  %v1228 = vmul.f32 %v1218, %v1225
  %v1229 = vmul.f32 %v1212, %v1227
  %v1230 = vmul.f32 %v1214, %v1228
  %v1231 = vadd.f32 %v1209, %v1229
  %v1232 = vadd.f32 %v1210, %v1230
  %1233 = vrot.lane.b32.xlu0 %v793, 8
  %v1234 = vpop.permute.xlu0 %1233
  %1235 = vrot.lane.b32.xlu0 %v794, 8
  %v1236 = vpop.permute.xlu0 %1235
  %v1237 = vlaneseq
  %v1238 = vshrl.u32 %v1237, 7
  %v1239 = vsub.s32 1, %v1238
  %v1240 = vrot.slane %v797, %v1239
  %1241 = vset.pattern.permute.xlu0 17
  %1242 = vperm.xlu0 %1241, %v853
  %v1243 = vpop.permute.xlu0 %1242
  %1245 = vset.pattern.permute.xlu0 17
  %1246 = vperm.xlu0 %1245, %v854
  %v1247 = vpop.permute.xlu0 %1246
  %v1249 = vmul.f32 %v1240, %v1243
  %v1250 = vmul.f32 %v1240, %v1247
  %v1251 = vmul.f32 %v1234, %v1249
  %v1252 = vmul.f32 %v1236, %v1250
  %v1253 = vadd.f32 %v1231, %v1251
  %v1254 = vadd.f32 %v1232, %v1252
  %1255 = vrot.lane.b32.xlu0 %v793, 7
  %v1256 = vpop.permute.xlu0 %1255
  %1257 = vrot.lane.b32.xlu0 %v794, 7
  %v1258 = vpop.permute.xlu0 %1257
  %v1259 = vlaneseq
  %v1260 = vshrl.u32 %v1259, 7
  %v1261 = vsub.s32 2, %v1260
  %v1262 = vrot.slane %v797, %v1261
  %1263 = vset.pattern.permute.xlu0 18
  %1264 = vperm.xlu0 %1263, %v853
  %v1265 = vpop.permute.xlu0 %1264
  %1267 = vset.pattern.permute.xlu0 18
  %1268 = vperm.xlu0 %1267, %v854
  %v1269 = vpop.permute.xlu0 %1268
  %v1271 = vmul.f32 %v1262, %v1265
  %v1272 = vmul.f32 %v1262, %v1269
  %v1273 = vmul.f32 %v1256, %v1271
  %v1274 = vmul.f32 %v1258, %v1272
  %v1275 = vadd.f32 %v1253, %v1273
  %v1276 = vadd.f32 %v1254, %v1274
  %1277 = vrot.lane.b32.xlu0 %v793, 6
  %v1278 = vpop.permute.xlu0 %1277
  %1279 = vrot.lane.b32.xlu0 %v794, 6
  %v1280 = vpop.permute.xlu0 %1279
  %v1281 = vlaneseq
  %v1282 = vshrl.u32 %v1281, 7
  %v1283 = vsub.s32 3, %v1282
  %v1284 = vrot.slane %v797, %v1283
  %1285 = vset.pattern.permute.xlu0 19
  %1286 = vperm.xlu0 %1285, %v853
  %v1287 = vpop.permute.xlu0 %1286
  %1289 = vset.pattern.permute.xlu0 19
  %1290 = vperm.xlu0 %1289, %v854
  %v1291 = vpop.permute.xlu0 %1290
  %v1293 = vmul.f32 %v1284, %v1287
  %v1294 = vmul.f32 %v1284, %v1291
  %v1295 = vmul.f32 %v1278, %v1293
  %v1296 = vmul.f32 %v1280, %v1294
  %v1297 = vadd.f32 %v1275, %v1295
  %v1298 = vadd.f32 %v1276, %v1296
  %1299 = vrot.lane.b32.xlu0 %v793, 5
  %v1300 = vpop.permute.xlu0 %1299
  %1301 = vrot.lane.b32.xlu0 %v794, 5
  %v1302 = vpop.permute.xlu0 %1301
  %v1303 = vlaneseq
  %v1304 = vshrl.u32 %v1303, 7
  %v1305 = vsub.s32 4, %v1304
  %v1306 = vrot.slane %v797, %v1305
  %1307 = vset.pattern.permute.xlu0 20
  %1308 = vperm.xlu0 %1307, %v853
  %v1309 = vpop.permute.xlu0 %1308
  %1311 = vset.pattern.permute.xlu0 20
  %1312 = vperm.xlu0 %1311, %v854
  %v1313 = vpop.permute.xlu0 %1312
  %v1315 = vmul.f32 %v1306, %v1309
  %v1316 = vmul.f32 %v1306, %v1313
  %v1317 = vmul.f32 %v1300, %v1315
  %v1318 = vmul.f32 %v1302, %v1316
  %v1319 = vadd.f32 %v1297, %v1317
  %v1320 = vadd.f32 %v1298, %v1318
  %1321 = vrot.lane.b32.xlu0 %v793, 3
  %v1322 = vpop.permute.xlu0 %1321
  %1323 = vrot.lane.b32.xlu0 %v794, 3
  %v1324 = vpop.permute.xlu0 %1323
  %v1325 = vlaneseq
  %v1326 = vshrl.u32 %v1325, 7
  %v1327 = vsub.s32 5, %v1326
  %v1328 = vrot.slane %v797, %v1327
  %1329 = vset.pattern.permute.xlu0 21
  %1330 = vperm.xlu0 %1329, %v853
  %v1331 = vpop.permute.xlu0 %1330
  %1333 = vset.pattern.permute.xlu0 21
  %1334 = vperm.xlu0 %1333, %v854
  %v1335 = vpop.permute.xlu0 %1334
  %v1337 = vmul.f32 %v1328, %v1331
  %v1338 = vmul.f32 %v1328, %v1335
  %v1339 = vmul.f32 %v1322, %v1337
  %v1340 = vmul.f32 %v1324, %v1338
  %v1341 = vadd.f32 %v1319, %v1339
  %v1342 = vadd.f32 %v1320, %v1340
  %1343 = vrot.lane.b32.xlu0 %v793, 2
  %v1344 = vpop.permute.xlu0 %1343
  %1345 = vrot.lane.b32.xlu0 %v794, 2
  %v1346 = vpop.permute.xlu0 %1345
  %v1347 = vlaneseq
  %v1348 = vshrl.u32 %v1347, 7
  %v1349 = vsub.s32 6, %v1348
  %v1350 = vrot.slane %v797, %v1349
  %1351 = vset.pattern.permute.xlu0 22
  %1352 = vperm.xlu0 %1351, %v853
  %v1353 = vpop.permute.xlu0 %1352
  %1355 = vset.pattern.permute.xlu0 22
  %1356 = vperm.xlu0 %1355, %v854
  %v1357 = vpop.permute.xlu0 %1356
  %v1359 = vmul.f32 %v1350, %v1353
  %v1360 = vmul.f32 %v1350, %v1357
  %v1361 = vmul.f32 %v1344, %v1359
  %v1362 = vmul.f32 %v1346, %v1360
  %v1363 = vadd.f32 %v1341, %v1361
  %v1364 = vadd.f32 %v1342, %v1362
  %1365 = vrot.lane.b32.xlu0 %v793, 1
  %v1366 = vpop.permute.xlu0 %1365
  %1367 = vrot.lane.b32.xlu0 %v794, 1
  %v1368 = vpop.permute.xlu0 %1367
  %v1369 = vlaneseq
  %v1370 = vshrl.u32 %v1369, 7
  %v1371 = vsub.s32 7, %v1370
  %v1372 = vrot.slane %v797, %v1371
  %1373 = vset.pattern.permute.xlu0 23
  %1374 = vperm.xlu0 %1373, %v853
  %v1375 = vpop.permute.xlu0 %1374
  %1377 = vset.pattern.permute.xlu0 23
  %1378 = vperm.xlu0 %1377, %v854
  %v1379 = vpop.permute.xlu0 %1378
  %v1381 = vmul.f32 %v1372, %v1375
  %v1382 = vmul.f32 %v1372, %v1379
  %v1383 = vmul.f32 %v1366, %v1381
  %v1384 = vmul.f32 %v1368, %v1382
  %v1385 = vadd.f32 %v1363, %v1383
  %v1386 = vadd.f32 %v1364, %v1384
  %v1387 = vlaneseq
  %v1388 = vshrl.u32 %v1387, 7
  %v1389 = vsub.s32 0, %v1388
  %v1390 = vrot.slane %v798, %v1389
  %1391 = vset.pattern.permute.xlu0 24
  %1392 = vperm.xlu0 %1391, %v853
  %v1393 = vpop.permute.xlu0 %1392
  %1395 = vset.pattern.permute.xlu0 24
  %1396 = vperm.xlu0 %1395, %v854
  %v1397 = vpop.permute.xlu0 %1396
  %v1399 = vmul.f32 %v1390, %v1393
  %v1400 = vmul.f32 %v1390, %v1397
  %v1401 = vmul.f32 %v793, %v1399
  %v1402 = vmul.f32 %v794, %v1400
  %v1403 = vadd.f32 %v1385, %v1401
  %v1404 = vadd.f32 %v1386, %v1402
  %1405 = vrot.lane.b32.xlu0 %v793, 127
  %v1406 = vpop.permute.xlu0 %1405
  %1407 = vrot.lane.b32.xlu0 %v794, 127
  %v1408 = vpop.permute.xlu0 %1407
  %v1409 = vlaneseq
  %v1410 = vshrl.u32 %v1409, 7
  %v1411 = vsub.s32 1, %v1410
  %v1412 = vrot.slane %v798, %v1411
  %1413 = vset.pattern.permute.xlu0 25
  %1414 = vperm.xlu0 %1413, %v853
  %v1415 = vpop.permute.xlu0 %1414
  %1417 = vset.pattern.permute.xlu0 25
  %1418 = vperm.xlu0 %1417, %v854
  %v1419 = vpop.permute.xlu0 %1418
  %v1421 = vmul.f32 %v1412, %v1415
  %v1422 = vmul.f32 %v1412, %v1419
  %v1423 = vmul.f32 %v1406, %v1421
  %v1424 = vmul.f32 %v1408, %v1422
  %v1425 = vadd.f32 %v1403, %v1423
  %v1426 = vadd.f32 %v1404, %v1424
  %1427 = vrot.lane.b32.xlu0 %v793, 126
  %v1428 = vpop.permute.xlu0 %1427
  %1429 = vrot.lane.b32.xlu0 %v794, 126
  %v1430 = vpop.permute.xlu0 %1429
  %v1431 = vlaneseq
  %v1432 = vshrl.u32 %v1431, 7
  %v1433 = vsub.s32 2, %v1432
  %v1434 = vrot.slane %v798, %v1433
  %1435 = vset.pattern.permute.xlu0 26
  %1436 = vperm.xlu0 %1435, %v853
  %v1437 = vpop.permute.xlu0 %1436
  %1439 = vset.pattern.permute.xlu0 26
  %1440 = vperm.xlu0 %1439, %v854
  %v1441 = vpop.permute.xlu0 %1440
  %v1443 = vmul.f32 %v1434, %v1437
  %v1444 = vmul.f32 %v1434, %v1441
  %v1445 = vmul.f32 %v1428, %v1443
  %v1446 = vmul.f32 %v1430, %v1444
  %v1447 = vadd.f32 %v1425, %v1445
  %v1448 = vadd.f32 %v1426, %v1446
  %1449 = vrot.lane.b32.xlu0 %v793, 125
  %v1450 = vpop.permute.xlu0 %1449
  %1451 = vrot.lane.b32.xlu0 %v794, 125
  %v1452 = vpop.permute.xlu0 %1451
  %v1453 = vlaneseq
  %v1454 = vshrl.u32 %v1453, 7
  %v1455 = vsub.s32 3, %v1454
  %v1456 = vrot.slane %v798, %v1455
  %1457 = vset.pattern.permute.xlu0 27
  %1458 = vperm.xlu0 %1457, %v853
  %v1459 = vpop.permute.xlu0 %1458
  %1461 = vset.pattern.permute.xlu0 27
  %1462 = vperm.xlu0 %1461, %v854
  %v1463 = vpop.permute.xlu0 %1462
  %v1465 = vmul.f32 %v1456, %v1459
  %v1466 = vmul.f32 %v1456, %v1463
  %v1467 = vmul.f32 %v1450, %v1465
  %v1468 = vmul.f32 %v1452, %v1466
  %v1469 = vadd.f32 %v1447, %v1467
  %v1470 = vadd.f32 %v1448, %v1468
  %1471 = vrot.lane.b32.xlu0 %v793, 123
  %v1472 = vpop.permute.xlu0 %1471
  %1473 = vrot.lane.b32.xlu0 %v794, 123
  %v1474 = vpop.permute.xlu0 %1473
  %v1475 = vlaneseq
  %v1476 = vshrl.u32 %v1475, 7
  %v1477 = vsub.s32 4, %v1476
  %v1478 = vrot.slane %v798, %v1477
  %1479 = vset.pattern.permute.xlu0 28
  %1480 = vperm.xlu0 %1479, %v853
  %v1481 = vpop.permute.xlu0 %1480
  %1483 = vset.pattern.permute.xlu0 28
  %1484 = vperm.xlu0 %1483, %v854
  %v1485 = vpop.permute.xlu0 %1484
  %v1487 = vmul.f32 %v1478, %v1481
  %v1488 = vmul.f32 %v1478, %v1485
  %v1489 = vmul.f32 %v1472, %v1487
  %v1490 = vmul.f32 %v1474, %v1488
  %v1491 = vadd.f32 %v1469, %v1489
  %v1492 = vadd.f32 %v1470, %v1490
  %1493 = vrot.lane.b32.xlu0 %v793, 122
  %v1494 = vpop.permute.xlu0 %1493
  %1495 = vrot.lane.b32.xlu0 %v794, 122
  %v1496 = vpop.permute.xlu0 %1495
  %v1497 = vlaneseq
  %v1498 = vshrl.u32 %v1497, 7
  %v1499 = vsub.s32 5, %v1498
  %v1500 = vrot.slane %v798, %v1499
  %1501 = vset.pattern.permute.xlu0 29
  %1502 = vperm.xlu0 %1501, %v853
  %v1503 = vpop.permute.xlu0 %1502
  %1505 = vset.pattern.permute.xlu0 29
  %1506 = vperm.xlu0 %1505, %v854
  %v1507 = vpop.permute.xlu0 %1506
  %v1509 = vmul.f32 %v1500, %v1503
  %v1510 = vmul.f32 %v1500, %v1507
  %v1511 = vmul.f32 %v1494, %v1509
  %v1512 = vmul.f32 %v1496, %v1510
  %v1513 = vadd.f32 %v1491, %v1511
  %v1514 = vadd.f32 %v1492, %v1512
  %1515 = vrot.lane.b32.xlu0 %v793, 121
  %v1516 = vpop.permute.xlu0 %1515
  %1517 = vrot.lane.b32.xlu0 %v794, 121
  %v1518 = vpop.permute.xlu0 %1517
  %v1519 = vlaneseq
  %v1520 = vshrl.u32 %v1519, 7
  %v1521 = vsub.s32 6, %v1520
  %v1522 = vrot.slane %v798, %v1521
  %1523 = vset.pattern.permute.xlu0 30
  %1524 = vperm.xlu0 %1523, %v853
  %v1525 = vpop.permute.xlu0 %1524
  %1527 = vset.pattern.permute.xlu0 30
  %1528 = vperm.xlu0 %1527, %v854
  %v1529 = vpop.permute.xlu0 %1528
  %v1531 = vmul.f32 %v1522, %v1525
  %v1532 = vmul.f32 %v1522, %v1529
  %v1533 = vmul.f32 %v1516, %v1531
  %v1534 = vmul.f32 %v1518, %v1532
  %v1535 = vadd.f32 %v1513, %v1533
  %v1536 = vadd.f32 %v1514, %v1534
  %1537 = vrot.lane.b32.xlu0 %v793, 120
  %v1538 = vpop.permute.xlu0 %1537
  %1539 = vrot.lane.b32.xlu0 %v794, 120
  %v1540 = vpop.permute.xlu0 %1539
  %v1541 = vlaneseq
  %v1542 = vshrl.u32 %v1541, 7
  %v1543 = vsub.s32 7, %v1542
  %v1544 = vrot.slane %v798, %v1543
  %1545 = vset.pattern.permute.xlu0 31
  %1546 = vperm.xlu0 %1545, %v853
  %v1547 = vpop.permute.xlu0 %1546
  %1549 = vset.pattern.permute.xlu0 31
  %1550 = vperm.xlu0 %1549, %v854
  %v1551 = vpop.permute.xlu0 %1550
  %v1553 = vmul.f32 %v1544, %v1547
  %v1554 = vmul.f32 %v1544, %v1551
  %v1555 = vmul.f32 %v1538, %v1553
  %v1556 = vmul.f32 %v1540, %v1554
  %v1557 = vadd.f32 %v1535, %v1555
  %v1558 = vadd.f32 %v1536, %v1556
  %1559 = vrot.lane.b32.xlu0 %v793, 119
  %v1560 = vpop.permute.xlu0 %1559
  %1561 = vrot.lane.b32.xlu0 %v794, 119
  %v1562 = vpop.permute.xlu0 %1561
  %v1563 = vlaneseq
  %v1564 = vshrl.u32 %v1563, 7
  %v1565 = vsub.s32 0, %v1564
  %v1566 = vrot.slane %v799, %v1565
  %1567 = vset.pattern.permute.xlu0 32
  %1568 = vperm.xlu0 %1567, %v853
  %v1569 = vpop.permute.xlu0 %1568
  %1571 = vset.pattern.permute.xlu0 32
  %1572 = vperm.xlu0 %1571, %v854
  %v1573 = vpop.permute.xlu0 %1572
  %v1575 = vmul.f32 %v1566, %v1569
  %v1576 = vmul.f32 %v1566, %v1573
  %v1577 = vmul.f32 %v1560, %v1575
  %v1578 = vmul.f32 %v1562, %v1576
  %v1579 = vadd.f32 %v1557, %v1577
  %v1580 = vadd.f32 %v1558, %v1578
  %1581 = vrot.lane.b32.xlu0 %v793, 118
  %v1582 = vpop.permute.xlu0 %1581
  %1583 = vrot.lane.b32.xlu0 %v794, 118
  %v1584 = vpop.permute.xlu0 %1583
  %v1585 = vlaneseq
  %v1586 = vshrl.u32 %v1585, 7
  %v1587 = vsub.s32 1, %v1586
  %v1588 = vrot.slane %v799, %v1587
  %1589 = vset.pattern.permute.xlu0 33
  %1590 = vperm.xlu0 %1589, %v853
  %v1591 = vpop.permute.xlu0 %1590
  %1593 = vset.pattern.permute.xlu0 33
  %1594 = vperm.xlu0 %1593, %v854
  %v1595 = vpop.permute.xlu0 %1594
  %v1597 = vmul.f32 %v1588, %v1591
  %v1598 = vmul.f32 %v1588, %v1595
  %v1599 = vmul.f32 %v1582, %v1597
  %v1600 = vmul.f32 %v1584, %v1598
  %v1601 = vadd.f32 %v1579, %v1599
  %v1602 = vadd.f32 %v1580, %v1600
  %1603 = vrot.lane.b32.xlu0 %v793, 117
  %v1604 = vpop.permute.xlu0 %1603
  %1605 = vrot.lane.b32.xlu0 %v794, 117
  %v1606 = vpop.permute.xlu0 %1605
  %v1607 = vlaneseq
  %v1608 = vshrl.u32 %v1607, 7
  %v1609 = vsub.s32 2, %v1608
  %v1610 = vrot.slane %v799, %v1609
  %1611 = vset.pattern.permute.xlu0 34
  %1612 = vperm.xlu0 %1611, %v853
  %v1613 = vpop.permute.xlu0 %1612
  %1615 = vset.pattern.permute.xlu0 34
  %1616 = vperm.xlu0 %1615, %v854
  %v1617 = vpop.permute.xlu0 %1616
  %v1619 = vmul.f32 %v1610, %v1613
  %v1620 = vmul.f32 %v1610, %v1617
  %v1621 = vmul.f32 %v1604, %v1619
  %v1622 = vmul.f32 %v1606, %v1620
  %v1623 = vadd.f32 %v1601, %v1621
  %v1624 = vadd.f32 %v1602, %v1622
  %1625 = vrot.lane.b32.xlu0 %v793, 115
  %v1626 = vpop.permute.xlu0 %1625
  %1627 = vrot.lane.b32.xlu0 %v794, 115
  %v1628 = vpop.permute.xlu0 %1627
  %v1629 = vlaneseq
  %v1630 = vshrl.u32 %v1629, 7
  %v1631 = vsub.s32 3, %v1630
  %v1632 = vrot.slane %v799, %v1631
  %1633 = vset.pattern.permute.xlu0 35
  %1634 = vperm.xlu0 %1633, %v853
  %v1635 = vpop.permute.xlu0 %1634
  %1637 = vset.pattern.permute.xlu0 35
  %1638 = vperm.xlu0 %1637, %v854
  %v1639 = vpop.permute.xlu0 %1638
  %v1641 = vmul.f32 %v1632, %v1635
  %v1642 = vmul.f32 %v1632, %v1639
  %v1643 = vmul.f32 %v1626, %v1641
  %v1644 = vmul.f32 %v1628, %v1642
  %v1645 = vadd.f32 %v1623, %v1643
  %v1646 = vadd.f32 %v1624, %v1644
  %1647 = vrot.lane.b32.xlu0 %v793, 114
  %v1648 = vpop.permute.xlu0 %1647
  %1649 = vrot.lane.b32.xlu0 %v794, 114
  %v1650 = vpop.permute.xlu0 %1649
  %v1651 = vlaneseq
  %v1652 = vshrl.u32 %v1651, 7
  %v1653 = vsub.s32 4, %v1652
  %v1654 = vrot.slane %v799, %v1653
  %1655 = vset.pattern.permute.xlu0 36
  %1656 = vperm.xlu0 %1655, %v853
  %v1657 = vpop.permute.xlu0 %1656
  %1659 = vset.pattern.permute.xlu0 36
  %1660 = vperm.xlu0 %1659, %v854
  %v1661 = vpop.permute.xlu0 %1660
  %v1663 = vmul.f32 %v1654, %v1657
  %v1664 = vmul.f32 %v1654, %v1661
  %v1665 = vmul.f32 %v1648, %v1663
  %v1666 = vmul.f32 %v1650, %v1664
  %v1667 = vadd.f32 %v1645, %v1665
  %v1668 = vadd.f32 %v1646, %v1666
  %1669 = vrot.lane.b32.xlu0 %v793, 113
  %v1670 = vpop.permute.xlu0 %1669
  %1671 = vrot.lane.b32.xlu0 %v794, 113
  %v1672 = vpop.permute.xlu0 %1671
  %v1673 = vlaneseq
  %v1674 = vshrl.u32 %v1673, 7
  %v1675 = vsub.s32 5, %v1674
  %v1676 = vrot.slane %v799, %v1675
  %1677 = vset.pattern.permute.xlu0 37
  %1678 = vperm.xlu0 %1677, %v853
  %v1679 = vpop.permute.xlu0 %1678
  %1681 = vset.pattern.permute.xlu0 37
  %1682 = vperm.xlu0 %1681, %v854
  %v1683 = vpop.permute.xlu0 %1682
  %v1685 = vmul.f32 %v1676, %v1679
  %v1686 = vmul.f32 %v1676, %v1683
  %v1687 = vmul.f32 %v1670, %v1685
  %v1688 = vmul.f32 %v1672, %v1686
  %v1689 = vadd.f32 %v1667, %v1687
  %v1690 = vadd.f32 %v1668, %v1688
  %1691 = vrot.lane.b32.xlu0 %v793, 112
  %v1692 = vpop.permute.xlu0 %1691
  %1693 = vrot.lane.b32.xlu0 %v794, 112
  %v1694 = vpop.permute.xlu0 %1693
  %v1695 = vlaneseq
  %v1696 = vshrl.u32 %v1695, 7
  %v1697 = vsub.s32 6, %v1696
  %v1698 = vrot.slane %v799, %v1697
  %1699 = vset.pattern.permute.xlu0 38
  %1700 = vperm.xlu0 %1699, %v853
  %v1701 = vpop.permute.xlu0 %1700
  %1703 = vset.pattern.permute.xlu0 38
  %1704 = vperm.xlu0 %1703, %v854
  %v1705 = vpop.permute.xlu0 %1704
  %v1707 = vmul.f32 %v1698, %v1701
  %v1708 = vmul.f32 %v1698, %v1705
  %v1709 = vmul.f32 %v1692, %v1707
  %v1710 = vmul.f32 %v1694, %v1708
  %v1711 = vadd.f32 %v1689, %v1709
  %v1712 = vadd.f32 %v1690, %v1710
  %1713 = vrot.lane.b32.xlu0 %v793, 111
  %v1714 = vpop.permute.xlu0 %1713
  %1715 = vrot.lane.b32.xlu0 %v794, 111
  %v1716 = vpop.permute.xlu0 %1715
  %v1717 = vlaneseq
  %v1718 = vshrl.u32 %v1717, 7
  %v1719 = vsub.s32 7, %v1718
  %v1720 = vrot.slane %v799, %v1719
  %1721 = vset.pattern.permute.xlu0 39
  %1722 = vperm.xlu0 %1721, %v853
  %v1723 = vpop.permute.xlu0 %1722
  %1725 = vset.pattern.permute.xlu0 39
  %1726 = vperm.xlu0 %1725, %v854
  %v1727 = vpop.permute.xlu0 %1726
  %v1729 = vmul.f32 %v1720, %v1723
  %v1730 = vmul.f32 %v1720, %v1727
  %v1731 = vmul.f32 %v1714, %v1729
  %v1732 = vmul.f32 %v1716, %v1730
  %v1733 = vadd.f32 %v1711, %v1731
  %v1734 = vadd.f32 %v1712, %v1732
  %1735 = vrot.lane.b32.xlu0 %v793, 110
  %v1736 = vpop.permute.xlu0 %1735
  %1737 = vrot.lane.b32.xlu0 %v794, 110
  %v1738 = vpop.permute.xlu0 %1737
  %v1739 = vlaneseq
  %v1740 = vshrl.u32 %v1739, 7
  %v1741 = vsub.s32 0, %v1740
  %v1742 = vrot.slane %v800, %v1741
  %1743 = vset.pattern.permute.xlu0 40
  %1744 = vperm.xlu0 %1743, %v853
  %v1745 = vpop.permute.xlu0 %1744
  %1747 = vset.pattern.permute.xlu0 40
  %1748 = vperm.xlu0 %1747, %v854
  %v1749 = vpop.permute.xlu0 %1748
  %v1751 = vmul.f32 %v1742, %v1745
  %v1752 = vmul.f32 %v1742, %v1749
  %v1753 = vmul.f32 %v1736, %v1751
  %v1754 = vmul.f32 %v1738, %v1752
  %v1755 = vadd.f32 %v1733, %v1753
  %v1756 = vadd.f32 %v1734, %v1754
  %1757 = vrot.lane.b32.xlu0 %v793, 109
  %v1758 = vpop.permute.xlu0 %1757
  %1759 = vrot.lane.b32.xlu0 %v794, 109
  %v1760 = vpop.permute.xlu0 %1759
  %v1761 = vlaneseq
  %v1762 = vshrl.u32 %v1761, 7
  %v1763 = vsub.s32 1, %v1762
  %v1764 = vrot.slane %v800, %v1763
  %1765 = vset.pattern.permute.xlu0 41
  %1766 = vperm.xlu0 %1765, %v853
  %v1767 = vpop.permute.xlu0 %1766
  %1769 = vset.pattern.permute.xlu0 41
  %1770 = vperm.xlu0 %1769, %v854
  %v1771 = vpop.permute.xlu0 %1770
  %v1773 = vmul.f32 %v1764, %v1767
  %v1774 = vmul.f32 %v1764, %v1771
  %v1775 = vmul.f32 %v1758, %v1773
  %v1776 = vmul.f32 %v1760, %v1774
  %v1777 = vadd.f32 %v1755, %v1775
  %v1778 = vadd.f32 %v1756, %v1776
  %1779 = vrot.lane.b32.xlu0 %v793, 107
  %v1780 = vpop.permute.xlu0 %1779
  %1781 = vrot.lane.b32.xlu0 %v794, 107
  %v1782 = vpop.permute.xlu0 %1781
  %v1783 = vlaneseq
  %v1784 = vshrl.u32 %v1783, 7
  %v1785 = vsub.s32 2, %v1784
  %v1786 = vrot.slane %v800, %v1785
  %1787 = vset.pattern.permute.xlu0 42
  %1788 = vperm.xlu0 %1787, %v853
  %v1789 = vpop.permute.xlu0 %1788
  %1791 = vset.pattern.permute.xlu0 42
  %1792 = vperm.xlu0 %1791, %v854
  %v1793 = vpop.permute.xlu0 %1792
  %v1795 = vmul.f32 %v1786, %v1789
  %v1796 = vmul.f32 %v1786, %v1793
  %v1797 = vmul.f32 %v1780, %v1795
  %v1798 = vmul.f32 %v1782, %v1796
  %v1799 = vadd.f32 %v1777, %v1797
  %v1800 = vadd.f32 %v1778, %v1798
  %1801 = vrot.lane.b32.xlu0 %v793, 106
  %v1802 = vpop.permute.xlu0 %1801
  %1803 = vrot.lane.b32.xlu0 %v794, 106
  %v1804 = vpop.permute.xlu0 %1803
  %v1805 = vlaneseq
  %v1806 = vshrl.u32 %v1805, 7
  %v1807 = vsub.s32 3, %v1806
  %v1808 = vrot.slane %v800, %v1807
  %1809 = vset.pattern.permute.xlu0 43
  %1810 = vperm.xlu0 %1809, %v853
  %v1811 = vpop.permute.xlu0 %1810
  %1813 = vset.pattern.permute.xlu0 43
  %1814 = vperm.xlu0 %1813, %v854
  %v1815 = vpop.permute.xlu0 %1814
  %v1817 = vmul.f32 %v1808, %v1811
  %v1818 = vmul.f32 %v1808, %v1815
  %v1819 = vmul.f32 %v1802, %v1817
  %v1820 = vmul.f32 %v1804, %v1818
  %v1821 = vadd.f32 %v1799, %v1819
  %v1822 = vadd.f32 %v1800, %v1820
  %1823 = vrot.lane.b32.xlu0 %v793, 105
  %v1824 = vpop.permute.xlu0 %1823
  %1825 = vrot.lane.b32.xlu0 %v794, 105
  %v1826 = vpop.permute.xlu0 %1825
  %v1827 = vlaneseq
  %v1828 = vshrl.u32 %v1827, 7
  %v1829 = vsub.s32 4, %v1828
  %v1830 = vrot.slane %v800, %v1829
  %1831 = vset.pattern.permute.xlu0 44
  %1832 = vperm.xlu0 %1831, %v853
  %v1833 = vpop.permute.xlu0 %1832
  %1835 = vset.pattern.permute.xlu0 44
  %1836 = vperm.xlu0 %1835, %v854
  %v1837 = vpop.permute.xlu0 %1836
  %v1839 = vmul.f32 %v1830, %v1833
  %v1840 = vmul.f32 %v1830, %v1837
  %v1841 = vmul.f32 %v1824, %v1839
  %v1842 = vmul.f32 %v1826, %v1840
  %v1843 = vadd.f32 %v1821, %v1841
  %v1844 = vadd.f32 %v1822, %v1842
  %1845 = vrot.lane.b32.xlu0 %v793, 104
  %v1846 = vpop.permute.xlu0 %1845
  %1847 = vrot.lane.b32.xlu0 %v794, 104
  %v1848 = vpop.permute.xlu0 %1847
  %v1849 = vlaneseq
  %v1850 = vshrl.u32 %v1849, 7
  %v1851 = vsub.s32 5, %v1850
  %v1852 = vrot.slane %v800, %v1851
  %1853 = vset.pattern.permute.xlu0 45
  %1854 = vperm.xlu0 %1853, %v853
  %v1855 = vpop.permute.xlu0 %1854
  %1857 = vset.pattern.permute.xlu0 45
  %1858 = vperm.xlu0 %1857, %v854
  %v1859 = vpop.permute.xlu0 %1858
  %v1861 = vmul.f32 %v1852, %v1855
  %v1862 = vmul.f32 %v1852, %v1859
  %v1863 = vmul.f32 %v1846, %v1861
  %v1864 = vmul.f32 %v1848, %v1862
  %v1865 = vadd.f32 %v1843, %v1863
  %v1866 = vadd.f32 %v1844, %v1864
  %1867 = vrot.lane.b32.xlu0 %v793, 103
  %v1868 = vpop.permute.xlu0 %1867
  %1869 = vrot.lane.b32.xlu0 %v794, 103
  %v1870 = vpop.permute.xlu0 %1869
  %v1871 = vlaneseq
  %v1872 = vshrl.u32 %v1871, 7
  %v1873 = vsub.s32 6, %v1872
  %v1874 = vrot.slane %v800, %v1873
  %1875 = vset.pattern.permute.xlu0 46
  %1876 = vperm.xlu0 %1875, %v853
  %v1877 = vpop.permute.xlu0 %1876
  %1879 = vset.pattern.permute.xlu0 46
  %1880 = vperm.xlu0 %1879, %v854
  %v1881 = vpop.permute.xlu0 %1880
  %v1883 = vmul.f32 %v1874, %v1877
  %v1884 = vmul.f32 %v1874, %v1881
  %v1885 = vmul.f32 %v1868, %v1883
  %v1886 = vmul.f32 %v1870, %v1884
  %v1887 = vadd.f32 %v1865, %v1885
  %v1888 = vadd.f32 %v1866, %v1886
  %1889 = vrot.lane.b32.xlu0 %v793, 102
  %v1890 = vpop.permute.xlu0 %1889
  %1891 = vrot.lane.b32.xlu0 %v794, 102
  %v1892 = vpop.permute.xlu0 %1891
  %v1893 = vlaneseq
  %v1894 = vshrl.u32 %v1893, 7
  %v1895 = vsub.s32 7, %v1894
  %v1896 = vrot.slane %v800, %v1895
  %1897 = vset.pattern.permute.xlu0 47
  %1898 = vperm.xlu0 %1897, %v853
  %v1899 = vpop.permute.xlu0 %1898
  %1901 = vset.pattern.permute.xlu0 47
  %1902 = vperm.xlu0 %1901, %v854
  %v1903 = vpop.permute.xlu0 %1902
  %v1905 = vmul.f32 %v1896, %v1899
  %v1906 = vmul.f32 %v1896, %v1903
  %v1907 = vmul.f32 %v1890, %v1905
  %v1908 = vmul.f32 %v1892, %v1906
  %v1909 = vadd.f32 %v1887, %v1907
  %v1910 = vadd.f32 %v1888, %v1908
  %1911 = vrot.lane.b32.xlu0 %v793, 101
  %v1912 = vpop.permute.xlu0 %1911
  %1913 = vrot.lane.b32.xlu0 %v794, 101
  %v1914 = vpop.permute.xlu0 %1913
  %v1915 = vlaneseq
  %v1916 = vshrl.u32 %v1915, 7
  %v1917 = vsub.s32 0, %v1916
  %v1918 = vrot.slane %v801, %v1917
  %1919 = vset.pattern.permute.xlu0 48
  %1920 = vperm.xlu0 %1919, %v853
  %v1921 = vpop.permute.xlu0 %1920
  %1923 = vset.pattern.permute.xlu0 48
  %1924 = vperm.xlu0 %1923, %v854
  %v1925 = vpop.permute.xlu0 %1924
  %v1927 = vmul.f32 %v1918, %v1921
  %v1928 = vmul.f32 %v1918, %v1925
  %v1929 = vmul.f32 %v1912, %v1927
  %v1930 = vmul.f32 %v1914, %v1928
  %v1931 = vadd.f32 %v1909, %v1929
  %v1932 = vadd.f32 %v1910, %v1930
  %1934 = vset.pattern.permute.xlu0 0
  %1935 = vperm.xlu0 %1934, %v855
  %v1936 = vpop.permute.xlu0 %1935
  %1939 = vset.pattern.permute.xlu0 0
  %1940 = vperm.xlu0 %1939, %v856
  %v1941 = vpop.permute.xlu0 %1940
  %v1943 = vadd.f32 %v1931, %v1936
  %v1944 = vadd.f32 %v1932, %v1941
  %v1945 = vld [vmem:[%s1 + $0x28] sm:$0xf]
  %v1946 = vld [vmem:[%s1 + $0x2c] sm:$0xf]
  %v1947 = vld [vmem:[%s1 + $0x30] sm:$0xf]
  %v1948 = vld [vmem:[%s1 + $0x34] sm:$0xf]
  %v1949 = vpack.c.bf16 %v1944, %v1943
  %v1954 = vunpack.c.l.b16 %v1945
  %v1955 = vunpack.c.l.b16 %v1946
  %v1956 = vunpack.c.l.b16 %v1947
  %v1957 = vunpack.c.l.b16 %v1948
  %v1958 = vpack.c.b16 %v1955, %v1954
  %v1959 = vpack.c.b16 %v1957, %v1956
  %v1961 = vsel %vm310, %v1958, 0
  %v1964 = vsel %vm310, %v1959, 0
  %1966 = vmatprep.subr.bf16.mxu0 0
  %1967 = vmatpush1.bf16.msra.mxu0 %v1949
  %1968 = vmatprep.subr.bf16.mxu0 0
  %1969 = vmatpush1.bf16.msra.mxu0 0
  %1970 = vmatprep.subr.bf16.mxu0 0
  %1971 = vmatpush1.bf16.msra.mxu0 0
  %1972 = vmatprep.subr.bf16.mxu0 0
  %1973 = vmatpush1.bf16.msra.mxu0 0
  %1974 = vmatprep.subr.bf16.mxu0 0
  %1975 = vmatpush1.bf16.msra.mxu0 0
  %1976 = vmatprep.subr.bf16.mxu0 0
  %1977 = vmatpush1.bf16.msra.mxu0 0
  %1978 = vmatprep.subr.bf16.mxu0 0
  %1979 = vmatpush1.bf16.msra.mxu0 0
  %1980 = vmatprep.subr.bf16.mxu0 0
  %1981 = vmatpush1.bf16.msra.mxu0 0
  %1982 = vmatprep.subr.bf16.mxu0 0
  %1983 = vmatpush1.bf16.msra.mxu0 0
  %1984 = vmatprep.subr.bf16.mxu0 0
  %1985 = vmatpush1.bf16.msra.mxu0 0
  %1986 = vmatprep.subr.bf16.mxu0 0
  %1987 = vmatpush1.bf16.msra.mxu0 0
  %1988 = vmatprep.subr.bf16.mxu0 0
  %1989 = vmatpush1.bf16.msra.mxu0 0
  %1990 = vmatprep.subr.bf16.mxu0 0
  %1991 = vmatpush1.bf16.msra.mxu0 0
  %1992 = vmatprep.subr.bf16.mxu0 0
  %1993 = vmatpush1.bf16.msra.mxu0 0
  %1994 = vmatprep.subr.bf16.mxu0 0
  %1995 = vmatpush1.bf16.msra.mxu0 0
  %1996 = vmatprep.subr.bf16.mxu0 0
  %1997 = vmatpush1.bf16.msra.mxu0 0
  %1998 = vmatprep.mubr.bf16.mxu0 0
  %1999 = vmatmul.mubr.bf16.gmra.mrb[0].mxu0 %v1961
  %v2000 = vpop.f32.mrb[0].mxu0
  %v2001 = vadd.f32 0.0, %v2000
  %v2002 = vpop.f32.mrb[0].mxu0
  %v2003 = vpop.f32.mrb[0].mxu0
  %v2004 = vadd.f32 0.0, %v2003
  %v2005 = vpop.f32.mrb[0].mxu0
  %2006 = vmatprep.mubr.bf16.mxu0 0
  %2007 = vmatmul.mubr.bf16.gmra.mrb[0].mxu0 %v1964
  %v2008 = vpop.f32.mrb[0].mxu0
  %v2009 = vadd.f32 0.0, %v2008
  %v2010 = vpop.f32.mrb[0].mxu0
  %v2011 = vpop.f32.mrb[0].mxu0
  %v2012 = vadd.f32 0.0, %v2011
  %v2013 = vpop.f32.mrb[0].mxu0
  %2014 = vdwg.mxu0
  %v2015 = vmax.f32 %v2001, 0.0
  %v2016 = vmax.f32 %v2004, 0.0
  %v2017 = vmax.f32 %v2009, 0.0
  %v2018 = vmax.f32 %v2012, 0.0
  %v2019 = vld [vmem:[%s1 + $0x38] sm:$0xf]
  %v2020 = vld [vmem:[%s2 + $0x100] sm:$0xff]
  %v2021 = vpack.c.bf16 %v2016, %v2015
  %v2022 = vpack.c.bf16 %v2018, %v2017
  %2024 = vset.pattern.permute.xlu0 0
  %2025 = vperm.xlu0 %2024, %v2020
  %v2026 = vpop.permute.xlu0 %2025
  %v2029 = vsel %vm28, %v2019, 0
  %2031 = vmatprep.subr.bf16.mxu0 0
  %2032 = vmatpush1.bf16.msra.mxu0 %v2021
  %2033 = vmatprep.subr.bf16.mxu0 0
  %2034 = vmatpush1.bf16.msra.mxu0 %v2022
  %2035 = vmatprep.subr.bf16.mxu0 0
  %2036 = vmatpush1.bf16.msra.mxu0 0
  %2037 = vmatprep.subr.bf16.mxu0 0
  %2038 = vmatpush1.bf16.msra.mxu0 0
  %2039 = vmatprep.subr.bf16.mxu0 0
  %2040 = vmatpush1.bf16.msra.mxu0 0
  %2041 = vmatprep.subr.bf16.mxu0 0
  %2042 = vmatpush1.bf16.msra.mxu0 0
  %2043 = vmatprep.subr.bf16.mxu0 0
  %2044 = vmatpush1.bf16.msra.mxu0 0
  %2045 = vmatprep.subr.bf16.mxu0 0
  %2046 = vmatpush1.bf16.msra.mxu0 0
  %2047 = vmatprep.subr.bf16.mxu0 0
  %2048 = vmatpush1.bf16.msra.mxu0 0
  %2049 = vmatprep.subr.bf16.mxu0 0
  %2050 = vmatpush1.bf16.msra.mxu0 0
  %2051 = vmatprep.subr.bf16.mxu0 0
  %2052 = vmatpush1.bf16.msra.mxu0 0
  %2053 = vmatprep.subr.bf16.mxu0 0
  %2054 = vmatpush1.bf16.msra.mxu0 0
  %2055 = vmatprep.subr.bf16.mxu0 0
  %2056 = vmatpush1.bf16.msra.mxu0 0
  %2057 = vmatprep.subr.bf16.mxu0 0
  %2058 = vmatpush1.bf16.msra.mxu0 0
  %2059 = vmatprep.subr.bf16.mxu0 0
  %2060 = vmatpush1.bf16.msra.mxu0 0
  %2061 = vmatprep.subr.bf16.mxu0 0
  %2062 = vmatpush1.bf16.msra.mxu0 0
  %2063 = vmatprep.mubr.bf16.mxu0 0
  %2064 = vmatmul.mubr.bf16.gmra.mrb[0].mxu0 %v2029
  %v2065 = vpop.f32.mrb[0].mxu0
  %v2066 = vadd.f32 %v2026, %v2065
  %v2067 = vpop.f32.mrb[0].mxu0
  %v2068 = vpop.f32.mrb[0].mxu0
  %v2069 = vpop.f32.mrb[0].mxu0
  %2070 = vdwg.mxu0
  %v2071 = vadd.f32 %v2066, %v848
  %v2072 = vld [vmem:[%s2 + $0x110] sm:$0xff]
  %v2073 = vld [vmem:[%s2 + $0x118] sm:$0xff]
  %v2074 = vld [vmem:[%s2 + $0x120] sm:$0xff]
  %v2075 = vld [vmem:[%s2 + $0x128] sm:$0xff]
  %v2076 = vld [vmem:[%s2 + $0x130] sm:$0xff]
  %v2077 = vld [vmem:[%s2 + $0x138] sm:$0xff]
  %v2078 = vld [vmem:[%s2 + $0x140] sm:$0xff]
  %v2079 = vld [vmem:[%s2 + $0x148] sm:$0xff]
  %v2080 = vld [vmem:[%s2 + $0x150] sm:$0xff]
  %v2081 = vld [vmem:[%s2 + $0x158] sm:$0xff]
  %v2082 = vld [vmem:[%s2 + $0x160] sm:$0xff]
  %v2083 = vld [vmem:[%s2 + $0x168] sm:$0xff]
  %v2084 = vld [vmem:[%s2 + $0x170] sm:$0xff]
  %v2085 = vld [vmem:[%s2 + $0x178] sm:$0xff]
  %v2086 = vld [vmem:[%s2 + $0x180] sm:$0xff]
  %v2087 = vld [vmem:[%s2 + $0x188] sm:$0xff]
  %2088 = vmatprep.subr.mxu0 0.0
  %2089 = vmatpush1.msra.mxu0 %v2072
  %2090 = vmatprep.subr.mxu0 0.0
  %2091 = vmatpush1.msra.mxu0 %v2073
  %2092 = vmatprep.subr.mxu0 0.0
  %2093 = vmatpush1.msra.mxu0 %v2074
  %2094 = vmatprep.subr.mxu0 0.0
  %2095 = vmatpush1.msra.mxu0 %v2075
  %2096 = vmatprep.subr.mxu0 0.0
  %2097 = vmatpush1.msra.mxu0 %v2076
  %2098 = vmatprep.subr.mxu0 0.0
  %2099 = vmatpush1.msra.mxu0 %v2077
  %2100 = vmatprep.subr.mxu0 0.0
  %2101 = vmatpush1.msra.mxu0 %v2078
  %2102 = vmatprep.subr.mxu0 0.0
  %2103 = vmatpush1.msra.mxu0 %v2079
  %2104 = vmatprep.subr.mxu0 0.0
  %2105 = vmatpush1.msra.mxu0 %v2080
  %2106 = vmatprep.subr.mxu0 0.0
  %2107 = vmatpush1.msra.mxu0 %v2081
  %2108 = vmatprep.subr.mxu0 0.0
  %2109 = vmatpush1.msra.mxu0 %v2082
  %2110 = vmatprep.subr.mxu0 0.0
  %2111 = vmatpush1.msra.mxu0 %v2083
  %2112 = vmatprep.subr.mxu0 0.0
  %2113 = vmatpush1.msra.mxu0 %v2084
  %2114 = vmatprep.subr.mxu0 0.0
  %2115 = vmatpush1.msra.mxu0 %v2085
  %2116 = vmatprep.subr.mxu0 0.0
  %2117 = vmatpush1.msra.mxu0 %v2086
  %2118 = vmatprep.subr.mxu0 0.0
  %2119 = vmatpush1.msra.mxu0 %v2087
  %2120 = vmatprep.subr.mxu0 0.0
  %2121 = vmatpush1.msra.mxu0 0.0
  %2122 = vmatprep.subr.mxu0 0.0
  %2123 = vmatpush1.msra.mxu0 0.0
  %2124 = vmatprep.subr.mxu0 0.0
  %2125 = vmatpush1.msra.mxu0 0.0
  %2126 = vmatprep.subr.mxu0 0.0
  %2127 = vmatpush1.msra.mxu0 0.0
  %2128 = vmatprep.subr.mxu0 0.0
  %2129 = vmatpush1.msra.mxu0 0.0
  %2130 = vmatprep.subr.mxu0 0.0
  %2131 = vmatpush1.msra.mxu0 0.0
  %2132 = vmatprep.subr.mxu0 0.0
  %2133 = vmatpush1.msra.mxu0 0.0
  %2134 = vmatprep.subr.mxu0 0.0
  %2135 = vmatpush1.msra.mxu0 0.0
  %2136 = vmatprep.subr.mxu0 0.0
  %2137 = vmatpush1.msra.mxu0 0.0
  %2138 = vmatprep.subr.mxu0 0.0
  %2139 = vmatpush1.msra.mxu0 0.0
  %2140 = vmatprep.subr.mxu0 0.0
  %2141 = vmatpush1.msra.mxu0 0.0
  %2142 = vmatprep.subr.mxu0 0.0
  %2143 = vmatpush1.msra.mxu0 0.0
  %2144 = vmatprep.subr.mxu0 0.0
  %2145 = vmatpush1.msra.mxu0 0.0
  %2146 = vmatprep.subr.mxu0 0.0
  %2147 = vmatpush1.msra.mxu0 0.0
  %2148 = vmatprep.subr.mxu0 0.0
  %2149 = vmatpush1.msra.mxu0 0.0
  %2150 = vmatprep.subr.mxu0 0.0
  %2151 = vmatpush1.msra.mxu0 0.0
  %2152 = vmatprep.mubr.f32.mxu0 0.0
  %2153 = vmatmul.mubr.f32.gmra.mrb[0].mxu0 %v2071
  %v2154 = vpop.f32.mrb[0].mxu0
  %v2155 = vadd.f32 0.0, %v2154
  %v2156 = vpop.f32.mrb[0].mxu0
  %2157 = vdwg.mxu0
  %v2158 = vld [vmem:[%s1 + $0x48] sm:$0x1]
  %v2159 = vld [vmem:[%s2 + $0x190] sm:$0x3]
  %v2160 = vpack.c.bf16 %v2155, %v2155
  %2162 = vset.pattern.permute.xlu0 0
  %2163 = vperm.xlu0 %2162, %v2159
  %v2164 = vpop.permute.xlu0 %2163
  %v2167 = vsel %vm220, %v2158, 0
  %v2170 = vsel %vm224, %v2160, 0
  %2172 = vmatprep.subr.bf16.mxu0 0
  %2173 = vmatpush1.bf16.msra.mxu0 %v2170
  %2174 = vmatprep.subr.bf16.mxu0 0
  %2175 = vmatpush1.bf16.msra.mxu0 0
  %2176 = vmatprep.subr.bf16.mxu0 0
  %2177 = vmatpush1.bf16.msra.mxu0 0
  %2178 = vmatprep.subr.bf16.mxu0 0
  %2179 = vmatpush1.bf16.msra.mxu0 0
  %2180 = vmatprep.subr.bf16.mxu0 0
  %2181 = vmatpush1.bf16.msra.mxu0 0
  %2182 = vmatprep.subr.bf16.mxu0 0
  %2183 = vmatpush1.bf16.msra.mxu0 0
  %2184 = vmatprep.subr.bf16.mxu0 0
  %2185 = vmatpush1.bf16.msra.mxu0 0
  %2186 = vmatprep.subr.bf16.mxu0 0
  %2187 = vmatpush1.bf16.msra.mxu0 0
  %2188 = vmatprep.subr.bf16.mxu0 0
  %2189 = vmatpush1.bf16.msra.mxu0 0
  %2190 = vmatprep.subr.bf16.mxu0 0
  %2191 = vmatpush1.bf16.msra.mxu0 0
  %2192 = vmatprep.subr.bf16.mxu0 0
  %2193 = vmatpush1.bf16.msra.mxu0 0
  %2194 = vmatprep.subr.bf16.mxu0 0
  %2195 = vmatpush1.bf16.msra.mxu0 0
  %2196 = vmatprep.subr.bf16.mxu0 0
  %2197 = vmatpush1.bf16.msra.mxu0 0
  %2198 = vmatprep.subr.bf16.mxu0 0
  %2199 = vmatpush1.bf16.msra.mxu0 0
  %2200 = vmatprep.subr.bf16.mxu0 0
  %2201 = vmatpush1.bf16.msra.mxu0 0
  %2202 = vmatprep.subr.bf16.mxu0 0
  %2203 = vmatpush1.bf16.msra.mxu0 0
  %2204 = vmatprep.mubr.bf16.mxu0 0
  %2205 = vmatmul.mubr.bf16.gmra.mrb[0].mxu0 %v2167
  %v2206 = vpop.f32.mrb[0].mxu0
  %v2207 = vadd.f32 %v2164, %v2206
  %v2208 = vpop.f32.mrb[0].mxu0
  %v2209 = vpop.f32.mrb[0].mxu0
  %v2210 = vpop.f32.mrb[0].mxu0
  %2211 = vdwg.mxu0
  %vm2212 = vcmask 9216
  %2213 = vst.msk [vmem:[%s3] sm:$0x3] %vm2212, %v2207
  // Predicated region
  $region14: #{_lambda_.1} parent=0 // pred_check
    _
  $region15: #{_lambda_.1} parent=0 // pred_check_branch
    %2215 = sbr.rel (0) target = $region17
  $region16: #{_lambda_.1} parent=0 // pred_region
    _
  $region17: #{_lambda_.1} parent=0 // pred_fallthru
    _
  // Predicated region
  $region18: #{_lambda_.1} parent=0 // pred_check
    _
  $region19: #{_lambda_.1} parent=0 // pred_check_branch
    %2217 = sbr.rel (0) target = $region21
  $region20: #{_lambda_.1} parent=0 // pred_region
    _
  $region21: #{_lambda_.1} parent=0 // pred_fallthru
    _

</llo_original>
